<compile_context>
chip_gen: v6e
topology: v6e:2x2x1
jax: 0.10.0
libtpu: 0.0.40
codegen_flags: <defaults>
</compile_context>

<pallas_src>
import functools

import jax
import jax.numpy as jnp
from jax import lax
from jax.experimental import pallas as pl
from jax.experimental.pallas import tpu as pltpu


# ---------------------------------------------------------------------------
# Kernel: one batch element per grid step.
#   out[Cout, H*W] = sum_{kh,kw} Wbig[tap] @ Xshift[kh,kw]  +  bbig
# where Xshift is the 6-channel input shifted by (kh, kw) in flattened form.
# ---------------------------------------------------------------------------

def _vff_kernel(xlin_ref, wbig_ref, bbig_ref, out_ref, *, H, W):
    # xlin_ref : (1, 6, L)        L=(H+4)*W+4; channels-first, H padded by 2,
    #                             flattened row-major, 2 zeros front/back.
    # wbig_ref : (1, 25, Cout, 6) gate + lap-conv + both 1x1 convs folded.
    # bbig_ref : (1, Cout, 1)     folded bias.
    # out_ref  : (1, Cout, H*W)   lane-dense NCHW-flat output.
    HW = H * W
    Cout = out_ref.shape[1]

    # w-coordinate of every flattened output position; taps with kw != 2 read
    # across a row boundary (no W padding in xlin) and must be masked.
    col = lax.broadcasted_iota(jnp.int32, (1, HW), 1) % W
    masks = {}
    for kw in range(5):
        if kw != 2:
            masks[kw] = (col >= (2 - kw)) & (col < (W + 2 - kw))

    acc = jnp.zeros((Cout, HW), jnp.float32)
    for kh in range(5):
        for kw in range(5):
            t = kh * 5 + kw
            s = kh * W + kw                       # static flat shift of this tap
            xs = xlin_ref[0, :, s:s + HW]         # (6, HW) shifted slab
            if kw != 2:
                xs = jnp.where(masks[kw], xs, 0.0)
            wt = wbig_ref[0, t, :, :]             # (Cout, 6)
            acc = acc + jnp.dot(wt, xs, preferred_element_type=jnp.float32)

    out_ref[0] = acc + bbig_ref[0]                # (Cout,1) bias, lane-broadcast


# ---------------------------------------------------------------------------
# Wrapper: gate + weight folding (tiny) and layout plumbing, then one
# pallas_call over the batch.
# ---------------------------------------------------------------------------

def vff_forward(x1, x2, x3, sup, params, mode="avg"):
    B, H, W, C = x1.shape            # NHWC with C == 2
    assert C == 2
    HW = H * W
    Cout = params["wo2"].shape[1]

    # ---- gating branch (per-batch 24-vector; computed here so it folds into
    #      the kernel weights and spatial tiles stay independent).
    if mode == "avg":
        pooled = jnp.concatenate(
            [x.mean(axis=(1, 2)) for x in (x1, x2, x3, sup)], axis=-1)   # (B,8)
    else:  # "max"
        pooled = jnp.concatenate(
            [x.max(axis=(1, 2)) for x in (x1, x2, x3, sup)], axis=-1)
    h = jnp.maximum(pooled @ params["wfc1"], 0.0)
    v = jax.nn.sigmoid(h @ params["wfc2"])                               # (B,24)
    v_im = v.reshape(B, 3, 8)                                            # (b,i,co)

    # ---- fold lap conv weights, gate v and both 1x1 convs into per-batch
    #      per-tap matrices + a single bias.
    wo_f = params["wo1"] @ params["wo2"]                                 # (8,Cout)
    bo_f = params["bo1"] @ params["wo2"] + params["bo2"]                 # (1,Cout)
    wlap = params["wlap"]                                                # (5,5,2,8)
    wbig = jnp.einsum("bic,hwxc,cn->bhwnix", v_im, wlap, wo_f)
    wbig = wbig.reshape(B, 25, Cout, 6)
    bbig = bo_f + jnp.einsum("bic,c,cn->bn", v_im,
                             params["blap"].reshape(8), wo_f)
    bbig = bbig.reshape(B, Cout, 1)

    # ---- layout-only restage of x1/x2/x3: channels-first, pad H by 2,
    #      flatten so H*W sits on the lane axis, 2 zero guards front/back.
    xs = jnp.transpose(jnp.concatenate([x1, x2, x3], axis=-1), (0, 3, 1, 2))
    xs = jnp.pad(xs, ((0, 0), (0, 0), (2, 2), (0, 0)))                   # (B,6,H+4,W)
    L = (H + 4) * W + 4
    xlin = jnp.pad(xs.reshape(B, 6, (H + 4) * W), ((0, 0), (0, 0), (2, 2)))

    kernel = functools.partial(_vff_kernel, H=H, W=W)
    out = pl.pallas_call(
        kernel,
        out_shape=jax.ShapeDtypeStruct((B, Cout, HW), jnp.float32),
        grid=(B,),
        in_specs=[
            pl.BlockSpec((1, 6, L), lambda b: (b, 0, 0)),                # xlin
            pl.BlockSpec((1, 25, Cout, 6), lambda b: (b, 0, 0, 0)),      # wbig
            pl.BlockSpec((1, Cout, 1), lambda b: (b, 0, 0)),             # bbig
        ],
        out_specs=pl.BlockSpec((1, Cout, HW), lambda b: (b, 0, 0)),
        compiler_params=pltpu.CompilerParams(
            dimension_semantics=("parallel",)),
    )(xlin, wbig, bbig)

    return out.reshape(B, Cout, H, W)   # NCHW, same as the PyTorch module


# ---------------------------------------------------------------------------
# Pure-JAX reference (for a correctness check in __main__)
# ---------------------------------------------------------------------------

def vff_reference(x1, x2, x3, sup, params, mode="avg"):
    xcat = jnp.concatenate([x1, x2, x3, sup], axis=-1)                   # (B,H,W,8)
    if mode == "avg":
        pooled = jnp.mean(xcat, axis=(1, 2))
    else:
        pooled = jnp.max(xcat, axis=(1, 2))
    h = jnp.maximum(pooled @ params["wfc1"], 0.0)
    v = jax.nn.sigmoid(h @ params["wfc2"])                               # (B,24)

    def lap(x):
        y = lax.conv_general_dilated(
            x, params["wlap"], window_strides=(1, 1), padding="SAME",
            dimension_numbers=("NHWC", "HWIO", "NHWC"))
        return y + params["blap"].reshape(1, 1, 1, 8)

    l1, l2, l3 = lap(x1), lap(x2), lap(x3)
    res = (v[:, 0:8][:, None, None, :] * l1
           + v[:, 8:16][:, None, None, :] * l2
           + v[:, 16:24][:, None, None, :] * l3)                         # (B,H,W,8)
    h1 = res @ params["wo1"] + params["bo1"].reshape(1, 1, 1, -1)
    out = h1 @ params["wo2"] + params["bo2"].reshape(1, 1, 1, -1)
    return jnp.transpose(out, (0, 3, 1, 2))                              # NCHW


# ---------------------------------------------------------------------------
# Deterministic synthetic parameters (no checkpoint loading)
# ---------------------------------------------------------------------------

def init_params(key, outchannels=64):
    keys = jax.random.split(key, 8)

    def nrm(k, shape, s=0.1):
        return s * jax.random.normal(k, shape, jnp.float32)

    return dict(
        wfc1=nrm(keys[1], (8, 16)),            # Linear(8->16, bias=False)
        wfc2=nrm(keys[2], (16, 24)),           # Linear(16->24, bias=False)
        wlap=nrm(keys[0], (5, 5, 2, 8)),       # Conv2d(2->8, k=5) in HWIO
        blap=nrm(keys[3], (1, 8)),
        wo1=nrm(keys[4], (8, 64)),             # Conv2d(8->64, k=1)
        bo1=nrm(keys[5], (1, 64)),
        wo2=nrm(keys[6], (64, outchannels)),   # Conv2d(64->outchannels, k=1)
        bo2=nrm(keys[7], (1, outchannels)),
    )
    # TODO(synk): reverseconv / self.conv / the unused pooling branch of the
    # module never participate in forward() and are omitted.


# ---------------------------------------------------------------------------

if __name__ == "__main__":
    B, H, W, C = 2, 16, 16, 2
    key = jax.random.PRNGKey(0)
    k1, k2, k3, k4, kp = jax.random.split(key, 5)
    x1 = jax.random.normal(k1, (B, H, W, C), jnp.float32)
    x2 = jax.random.normal(k2, (B, H, W, C), jnp.float32)
    x3 = jax.random.normal(k3, (B, H, W, C), jnp.float32)
    sup = jax.random.normal(k4, (B, H, W, C), jnp.float32)
    params = init_params(kp, outchannels=64)

    fwd = jax.jit(functools.partial(vff_forward, params=params, mode="avg"))
    res = fwd(x1, x2, x3, sup)
    jax.block_until_ready(res)
    assert res.shape == (B, 64, H, W), res.shape

    ref = vff_reference(x1, x2, x3, sup, params, mode="avg")
    err = float(jnp.max(jnp.abs(res - ref)))
    assert err < 1e-3, f"max abs err vs reference: {err}"

    print("KERNEL_OK")
</pallas_src>

<mosaic_0001>
module attributes {stable_mosaic.version = 11 : i64} {
  func.func @_vff_kernel(%arg0: i32, %arg1: memref<1x6x324xf32, #tpu.memory_space<vmem>>, %arg2: memref<1x25x64x6xf32, #tpu.memory_space<vmem>>, %arg3: memref<1x64x1xf32, #tpu.memory_space<vmem>>, %arg4: memref<1x64x256xf32, #tpu.memory_space<vmem>>) attributes {dimension_semantics = [#tpu.dimension_semantics<parallel>], iteration_bounds = array<i64: 2>, scalar_prefetch = 0 : i64, scratch_operands = 0 : i64, tpu.core_type = #tpu.core_type<tc>, window_params = [{transform_indices = @transform_0, window_bounds = array<i64: 1, 6, 324>}, {transform_indices = @transform_1, window_bounds = array<i64: 1, 25, 64, 6>}, {transform_indices = @transform_2, window_bounds = array<i64: 1, 64, 1>}, {transform_indices = @transform_3, window_bounds = array<i64: 1, 64, 256>}]} {
    %0 = tpu.iota {dimensions = array<i32: 1>} : vector<1x256xi32>
    %c16_i32 = arith.constant 16 : i32
    %c0_i32 = arith.constant 0 : i32
    %1 = arith.cmpi eq, %c16_i32, %c0_i32 : i32
    %c1_i32 = arith.constant 1 : i32
    %2 = arith.select %1, %c1_i32, %c16_i32 : i32
    %3 = vector.broadcast %2 : i32 to vector<1x256xi32>
    %4 = arith.remsi %0, %3 : vector<1x256xi32>
    %c0_i32_0 = arith.constant 0 : i32
    %5 = vector.broadcast %c0_i32_0 : i32 to vector<1x256xi32>
    %6 = arith.cmpi ne, %4, %5 : vector<1x256xi32>
    %c0_i32_1 = arith.constant 0 : i32
    %7 = vector.broadcast %c0_i32_1 : i32 to vector<1x256xi32>
    %8 = arith.cmpi slt, %4, %7 : vector<1x256xi32>
    %c0_i32_2 = arith.constant 0 : i32
    %9 = arith.cmpi slt, %2, %c0_i32_2 : i32
    %10 = vector.broadcast %9 : i1 to vector<1x256xi1>
    %11 = vector.broadcast %10 : vector<1x256xi1> to vector<1x256xi1>
    %12 = arith.xori %8, %11 : vector<1x256xi1>
    %13 = arith.andi %12, %6 : vector<1x256xi1>
    %14 = vector.broadcast %2 : i32 to vector<1x256xi32>
    %15 = arith.addi %4, %14 : vector<1x256xi32>
    %16 = arith.select %13, %15, %4 : vector<1x256xi1>, vector<1x256xi32>
    %c2_i32 = arith.constant 2 : i32
    %17 = vector.broadcast %c2_i32 : i32 to vector<1x256xi32>
    %18 = arith.cmpi sge, %16, %17 : vector<1x256xi32>
    %c18_i32 = arith.constant 18 : i32
    %19 = vector.broadcast %c18_i32 : i32 to vector<1x256xi32>
    %20 = arith.cmpi slt, %16, %19 : vector<1x256xi32>
    %21 = arith.andi %18, %20 : vector<1x256xi1>
    %c1_i32_3 = arith.constant 1 : i32
    %22 = vector.broadcast %c1_i32_3 : i32 to vector<1x256xi32>
    %23 = arith.cmpi sge, %16, %22 : vector<1x256xi32>
    %c17_i32 = arith.constant 17 : i32
    %24 = vector.broadcast %c17_i32 : i32 to vector<1x256xi32>
    %25 = arith.cmpi slt, %16, %24 : vector<1x256xi32>
    %26 = arith.andi %23, %25 : vector<1x256xi1>
    %c-1_i32 = arith.constant -1 : i32
    %27 = vector.broadcast %c-1_i32 : i32 to vector<1x256xi32>
    %28 = arith.cmpi sge, %16, %27 : vector<1x256xi32>
    %c15_i32 = arith.constant 15 : i32
    %29 = vector.broadcast %c15_i32 : i32 to vector<1x256xi32>
    %30 = arith.cmpi slt, %16, %29 : vector<1x256xi32>
    %31 = arith.andi %28, %30 : vector<1x256xi1>
    %c-2_i32 = arith.constant -2 : i32
    %32 = vector.broadcast %c-2_i32 : i32 to vector<1x256xi32>
    %33 = arith.cmpi sge, %16, %32 : vector<1x256xi32>
    %c14_i32 = arith.constant 14 : i32
    %34 = vector.broadcast %c14_i32 : i32 to vector<1x256xi32>
    %35 = arith.cmpi slt, %16, %34 : vector<1x256xi32>
    %36 = arith.andi %33, %35 : vector<1x256xi1>
    %cst = arith.constant 0.000000e+00 : f32
    %37 = vector.broadcast %cst : f32 to vector<64x256xf32>
    %c0 = arith.constant 0 : index
    %c0_4 = arith.constant 0 : index
    %c0_5 = arith.constant 0 : index
    %38 = vector.load %arg1[%c0, %c0_4, %c0_5] : memref<1x6x324xf32, #tpu.memory_space<vmem>>, vector<1x6x256xf32>
    %39 = vector.shape_cast %38 : vector<1x6x256xf32> to vector<6x256xf32>
    %cst_6 = arith.constant 0.000000e+00 : f32
    %40 = vector.shape_cast %21 : vector<1x256xi1> to vector<1x256xi1>
    %41 = vector.broadcast %40 : vector<1x256xi1> to vector<6x256xi1>
    %42 = vector.broadcast %cst_6 : f32 to vector<6x256xf32>
    %43 = arith.select %41, %39, %42 : vector<6x256xi1>, vector<6x256xf32>
    %c0_7 = arith.constant 0 : index
    %c0_8 = arith.constant 0 : index
    %c0_9 = arith.constant 0 : index
    %c0_10 = arith.constant 0 : index
    %44 = vector.load %arg2[%c0_7, %c0_8, %c0_9, %c0_10] : memref<1x25x64x6xf32, #tpu.memory_space<vmem>>, vector<1x1x64x6xf32>
    %45 = vector.shape_cast %44 : vector<1x1x64x6xf32> to vector<64x6xf32>
    %cst_11 = arith.constant dense<0.000000e+00> : vector<64x256xf32>
    %46 = tpu.matmul %45, %43, %cst_11 {dimension_numbers = #tpu.dot_dimension_numbers<[1], [0], [0], [1], [0, 0, 1, 1], [], []>} : vector<64x6xf32>, vector<6x256xf32>, vector<64x256xf32> -> vector<64x256xf32>
    %47 = arith.addf %37, %46 : vector<64x256xf32>
    %c0_12 = arith.constant 0 : index
    %c0_13 = arith.constant 0 : index
    %c1 = arith.constant 1 : index
    %48 = vector.load %arg1[%c0_12, %c0_13, %c1] : memref<1x6x324xf32, #tpu.memory_space<vmem>>, vector<1x6x256xf32>
    %49 = vector.shape_cast %48 : vector<1x6x256xf32> to vector<6x256xf32>
    %cst_14 = arith.constant 0.000000e+00 : f32
    %50 = vector.shape_cast %26 : vector<1x256xi1> to vector<1x256xi1>
    %51 = vector.broadcast %50 : vector<1x256xi1> to vector<6x256xi1>
    %52 = vector.broadcast %cst_14 : f32 to vector<6x256xf32>
    %53 = arith.select %51, %49, %52 : vector<6x256xi1>, vector<6x256xf32>
    %c0_15 = arith.constant 0 : index
    %c1_16 = arith.constant 1 : index
    %c0_17 = arith.constant 0 : index
    %c0_18 = arith.constant 0 : index
    %54 = vector.load %arg2[%c0_15, %c1_16, %c0_17, %c0_18] : memref<1x25x64x6xf32, #tpu.memory_space<vmem>>, vector<1x1x64x6xf32>
    %55 = vector.shape_cast %54 : vector<1x1x64x6xf32> to vector<64x6xf32>
    %cst_19 = arith.constant dense<0.000000e+00> : vector<64x256xf32>
    %56 = tpu.matmul %55, %53, %cst_19 {dimension_numbers = #tpu.dot_dimension_numbers<[1], [0], [0], [1], [0, 0, 1, 1], [], []>} : vector<64x6xf32>, vector<6x256xf32>, vector<64x256xf32> -> vector<64x256xf32>
    %57 = arith.addf %47, %56 : vector<64x256xf32>
    %c0_20 = arith.constant 0 : index
    %c0_21 = arith.constant 0 : index
    %c2 = arith.constant 2 : index
    %58 = vector.load %arg1[%c0_20, %c0_21, %c2] : memref<1x6x324xf32, #tpu.memory_space<vmem>>, vector<1x6x256xf32>
    %59 = vector.shape_cast %58 : vector<1x6x256xf32> to vector<6x256xf32>
    %c0_22 = arith.constant 0 : index
    %c2_23 = arith.constant 2 : index
    %c0_24 = arith.constant 0 : index
    %c0_25 = arith.constant 0 : index
    %60 = vector.load %arg2[%c0_22, %c2_23, %c0_24, %c0_25] : memref<1x25x64x6xf32, #tpu.memory_space<vmem>>, vector<1x1x64x6xf32>
    %61 = vector.shape_cast %60 : vector<1x1x64x6xf32> to vector<64x6xf32>
    %cst_26 = arith.constant dense<0.000000e+00> : vector<64x256xf32>
    %62 = tpu.matmul %61, %59, %cst_26 {dimension_numbers = #tpu.dot_dimension_numbers<[1], [0], [0], [1], [0, 0, 1, 1], [], []>} : vector<64x6xf32>, vector<6x256xf32>, vector<64x256xf32> -> vector<64x256xf32>
    %63 = arith.addf %57, %62 : vector<64x256xf32>
    %c0_27 = arith.constant 0 : index
    %c0_28 = arith.constant 0 : index
    %c3 = arith.constant 3 : index
    %64 = vector.load %arg1[%c0_27, %c0_28, %c3] : memref<1x6x324xf32, #tpu.memory_space<vmem>>, vector<1x6x256xf32>
    %65 = vector.shape_cast %64 : vector<1x6x256xf32> to vector<6x256xf32>
    %cst_29 = arith.constant 0.000000e+00 : f32
    %66 = vector.shape_cast %31 : vector<1x256xi1> to vector<1x256xi1>
    %67 = vector.broadcast %66 : vector<1x256xi1> to vector<6x256xi1>
    %68 = vector.broadcast %cst_29 : f32 to vector<6x256xf32>
    %69 = arith.select %67, %65, %68 : vector<6x256xi1>, vector<6x256xf32>
    %c0_30 = arith.constant 0 : index
    %c3_31 = arith.constant 3 : index
    %c0_32 = arith.constant 0 : index
    %c0_33 = arith.constant 0 : index
    %70 = vector.load %arg2[%c0_30, %c3_31, %c0_32, %c0_33] : memref<1x25x64x6xf32, #tpu.memory_space<vmem>>, vector<1x1x64x6xf32>
    %71 = vector.shape_cast %70 : vector<1x1x64x6xf32> to vector<64x6xf32>
    %cst_34 = arith.constant dense<0.000000e+00> : vector<64x256xf32>
    %72 = tpu.matmul %71, %69, %cst_34 {dimension_numbers = #tpu.dot_dimension_numbers<[1], [0], [0], [1], [0, 0, 1, 1], [], []>} : vector<64x6xf32>, vector<6x256xf32>, vector<64x256xf32> -> vector<64x256xf32>
    %73 = arith.addf %63, %72 : vector<64x256xf32>
    %c0_35 = arith.constant 0 : index
    %c0_36 = arith.constant 0 : index
    %c4 = arith.constant 4 : index
    %74 = vector.load %arg1[%c0_35, %c0_36, %c4] : memref<1x6x324xf32, #tpu.memory_space<vmem>>, vector<1x6x256xf32>
    %75 = vector.shape_cast %74 : vector<1x6x256xf32> to vector<6x256xf32>
    %cst_37 = arith.constant 0.000000e+00 : f32
    %76 = vector.shape_cast %36 : vector<1x256xi1> to vector<1x256xi1>
    %77 = vector.broadcast %76 : vector<1x256xi1> to vector<6x256xi1>
    %78 = vector.broadcast %cst_37 : f32 to vector<6x256xf32>
    %79 = arith.select %77, %75, %78 : vector<6x256xi1>, vector<6x256xf32>
    %c0_38 = arith.constant 0 : index
    %c4_39 = arith.constant 4 : index
    %c0_40 = arith.constant 0 : index
    %c0_41 = arith.constant 0 : index
    %80 = vector.load %arg2[%c0_38, %c4_39, %c0_40, %c0_41] : memref<1x25x64x6xf32, #tpu.memory_space<vmem>>, vector<1x1x64x6xf32>
    %81 = vector.shape_cast %80 : vector<1x1x64x6xf32> to vector<64x6xf32>
    %cst_42 = arith.constant dense<0.000000e+00> : vector<64x256xf32>
    %82 = tpu.matmul %81, %79, %cst_42 {dimension_numbers = #tpu.dot_dimension_numbers<[1], [0], [0], [1], [0, 0, 1, 1], [], []>} : vector<64x6xf32>, vector<6x256xf32>, vector<64x256xf32> -> vector<64x256xf32>
    %83 = arith.addf %73, %82 : vector<64x256xf32>
    %c0_43 = arith.constant 0 : index
    %c0_44 = arith.constant 0 : index
    %c16 = arith.constant 16 : index
    %84 = vector.load %arg1[%c0_43, %c0_44, %c16] : memref<1x6x324xf32, #tpu.memory_space<vmem>>, vector<1x6x256xf32>
    %85 = vector.shape_cast %84 : vector<1x6x256xf32> to vector<6x256xf32>
    %cst_45 = arith.constant 0.000000e+00 : f32
    %86 = vector.shape_cast %21 : vector<1x256xi1> to vector<1x256xi1>
    %87 = vector.broadcast %86 : vector<1x256xi1> to vector<6x256xi1>
    %88 = vector.broadcast %cst_45 : f32 to vector<6x256xf32>
    %89 = arith.select %87, %85, %88 : vector<6x256xi1>, vector<6x256xf32>
    %c0_46 = arith.constant 0 : index
    %c5 = arith.constant 5 : index
    %c0_47 = arith.constant 0 : index
    %c0_48 = arith.constant 0 : index
    %90 = vector.load %arg2[%c0_46, %c5, %c0_47, %c0_48] : memref<1x25x64x6xf32, #tpu.memory_space<vmem>>, vector<1x1x64x6xf32>
    %91 = vector.shape_cast %90 : vector<1x1x64x6xf32> to vector<64x6xf32>
    %cst_49 = arith.constant dense<0.000000e+00> : vector<64x256xf32>
    %92 = tpu.matmul %91, %89, %cst_49 {dimension_numbers = #tpu.dot_dimension_numbers<[1], [0], [0], [1], [0, 0, 1, 1], [], []>} : vector<64x6xf32>, vector<6x256xf32>, vector<64x256xf32> -> vector<64x256xf32>
    %93 = arith.addf %83, %92 : vector<64x256xf32>
    %c0_50 = arith.constant 0 : index
    %c0_51 = arith.constant 0 : index
    %c17 = arith.constant 17 : index
    %94 = vector.load %arg1[%c0_50, %c0_51, %c17] : memref<1x6x324xf32, #tpu.memory_space<vmem>>, vector<1x6x256xf32>
    %95 = vector.shape_cast %94 : vector<1x6x256xf32> to vector<6x256xf32>
    %cst_52 = arith.constant 0.000000e+00 : f32
    %96 = vector.shape_cast %26 : vector<1x256xi1> to vector<1x256xi1>
    %97 = vector.broadcast %96 : vector<1x256xi1> to vector<6x256xi1>
    %98 = vector.broadcast %cst_52 : f32 to vector<6x256xf32>
    %99 = arith.select %97, %95, %98 : vector<6x256xi1>, vector<6x256xf32>
    %c0_53 = arith.constant 0 : index
    %c6 = arith.constant 6 : index
    %c0_54 = arith.constant 0 : index
    %c0_55 = arith.constant 0 : index
    %100 = vector.load %arg2[%c0_53, %c6, %c0_54, %c0_55] : memref<1x25x64x6xf32, #tpu.memory_space<vmem>>, vector<1x1x64x6xf32>
    %101 = vector.shape_cast %100 : vector<1x1x64x6xf32> to vector<64x6xf32>
    %cst_56 = arith.constant dense<0.000000e+00> : vector<64x256xf32>
    %102 = tpu.matmul %101, %99, %cst_56 {dimension_numbers = #tpu.dot_dimension_numbers<[1], [0], [0], [1], [0, 0, 1, 1], [], []>} : vector<64x6xf32>, vector<6x256xf32>, vector<64x256xf32> -> vector<64x256xf32>
    %103 = arith.addf %93, %102 : vector<64x256xf32>
    %c0_57 = arith.constant 0 : index
    %c0_58 = arith.constant 0 : index
    %c18 = arith.constant 18 : index
    %104 = vector.load %arg1[%c0_57, %c0_58, %c18] : memref<1x6x324xf32, #tpu.memory_space<vmem>>, vector<1x6x256xf32>
    %105 = vector.shape_cast %104 : vector<1x6x256xf32> to vector<6x256xf32>
    %c0_59 = arith.constant 0 : index
    %c7 = arith.constant 7 : index
    %c0_60 = arith.constant 0 : index
    %c0_61 = arith.constant 0 : index
    %106 = vector.load %arg2[%c0_59, %c7, %c0_60, %c0_61] : memref<1x25x64x6xf32, #tpu.memory_space<vmem>>, vector<1x1x64x6xf32>
    %107 = vector.shape_cast %106 : vector<1x1x64x6xf32> to vector<64x6xf32>
    %cst_62 = arith.constant dense<0.000000e+00> : vector<64x256xf32>
    %108 = tpu.matmul %107, %105, %cst_62 {dimension_numbers = #tpu.dot_dimension_numbers<[1], [0], [0], [1], [0, 0, 1, 1], [], []>} : vector<64x6xf32>, vector<6x256xf32>, vector<64x256xf32> -> vector<64x256xf32>
    %109 = arith.addf %103, %108 : vector<64x256xf32>
    %c0_63 = arith.constant 0 : index
    %c0_64 = arith.constant 0 : index
    %c19 = arith.constant 19 : index
    %110 = vector.load %arg1[%c0_63, %c0_64, %c19] : memref<1x6x324xf32, #tpu.memory_space<vmem>>, vector<1x6x256xf32>
    %111 = vector.shape_cast %110 : vector<1x6x256xf32> to vector<6x256xf32>
    %cst_65 = arith.constant 0.000000e+00 : f32
    %112 = vector.shape_cast %31 : vector<1x256xi1> to vector<1x256xi1>
    %113 = vector.broadcast %112 : vector<1x256xi1> to vector<6x256xi1>
    %114 = vector.broadcast %cst_65 : f32 to vector<6x256xf32>
    %115 = arith.select %113, %111, %114 : vector<6x256xi1>, vector<6x256xf32>
    %c0_66 = arith.constant 0 : index
    %c8 = arith.constant 8 : index
    %c0_67 = arith.constant 0 : index
    %c0_68 = arith.constant 0 : index
    %116 = vector.load %arg2[%c0_66, %c8, %c0_67, %c0_68] : memref<1x25x64x6xf32, #tpu.memory_space<vmem>>, vector<1x1x64x6xf32>
    %117 = vector.shape_cast %116 : vector<1x1x64x6xf32> to vector<64x6xf32>
    %cst_69 = arith.constant dense<0.000000e+00> : vector<64x256xf32>
    %118 = tpu.matmul %117, %115, %cst_69 {dimension_numbers = #tpu.dot_dimension_numbers<[1], [0], [0], [1], [0, 0, 1, 1], [], []>} : vector<64x6xf32>, vector<6x256xf32>, vector<64x256xf32> -> vector<64x256xf32>
    %119 = arith.addf %109, %118 : vector<64x256xf32>
    %c0_70 = arith.constant 0 : index
    %c0_71 = arith.constant 0 : index
    %c20 = arith.constant 20 : index
    %120 = vector.load %arg1[%c0_70, %c0_71, %c20] : memref<1x6x324xf32, #tpu.memory_space<vmem>>, vector<1x6x256xf32>
    %121 = vector.shape_cast %120 : vector<1x6x256xf32> to vector<6x256xf32>
    %cst_72 = arith.constant 0.000000e+00 : f32
    %122 = vector.shape_cast %36 : vector<1x256xi1> to vector<1x256xi1>
    %123 = vector.broadcast %122 : vector<1x256xi1> to vector<6x256xi1>
    %124 = vector.broadcast %cst_72 : f32 to vector<6x256xf32>
    %125 = arith.select %123, %121, %124 : vector<6x256xi1>, vector<6x256xf32>
    %c0_73 = arith.constant 0 : index
    %c9 = arith.constant 9 : index
    %c0_74 = arith.constant 0 : index
    %c0_75 = arith.constant 0 : index
    %126 = vector.load %arg2[%c0_73, %c9, %c0_74, %c0_75] : memref<1x25x64x6xf32, #tpu.memory_space<vmem>>, vector<1x1x64x6xf32>
    %127 = vector.shape_cast %126 : vector<1x1x64x6xf32> to vector<64x6xf32>
    %cst_76 = arith.constant dense<0.000000e+00> : vector<64x256xf32>
    %128 = tpu.matmul %127, %125, %cst_76 {dimension_numbers = #tpu.dot_dimension_numbers<[1], [0], [0], [1], [0, 0, 1, 1], [], []>} : vector<64x6xf32>, vector<6x256xf32>, vector<64x256xf32> -> vector<64x256xf32>
    %129 = arith.addf %119, %128 : vector<64x256xf32>
    %c0_77 = arith.constant 0 : index
    %c0_78 = arith.constant 0 : index
    %c32 = arith.constant 32 : index
    %130 = vector.load %arg1[%c0_77, %c0_78, %c32] : memref<1x6x324xf32, #tpu.memory_space<vmem>>, vector<1x6x256xf32>
    %131 = vector.shape_cast %130 : vector<1x6x256xf32> to vector<6x256xf32>
    %cst_79 = arith.constant 0.000000e+00 : f32
    %132 = vector.shape_cast %21 : vector<1x256xi1> to vector<1x256xi1>
    %133 = vector.broadcast %132 : vector<1x256xi1> to vector<6x256xi1>
    %134 = vector.broadcast %cst_79 : f32 to vector<6x256xf32>
    %135 = arith.select %133, %131, %134 : vector<6x256xi1>, vector<6x256xf32>
    %c0_80 = arith.constant 0 : index
    %c10 = arith.constant 10 : index
    %c0_81 = arith.constant 0 : index
    %c0_82 = arith.constant 0 : index
    %136 = vector.load %arg2[%c0_80, %c10, %c0_81, %c0_82] : memref<1x25x64x6xf32, #tpu.memory_space<vmem>>, vector<1x1x64x6xf32>
    %137 = vector.shape_cast %136 : vector<1x1x64x6xf32> to vector<64x6xf32>
    %cst_83 = arith.constant dense<0.000000e+00> : vector<64x256xf32>
    %138 = tpu.matmul %137, %135, %cst_83 {dimension_numbers = #tpu.dot_dimension_numbers<[1], [0], [0], [1], [0, 0, 1, 1], [], []>} : vector<64x6xf32>, vector<6x256xf32>, vector<64x256xf32> -> vector<64x256xf32>
    %139 = arith.addf %129, %138 : vector<64x256xf32>
    %c0_84 = arith.constant 0 : index
    %c0_85 = arith.constant 0 : index
    %c33 = arith.constant 33 : index
    %140 = vector.load %arg1[%c0_84, %c0_85, %c33] : memref<1x6x324xf32, #tpu.memory_space<vmem>>, vector<1x6x256xf32>
    %141 = vector.shape_cast %140 : vector<1x6x256xf32> to vector<6x256xf32>
    %cst_86 = arith.constant 0.000000e+00 : f32
    %142 = vector.shape_cast %26 : vector<1x256xi1> to vector<1x256xi1>
    %143 = vector.broadcast %142 : vector<1x256xi1> to vector<6x256xi1>
    %144 = vector.broadcast %cst_86 : f32 to vector<6x256xf32>
    %145 = arith.select %143, %141, %144 : vector<6x256xi1>, vector<6x256xf32>
    %c0_87 = arith.constant 0 : index
    %c11 = arith.constant 11 : index
    %c0_88 = arith.constant 0 : index
    %c0_89 = arith.constant 0 : index
    %146 = vector.load %arg2[%c0_87, %c11, %c0_88, %c0_89] : memref<1x25x64x6xf32, #tpu.memory_space<vmem>>, vector<1x1x64x6xf32>
    %147 = vector.shape_cast %146 : vector<1x1x64x6xf32> to vector<64x6xf32>
    %cst_90 = arith.constant dense<0.000000e+00> : vector<64x256xf32>
    %148 = tpu.matmul %147, %145, %cst_90 {dimension_numbers = #tpu.dot_dimension_numbers<[1], [0], [0], [1], [0, 0, 1, 1], [], []>} : vector<64x6xf32>, vector<6x256xf32>, vector<64x256xf32> -> vector<64x256xf32>
    %149 = arith.addf %139, %148 : vector<64x256xf32>
    %c0_91 = arith.constant 0 : index
    %c0_92 = arith.constant 0 : index
    %c34 = arith.constant 34 : index
    %150 = vector.load %arg1[%c0_91, %c0_92, %c34] : memref<1x6x324xf32, #tpu.memory_space<vmem>>, vector<1x6x256xf32>
    %151 = vector.shape_cast %150 : vector<1x6x256xf32> to vector<6x256xf32>
    %c0_93 = arith.constant 0 : index
    %c12 = arith.constant 12 : index
    %c0_94 = arith.constant 0 : index
    %c0_95 = arith.constant 0 : index
    %152 = vector.load %arg2[%c0_93, %c12, %c0_94, %c0_95] : memref<1x25x64x6xf32, #tpu.memory_space<vmem>>, vector<1x1x64x6xf32>
    %153 = vector.shape_cast %152 : vector<1x1x64x6xf32> to vector<64x6xf32>
    %cst_96 = arith.constant dense<0.000000e+00> : vector<64x256xf32>
    %154 = tpu.matmul %153, %151, %cst_96 {dimension_numbers = #tpu.dot_dimension_numbers<[1], [0], [0], [1], [0, 0, 1, 1], [], []>} : vector<64x6xf32>, vector<6x256xf32>, vector<64x256xf32> -> vector<64x256xf32>
    %155 = arith.addf %149, %154 : vector<64x256xf32>
    %c0_97 = arith.constant 0 : index
    %c0_98 = arith.constant 0 : index
    %c35 = arith.constant 35 : index
    %156 = vector.load %arg1[%c0_97, %c0_98, %c35] : memref<1x6x324xf32, #tpu.memory_space<vmem>>, vector<1x6x256xf32>
    %157 = vector.shape_cast %156 : vector<1x6x256xf32> to vector<6x256xf32>
    %cst_99 = arith.constant 0.000000e+00 : f32
    %158 = vector.shape_cast %31 : vector<1x256xi1> to vector<1x256xi1>
    %159 = vector.broadcast %158 : vector<1x256xi1> to vector<6x256xi1>
    %160 = vector.broadcast %cst_99 : f32 to vector<6x256xf32>
    %161 = arith.select %159, %157, %160 : vector<6x256xi1>, vector<6x256xf32>
    %c0_100 = arith.constant 0 : index
    %c13 = arith.constant 13 : index
    %c0_101 = arith.constant 0 : index
    %c0_102 = arith.constant 0 : index
    %162 = vector.load %arg2[%c0_100, %c13, %c0_101, %c0_102] : memref<1x25x64x6xf32, #tpu.memory_space<vmem>>, vector<1x1x64x6xf32>
    %163 = vector.shape_cast %162 : vector<1x1x64x6xf32> to vector<64x6xf32>
    %cst_103 = arith.constant dense<0.000000e+00> : vector<64x256xf32>
    %164 = tpu.matmul %163, %161, %cst_103 {dimension_numbers = #tpu.dot_dimension_numbers<[1], [0], [0], [1], [0, 0, 1, 1], [], []>} : vector<64x6xf32>, vector<6x256xf32>, vector<64x256xf32> -> vector<64x256xf32>
    %165 = arith.addf %155, %164 : vector<64x256xf32>
    %c0_104 = arith.constant 0 : index
    %c0_105 = arith.constant 0 : index
    %c36 = arith.constant 36 : index
    %166 = vector.load %arg1[%c0_104, %c0_105, %c36] : memref<1x6x324xf32, #tpu.memory_space<vmem>>, vector<1x6x256xf32>
    %167 = vector.shape_cast %166 : vector<1x6x256xf32> to vector<6x256xf32>
    %cst_106 = arith.constant 0.000000e+00 : f32
    %168 = vector.shape_cast %36 : vector<1x256xi1> to vector<1x256xi1>
    %169 = vector.broadcast %168 : vector<1x256xi1> to vector<6x256xi1>
    %170 = vector.broadcast %cst_106 : f32 to vector<6x256xf32>
    %171 = arith.select %169, %167, %170 : vector<6x256xi1>, vector<6x256xf32>
    %c0_107 = arith.constant 0 : index
    %c14 = arith.constant 14 : index
    %c0_108 = arith.constant 0 : index
    %c0_109 = arith.constant 0 : index
    %172 = vector.load %arg2[%c0_107, %c14, %c0_108, %c0_109] : memref<1x25x64x6xf32, #tpu.memory_space<vmem>>, vector<1x1x64x6xf32>
    %173 = vector.shape_cast %172 : vector<1x1x64x6xf32> to vector<64x6xf32>
    %cst_110 = arith.constant dense<0.000000e+00> : vector<64x256xf32>
    %174 = tpu.matmul %173, %171, %cst_110 {dimension_numbers = #tpu.dot_dimension_numbers<[1], [0], [0], [1], [0, 0, 1, 1], [], []>} : vector<64x6xf32>, vector<6x256xf32>, vector<64x256xf32> -> vector<64x256xf32>
    %175 = arith.addf %165, %174 : vector<64x256xf32>
    %c0_111 = arith.constant 0 : index
    %c0_112 = arith.constant 0 : index
    %c48 = arith.constant 48 : index
    %176 = vector.load %arg1[%c0_111, %c0_112, %c48] : memref<1x6x324xf32, #tpu.memory_space<vmem>>, vector<1x6x256xf32>
    %177 = vector.shape_cast %176 : vector<1x6x256xf32> to vector<6x256xf32>
    %cst_113 = arith.constant 0.000000e+00 : f32
    %178 = vector.shape_cast %21 : vector<1x256xi1> to vector<1x256xi1>
    %179 = vector.broadcast %178 : vector<1x256xi1> to vector<6x256xi1>
    %180 = vector.broadcast %cst_113 : f32 to vector<6x256xf32>
    %181 = arith.select %179, %177, %180 : vector<6x256xi1>, vector<6x256xf32>
    %c0_114 = arith.constant 0 : index
    %c15 = arith.constant 15 : index
    %c0_115 = arith.constant 0 : index
    %c0_116 = arith.constant 0 : index
    %182 = vector.load %arg2[%c0_114, %c15, %c0_115, %c0_116] : memref<1x25x64x6xf32, #tpu.memory_space<vmem>>, vector<1x1x64x6xf32>
    %183 = vector.shape_cast %182 : vector<1x1x64x6xf32> to vector<64x6xf32>
    %cst_117 = arith.constant dense<0.000000e+00> : vector<64x256xf32>
    %184 = tpu.matmul %183, %181, %cst_117 {dimension_numbers = #tpu.dot_dimension_numbers<[1], [0], [0], [1], [0, 0, 1, 1], [], []>} : vector<64x6xf32>, vector<6x256xf32>, vector<64x256xf32> -> vector<64x256xf32>
    %185 = arith.addf %175, %184 : vector<64x256xf32>
    %c0_118 = arith.constant 0 : index
    %c0_119 = arith.constant 0 : index
    %c49 = arith.constant 49 : index
    %186 = vector.load %arg1[%c0_118, %c0_119, %c49] : memref<1x6x324xf32, #tpu.memory_space<vmem>>, vector<1x6x256xf32>
    %187 = vector.shape_cast %186 : vector<1x6x256xf32> to vector<6x256xf32>
    %cst_120 = arith.constant 0.000000e+00 : f32
    %188 = vector.shape_cast %26 : vector<1x256xi1> to vector<1x256xi1>
    %189 = vector.broadcast %188 : vector<1x256xi1> to vector<6x256xi1>
    %190 = vector.broadcast %cst_120 : f32 to vector<6x256xf32>
    %191 = arith.select %189, %187, %190 : vector<6x256xi1>, vector<6x256xf32>
    %c0_121 = arith.constant 0 : index
    %c16_122 = arith.constant 16 : index
    %c0_123 = arith.constant 0 : index
    %c0_124 = arith.constant 0 : index
    %192 = vector.load %arg2[%c0_121, %c16_122, %c0_123, %c0_124] : memref<1x25x64x6xf32, #tpu.memory_space<vmem>>, vector<1x1x64x6xf32>
    %193 = vector.shape_cast %192 : vector<1x1x64x6xf32> to vector<64x6xf32>
    %cst_125 = arith.constant dense<0.000000e+00> : vector<64x256xf32>
    %194 = tpu.matmul %193, %191, %cst_125 {dimension_numbers = #tpu.dot_dimension_numbers<[1], [0], [0], [1], [0, 0, 1, 1], [], []>} : vector<64x6xf32>, vector<6x256xf32>, vector<64x256xf32> -> vector<64x256xf32>
    %195 = arith.addf %185, %194 : vector<64x256xf32>
    %c0_126 = arith.constant 0 : index
    %c0_127 = arith.constant 0 : index
    %c50 = arith.constant 50 : index
    %196 = vector.load %arg1[%c0_126, %c0_127, %c50] : memref<1x6x324xf32, #tpu.memory_space<vmem>>, vector<1x6x256xf32>
    %197 = vector.shape_cast %196 : vector<1x6x256xf32> to vector<6x256xf32>
    %c0_128 = arith.constant 0 : index
    %c17_129 = arith.constant 17 : index
    %c0_130 = arith.constant 0 : index
    %c0_131 = arith.constant 0 : index
    %198 = vector.load %arg2[%c0_128, %c17_129, %c0_130, %c0_131] : memref<1x25x64x6xf32, #tpu.memory_space<vmem>>, vector<1x1x64x6xf32>
    %199 = vector.shape_cast %198 : vector<1x1x64x6xf32> to vector<64x6xf32>
    %cst_132 = arith.constant dense<0.000000e+00> : vector<64x256xf32>
    %200 = tpu.matmul %199, %197, %cst_132 {dimension_numbers = #tpu.dot_dimension_numbers<[1], [0], [0], [1], [0, 0, 1, 1], [], []>} : vector<64x6xf32>, vector<6x256xf32>, vector<64x256xf32> -> vector<64x256xf32>
    %201 = arith.addf %195, %200 : vector<64x256xf32>
    %c0_133 = arith.constant 0 : index
    %c0_134 = arith.constant 0 : index
    %c51 = arith.constant 51 : index
    %202 = vector.load %arg1[%c0_133, %c0_134, %c51] : memref<1x6x324xf32, #tpu.memory_space<vmem>>, vector<1x6x256xf32>
    %203 = vector.shape_cast %202 : vector<1x6x256xf32> to vector<6x256xf32>
    %cst_135 = arith.constant 0.000000e+00 : f32
    %204 = vector.shape_cast %31 : vector<1x256xi1> to vector<1x256xi1>
    %205 = vector.broadcast %204 : vector<1x256xi1> to vector<6x256xi1>
    %206 = vector.broadcast %cst_135 : f32 to vector<6x256xf32>
    %207 = arith.select %205, %203, %206 : vector<6x256xi1>, vector<6x256xf32>
    %c0_136 = arith.constant 0 : index
    %c18_137 = arith.constant 18 : index
    %c0_138 = arith.constant 0 : index
    %c0_139 = arith.constant 0 : index
    %208 = vector.load %arg2[%c0_136, %c18_137, %c0_138, %c0_139] : memref<1x25x64x6xf32, #tpu.memory_space<vmem>>, vector<1x1x64x6xf32>
    %209 = vector.shape_cast %208 : vector<1x1x64x6xf32> to vector<64x6xf32>
    %cst_140 = arith.constant dense<0.000000e+00> : vector<64x256xf32>
    %210 = tpu.matmul %209, %207, %cst_140 {dimension_numbers = #tpu.dot_dimension_numbers<[1], [0], [0], [1], [0, 0, 1, 1], [], []>} : vector<64x6xf32>, vector<6x256xf32>, vector<64x256xf32> -> vector<64x256xf32>
    %211 = arith.addf %201, %210 : vector<64x256xf32>
    %c0_141 = arith.constant 0 : index
    %c0_142 = arith.constant 0 : index
    %c52 = arith.constant 52 : index
    %212 = vector.load %arg1[%c0_141, %c0_142, %c52] : memref<1x6x324xf32, #tpu.memory_space<vmem>>, vector<1x6x256xf32>
    %213 = vector.shape_cast %212 : vector<1x6x256xf32> to vector<6x256xf32>
    %cst_143 = arith.constant 0.000000e+00 : f32
    %214 = vector.shape_cast %36 : vector<1x256xi1> to vector<1x256xi1>
    %215 = vector.broadcast %214 : vector<1x256xi1> to vector<6x256xi1>
    %216 = vector.broadcast %cst_143 : f32 to vector<6x256xf32>
    %217 = arith.select %215, %213, %216 : vector<6x256xi1>, vector<6x256xf32>
    %c0_144 = arith.constant 0 : index
    %c19_145 = arith.constant 19 : index
    %c0_146 = arith.constant 0 : index
    %c0_147 = arith.constant 0 : index
    %218 = vector.load %arg2[%c0_144, %c19_145, %c0_146, %c0_147] : memref<1x25x64x6xf32, #tpu.memory_space<vmem>>, vector<1x1x64x6xf32>
    %219 = vector.shape_cast %218 : vector<1x1x64x6xf32> to vector<64x6xf32>
    %cst_148 = arith.constant dense<0.000000e+00> : vector<64x256xf32>
    %220 = tpu.matmul %219, %217, %cst_148 {dimension_numbers = #tpu.dot_dimension_numbers<[1], [0], [0], [1], [0, 0, 1, 1], [], []>} : vector<64x6xf32>, vector<6x256xf32>, vector<64x256xf32> -> vector<64x256xf32>
    %221 = arith.addf %211, %220 : vector<64x256xf32>
    %c0_149 = arith.constant 0 : index
    %c0_150 = arith.constant 0 : index
    %c64 = arith.constant 64 : index
    %222 = vector.load %arg1[%c0_149, %c0_150, %c64] : memref<1x6x324xf32, #tpu.memory_space<vmem>>, vector<1x6x256xf32>
    %223 = vector.shape_cast %222 : vector<1x6x256xf32> to vector<6x256xf32>
    %cst_151 = arith.constant 0.000000e+00 : f32
    %224 = vector.shape_cast %21 : vector<1x256xi1> to vector<1x256xi1>
    %225 = vector.broadcast %224 : vector<1x256xi1> to vector<6x256xi1>
    %226 = vector.broadcast %cst_151 : f32 to vector<6x256xf32>
    %227 = arith.select %225, %223, %226 : vector<6x256xi1>, vector<6x256xf32>
    %c0_152 = arith.constant 0 : index
    %c20_153 = arith.constant 20 : index
    %c0_154 = arith.constant 0 : index
    %c0_155 = arith.constant 0 : index
    %228 = vector.load %arg2[%c0_152, %c20_153, %c0_154, %c0_155] : memref<1x25x64x6xf32, #tpu.memory_space<vmem>>, vector<1x1x64x6xf32>
    %229 = vector.shape_cast %228 : vector<1x1x64x6xf32> to vector<64x6xf32>
    %cst_156 = arith.constant dense<0.000000e+00> : vector<64x256xf32>
    %230 = tpu.matmul %229, %227, %cst_156 {dimension_numbers = #tpu.dot_dimension_numbers<[1], [0], [0], [1], [0, 0, 1, 1], [], []>} : vector<64x6xf32>, vector<6x256xf32>, vector<64x256xf32> -> vector<64x256xf32>
    %231 = arith.addf %221, %230 : vector<64x256xf32>
    %c0_157 = arith.constant 0 : index
    %c0_158 = arith.constant 0 : index
    %c65 = arith.constant 65 : index
    %232 = vector.load %arg1[%c0_157, %c0_158, %c65] : memref<1x6x324xf32, #tpu.memory_space<vmem>>, vector<1x6x256xf32>
    %233 = vector.shape_cast %232 : vector<1x6x256xf32> to vector<6x256xf32>
    %cst_159 = arith.constant 0.000000e+00 : f32
    %234 = vector.shape_cast %26 : vector<1x256xi1> to vector<1x256xi1>
    %235 = vector.broadcast %234 : vector<1x256xi1> to vector<6x256xi1>
    %236 = vector.broadcast %cst_159 : f32 to vector<6x256xf32>
    %237 = arith.select %235, %233, %236 : vector<6x256xi1>, vector<6x256xf32>
    %c0_160 = arith.constant 0 : index
    %c21 = arith.constant 21 : index
    %c0_161 = arith.constant 0 : index
    %c0_162 = arith.constant 0 : index
    %238 = vector.load %arg2[%c0_160, %c21, %c0_161, %c0_162] : memref<1x25x64x6xf32, #tpu.memory_space<vmem>>, vector<1x1x64x6xf32>
    %239 = vector.shape_cast %238 : vector<1x1x64x6xf32> to vector<64x6xf32>
    %cst_163 = arith.constant dense<0.000000e+00> : vector<64x256xf32>
    %240 = tpu.matmul %239, %237, %cst_163 {dimension_numbers = #tpu.dot_dimension_numbers<[1], [0], [0], [1], [0, 0, 1, 1], [], []>} : vector<64x6xf32>, vector<6x256xf32>, vector<64x256xf32> -> vector<64x256xf32>
    %241 = arith.addf %231, %240 : vector<64x256xf32>
    %c0_164 = arith.constant 0 : index
    %c0_165 = arith.constant 0 : index
    %c66 = arith.constant 66 : index
    %242 = vector.load %arg1[%c0_164, %c0_165, %c66] : memref<1x6x324xf32, #tpu.memory_space<vmem>>, vector<1x6x256xf32>
    %243 = vector.shape_cast %242 : vector<1x6x256xf32> to vector<6x256xf32>
    %c0_166 = arith.constant 0 : index
    %c22 = arith.constant 22 : index
    %c0_167 = arith.constant 0 : index
    %c0_168 = arith.constant 0 : index
    %244 = vector.load %arg2[%c0_166, %c22, %c0_167, %c0_168] : memref<1x25x64x6xf32, #tpu.memory_space<vmem>>, vector<1x1x64x6xf32>
    %245 = vector.shape_cast %244 : vector<1x1x64x6xf32> to vector<64x6xf32>
    %cst_169 = arith.constant dense<0.000000e+00> : vector<64x256xf32>
    %246 = tpu.matmul %245, %243, %cst_169 {dimension_numbers = #tpu.dot_dimension_numbers<[1], [0], [0], [1], [0, 0, 1, 1], [], []>} : vector<64x6xf32>, vector<6x256xf32>, vector<64x256xf32> -> vector<64x256xf32>
    %247 = arith.addf %241, %246 : vector<64x256xf32>
    %c0_170 = arith.constant 0 : index
    %c0_171 = arith.constant 0 : index
    %c67 = arith.constant 67 : index
    %248 = vector.load %arg1[%c0_170, %c0_171, %c67] : memref<1x6x324xf32, #tpu.memory_space<vmem>>, vector<1x6x256xf32>
    %249 = vector.shape_cast %248 : vector<1x6x256xf32> to vector<6x256xf32>
    %cst_172 = arith.constant 0.000000e+00 : f32
    %250 = vector.shape_cast %31 : vector<1x256xi1> to vector<1x256xi1>
    %251 = vector.broadcast %250 : vector<1x256xi1> to vector<6x256xi1>
    %252 = vector.broadcast %cst_172 : f32 to vector<6x256xf32>
    %253 = arith.select %251, %249, %252 : vector<6x256xi1>, vector<6x256xf32>
    %c0_173 = arith.constant 0 : index
    %c23 = arith.constant 23 : index
    %c0_174 = arith.constant 0 : index
    %c0_175 = arith.constant 0 : index
    %254 = vector.load %arg2[%c0_173, %c23, %c0_174, %c0_175] : memref<1x25x64x6xf32, #tpu.memory_space<vmem>>, vector<1x1x64x6xf32>
    %255 = vector.shape_cast %254 : vector<1x1x64x6xf32> to vector<64x6xf32>
    %cst_176 = arith.constant dense<0.000000e+00> : vector<64x256xf32>
    %256 = tpu.matmul %255, %253, %cst_176 {dimension_numbers = #tpu.dot_dimension_numbers<[1], [0], [0], [1], [0, 0, 1, 1], [], []>} : vector<64x6xf32>, vector<6x256xf32>, vector<64x256xf32> -> vector<64x256xf32>
    %257 = arith.addf %247, %256 : vector<64x256xf32>
    %c0_177 = arith.constant 0 : index
    %c0_178 = arith.constant 0 : index
    %c68 = arith.constant 68 : index
    %258 = vector.load %arg1[%c0_177, %c0_178, %c68] : memref<1x6x324xf32, #tpu.memory_space<vmem>>, vector<1x6x256xf32>
    %259 = vector.shape_cast %258 : vector<1x6x256xf32> to vector<6x256xf32>
    %cst_179 = arith.constant 0.000000e+00 : f32
    %260 = vector.shape_cast %36 : vector<1x256xi1> to vector<1x256xi1>
    %261 = vector.broadcast %260 : vector<1x256xi1> to vector<6x256xi1>
    %262 = vector.broadcast %cst_179 : f32 to vector<6x256xf32>
    %263 = arith.select %261, %259, %262 : vector<6x256xi1>, vector<6x256xf32>
    %c0_180 = arith.constant 0 : index
    %c24 = arith.constant 24 : index
    %c0_181 = arith.constant 0 : index
    %c0_182 = arith.constant 0 : index
    %264 = vector.load %arg2[%c0_180, %c24, %c0_181, %c0_182] : memref<1x25x64x6xf32, #tpu.memory_space<vmem>>, vector<1x1x64x6xf32>
    %265 = vector.shape_cast %264 : vector<1x1x64x6xf32> to vector<64x6xf32>
    %cst_183 = arith.constant dense<0.000000e+00> : vector<64x256xf32>
    %266 = tpu.matmul %265, %263, %cst_183 {dimension_numbers = #tpu.dot_dimension_numbers<[1], [0], [0], [1], [0, 0, 1, 1], [], []>} : vector<64x6xf32>, vector<6x256xf32>, vector<64x256xf32> -> vector<64x256xf32>
    %267 = arith.addf %257, %266 : vector<64x256xf32>
    %c0_184 = arith.constant 0 : index
    %c0_185 = arith.constant 0 : index
    %c0_186 = arith.constant 0 : index
    %268 = vector.load %arg3[%c0_184, %c0_185, %c0_186] : memref<1x64x1xf32, #tpu.memory_space<vmem>>, vector<1x64x1xf32>
    %269 = vector.shape_cast %268 : vector<1x64x1xf32> to vector<64x1xf32>
    %270 = vector.broadcast %269 : vector<64x1xf32> to vector<64x256xf32>
    %271 = arith.addf %267, %270 : vector<64x256xf32>
    %c0_187 = arith.constant 0 : index
    %c0_188 = arith.constant 0 : index
    %c0_189 = arith.constant 0 : index
    %272 = vector.load %arg4[%c0_187, %c0_188, %c0_189] : memref<1x64x256xf32, #tpu.memory_space<vmem>>, vector<1x64x256xf32>
    %273 = vector.shape_cast %272 : vector<1x64x256xf32> to vector<64x256xf32>
    %274 = vector.shape_cast %271 : vector<64x256xf32> to vector<1x64x256xf32>
    tpu.vector_store %arg4[%c0_187, %c0_188, %c0_189], %274 {strides = array<i32>} : memref<1x64x256xf32, #tpu.memory_space<vmem>>, vector<1x64x256xf32>,
    return
  }
  func.func @transform_0(%arg0: i32) -> (i32, i32, i32) {
    %c0_i32 = arith.constant 0 : i32
    %c0_i32_0 = arith.constant 0 : i32
    %c0_i32_1 = arith.constant 0 : i32
    return %arg0, %c0_i32, %c0_i32_0 : i32, i32, i32
  }
  func.func @transform_1(%arg0: i32) -> (i32, i32, i32, i32) {
    %c0_i32 = arith.constant 0 : i32
    %c0_i32_0 = arith.constant 0 : i32
    %c0_i32_1 = arith.constant 0 : i32
    %c0_i32_2 = arith.constant 0 : i32
    return %arg0, %c0_i32, %c0_i32_0, %c0_i32_1 : i32, i32, i32, i32
  }
  func.func @transform_2(%arg0: i32) -> (i32, i32, i32) {
    %c0_i32 = arith.constant 0 : i32
    %c0_i32_0 = arith.constant 0 : i32
    %c0_i32_1 = arith.constant 0 : i32
    return %arg0, %c0_i32, %c0_i32_0 : i32, i32, i32
  }
  func.func @transform_3(%arg0: i32) -> (i32, i32, i32) {
    %c0_i32 = arith.constant 0 : i32
    %c0_i32_0 = arith.constant 0 : i32
    %c0_i32_1 = arith.constant 0 : i32
    return %arg0, %c0_i32, %c0_i32_0 : i32, i32, i32
  }
}

</mosaic_0001>

<llo_original>
// kernel: vff_forward.1
$region0: #{vff_forward.1}
  #allocation0 [shape = 'u32[]', space=smem, size = 0x4, offset = 0x4, fixed_abs, tag = 'smem constant byte address 0x4 - core index']
  #allocation1 [shape = 'u32[144,128]{1,0:T(1,128)}', space=vmem, size = 0x12000, scoped, tag = 'internal scratch']
  %s0 = inlined_call_operand.vmem [shape: f32[2,6,324], index: 0, kind: input, shape index: {}]
  %s1 = inlined_call_operand.vmem [shape: f32[2,25,64,6], index: 1, kind: input, shape index: {}]
  %s2 = inlined_call_operand.vmem [shape: f32[2,64,1], index: 2, kind: input, shape index: {}]
  %s3 = inlined_call_operand.vmem [shape: f32[2,64,256], index: 3, kind: output, shape index: {}]
  %s4 = sld [smem:[#allocation0]]
  $region45: #{vff_forward.1} parent=0
    _
  %s6 = ssub.s32 1, %s4
  %s7 = scalar_select 0, %s6, %s4
  loop: start=0, step=1, limit=4
  $region2: #{vff_forward.1} parent=0 // loop_pre_header
    _
  $region3: #{vff_forward.1} parent=0 // loop_header
    %s9 = sphi 0, %s13
    %p10 = scmp.ge.s32.totalorder %s9, 4
    %s19 = sphi 0, %s21
    %s22 = sphi 0, %s19
    %s23 = sphi 0, %s22
    %s39 = sphi 0, %s23
    %s45 = sphi 0, %s47
    %s48 = sphi 0, %s45
    %s49 = sphi 0, %s48
    %s65 = sphi 0, %s49
    %s71 = sphi 0, %s73
    %s74 = sphi 0, %s71
    %s75 = sphi 0, %s74
    %s91 = sphi 0, %s75
    %s97 = sphi 0, %s99
    %s100 = sphi 0, %s97
    %s101 = sphi 0, %s100
    %s117 = sphi 0, %s101
  $region4: #{vff_forward.1} parent=0 // loop_header_branch
    %12 = sbr.rel (%p10) target = $region8
  $region5: #{vff_forward.1} parent=0 // loop_body
    %s14 = ssub.s32 %s9, 1
    %s15 = ssub.s32 %s9, 2
    %s16 = sadd.s32 %s9, 1
    %s17 = ssub.s32 %s9, %s16
    %p18 = scmp.eq.s32.totalorder %s17, 0
    %s20 = sadd.s32 %s19, 1
    %s21 = scalar_select %p18, %s19, %s20
    %p24 = pneg %p18
    %p25 = scmp.eq.s32.totalorder %s9, 1
    %p26 = por %p24, %p25
    %p27 = scmp.ne.s32.totalorder %s19, %s22
    %p28 = scmp.eq.s32.totalorder %s9, 0
    %p29 = por %p27, %p28
    %p30 = scmp.ne.s32.totalorder %s19, %s22
    %p31 = scmp.eq.s32.totalorder %s14, 1
    %p32 = por %p30, %p31
    %p33 = scmp.ne.s32.totalorder %s22, %s23
    %p34 = scmp.eq.s32.totalorder %s14, 0
    %p35 = por %p33, %p34
    %p36 = scmp.ne.s32.totalorder %s22, %s23
    %p37 = scmp.eq.s32.totalorder %s15, 1
    %p38 = por %p36, %p37
    %p40 = scmp.ne.s32.totalorder %s23, %s39
    %p41 = scmp.eq.s32.totalorder %s15, 0
    %p42 = por %p40, %p41
    %s43 = ssub.s32 %s9, %s16
    %p44 = scmp.eq.s32.totalorder %s43, 0
    %s46 = sadd.s32 %s45, 1
    %s47 = scalar_select %p44, %s45, %s46
    %p50 = pneg %p44
    %p51 = scmp.eq.s32.totalorder %s9, 1
    %p52 = por %p50, %p51
    %p53 = scmp.ne.s32.totalorder %s45, %s48
    %p54 = scmp.eq.s32.totalorder %s9, 0
    %p55 = por %p53, %p54
    %p56 = scmp.ne.s32.totalorder %s45, %s48
    %p57 = scmp.eq.s32.totalorder %s14, 1
    %p58 = por %p56, %p57
    %p59 = scmp.ne.s32.totalorder %s48, %s49
    %p60 = scmp.eq.s32.totalorder %s14, 0
    %p61 = por %p59, %p60
    %p62 = scmp.ne.s32.totalorder %s48, %s49
    %p63 = scmp.eq.s32.totalorder %s15, 1
    %p64 = por %p62, %p63
    %p66 = scmp.ne.s32.totalorder %s49, %s65
    %p67 = scmp.eq.s32.totalorder %s15, 0
    %p68 = por %p66, %p67
    %s69 = ssub.s32 %s9, %s16
    %p70 = scmp.eq.s32.totalorder %s69, 0
    %s72 = sadd.s32 %s71, 1
    %s73 = scalar_select %p70, %s71, %s72
    %p76 = pneg %p70
    %p77 = scmp.eq.s32.totalorder %s9, 1
    %p78 = por %p76, %p77
    %p79 = scmp.ne.s32.totalorder %s71, %s74
    %p80 = scmp.eq.s32.totalorder %s9, 0
    %p81 = por %p79, %p80
    %p82 = scmp.ne.s32.totalorder %s71, %s74
    %p83 = scmp.eq.s32.totalorder %s14, 1
    %p84 = por %p82, %p83
    %p85 = scmp.ne.s32.totalorder %s74, %s75
    %p86 = scmp.eq.s32.totalorder %s14, 0
    %p87 = por %p85, %p86
    %p88 = scmp.ne.s32.totalorder %s74, %s75
    %p89 = scmp.eq.s32.totalorder %s15, 1
    %p90 = por %p88, %p89
    %p92 = scmp.ne.s32.totalorder %s75, %s91
    %p93 = scmp.eq.s32.totalorder %s15, 0
    %p94 = por %p92, %p93
    %s95 = ssub.s32 %s9, %s16
    %p96 = scmp.eq.s32.totalorder %s95, 0
    %s98 = sadd.s32 %s97, 1
    %s99 = scalar_select %p96, %s97, %s98
    %p102 = pneg %p96
    %p103 = scmp.eq.s32.totalorder %s9, 1
    %p104 = por %p102, %p103
    %p105 = scmp.ne.s32.totalorder %s97, %s100
    %p106 = scmp.eq.s32.totalorder %s9, 0
    %p107 = por %p105, %p106
    %p108 = scmp.ne.s32.totalorder %s97, %s100
    %p109 = scmp.eq.s32.totalorder %s14, 1
    %p110 = por %p108, %p109
    %p111 = scmp.ne.s32.totalorder %s100, %s101
    %p112 = scmp.eq.s32.totalorder %s14, 0
    %p113 = por %p111, %p112
    %p114 = scmp.ne.s32.totalorder %s100, %s101
    %p115 = scmp.eq.s32.totalorder %s15, 1
    %p116 = por %p114, %p115
    %p118 = scmp.ne.s32.totalorder %s101, %s117
    %p119 = scmp.eq.s32.totalorder %s15, 0
    %p120 = por %p118, %p119
    %p121 = scmp.le.s32.totalorder 1, %s9
    %p122 = scmp.lt.s32.totalorder %s9, 3
    %p123 = pnand %p121, %p122
    %p124 = pneg %p123
    // Predicated region
    $region9: #{vff_forward.1} parent=5 // pred_check
      _
    $region10: #{vff_forward.1} parent=5 // pred_check_branch
      %126 = sbr.rel (%p123) target = $region12
    $region11: #{vff_forward.1} parent=5 // pred_region
      %s127 = ssub.s32 %s9, 1
    $region12: #{vff_forward.1} parent=5 // pred_fallthru
      _
    %p128 = scmp.lt.s32.totalorder %s9, 2
    // Predicated region
    $region13: #{vff_forward.1} parent=5 // pred_check
      %p129 = pneg %p128
    $region14: #{vff_forward.1} parent=5 // pred_check_branch
      %131 = sbr.rel (%p129) target = $region16
    $region15: #{vff_forward.1} parent=5 // pred_region
      // Predicated region
      $region17: #{vff_forward.1} parent=15 // pred_check
        %p132 = pneg %p29
      $region18: #{vff_forward.1} parent=15 // pred_check_branch
        %134 = sbr.rel (%p132) target = $region20
      $region19: #{vff_forward.1} parent=15 // pred_region
        %p135 = scmp.lt.s32.totalorder %s9, 1
        %s136 = scalar_select %p135, %s9, 1
        %s137 = smul.addr %s136, 3
        %s138 = smul.addr %s137, 8
        %s139 = scalar_lea.vmem %s0, %s138
      $region20: #{vff_forward.1} parent=15 // pred_fallthru
        _
      // Predicated region
      $region21: #{vff_forward.1} parent=15 // pred_check
        %p140 = pneg %p55
      $region22: #{vff_forward.1} parent=15 // pred_check_branch
        %142 = sbr.rel (%p140) target = $region24
      $region23: #{vff_forward.1} parent=15 // pred_region
        %p143 = scmp.lt.s32.totalorder %s9, 1
        %s144 = scalar_select %p143, %s9, 1
        %s145 = smul.addr %s144, 200
        %s146 = smul.addr %s145, 8
        %s147 = scalar_lea.vmem %s1, %s146
      $region24: #{vff_forward.1} parent=15 // pred_fallthru
        _
      // Predicated region
      $region25: #{vff_forward.1} parent=15 // pred_check
        %p148 = pneg %p81
      $region26: #{vff_forward.1} parent=15 // pred_check_branch
        %150 = sbr.rel (%p148) target = $region28
      $region27: #{vff_forward.1} parent=15 // pred_region
        %p151 = scmp.lt.s32.totalorder %s9, 1
        %s152 = scalar_select %p151, %s9, 1
        %s153 = smul.addr %s152, 8
        %s154 = smul.addr %s153, 8
        %s155 = scalar_lea.vmem %s2, %s154
      $region28: #{vff_forward.1} parent=15 // pred_fallthru
        _
    $region16: #{vff_forward.1} parent=5 // pred_fallthru
      _
    %p156 = scmp.le.s32.totalorder 1, %s9
    %p157 = scmp.lt.s32.totalorder %s9, 3
    %p158 = pnand %p156, %p157
    %p159 = pneg %p158
    // Predicated region
    $region29: #{vff_forward.1} parent=5 // pred_check
      _
    $region30: #{vff_forward.1} parent=5 // pred_check_branch
      %161 = sbr.rel (%p158) target = $region32
    $region31: #{vff_forward.1} parent=5 // pred_region
      %s162 = ssub.s32 %s9, 1
      %p163 = scmp.lt.s32.totalorder %s14, 1
      %s164 = scalar_select %p163, %s14, 1
      %s165 = smul.addr %s164, 3
      %s166 = smul.addr %s165, 8
      %s167 = scalar_lea.vmem %s0, %s166
      %p168 = pneg %p35
      %p169 = pneg %p32
      %p170 = scmp.lt.s32.totalorder %s14, 1
      %s171 = scalar_select %p170, %s14, 1
      %s172 = smul.addr %s171, 200
      %s173 = smul.addr %s172, 8
      %s174 = scalar_lea.vmem %s1, %s173
      %p175 = pneg %p61
      %p176 = pneg %p58
      %p177 = scmp.lt.s32.totalorder %s14, 1
      %s178 = scalar_select %p177, %s14, 1
      %s179 = smul.addr %s178, 8
      %s180 = smul.addr %s179, 8
      %s181 = scalar_lea.vmem %s2, %s180
      %p182 = pneg %p87
      %p183 = pneg %p84
      %p184 = pneg %p113
      %p185 = pneg %p110
      %p186 = scmp.lt.s32.totalorder %s14, 1
      %s187 = scalar_select %p186, %s14, 1
      %s188 = smul.addr %s187, 16
      %s189 = smul.addr %s188, 8
      %s190 = scalar_lea.vmem %s3, %s189
      %p191 = scmp.lt.s32.totalorder %s14, 1
      %s192 = scalar_select %p191, %s14, 1
      %s193 = smul.addr %s192, 3
      %s194 = smul.addr %s193, 8
      %s195 = scalar_lea.vmem %s0, %s194
      %p196 = scmp.lt.s32.totalorder %s14, 1
      %s197 = scalar_select %p196, %s14, 1
      %s198 = smul.addr %s197, 200
      %s199 = smul.addr %s198, 8
      %s200 = scalar_lea.vmem %s1, %s199
      %p201 = scmp.lt.s32.totalorder %s14, 1
      %s202 = scalar_select %p201, %s14, 1
      %s203 = smul.addr %s202, 8
      %s204 = smul.addr %s203, 8
      %s205 = scalar_lea.vmem %s2, %s204
      %p206 = scmp.lt.s32.totalorder %s14, 1
      %s207 = scalar_select %p206, %s14, 1
      %s208 = smul.addr %s207, 16
      %s209 = smul.addr %s208, 8
      %s210 = scalar_lea.vmem %s3, %s209
      %v211 = vlaneseq
      %v212 = vand.u32 %v211, 127
      %v213 = vadd.s32 %v212, 128
      %vm214 = vcmp.lt.s32.totalorder %v212, 0
      %v215 = vsub.s32 0, %v212
      %v216 = vsel %vm214, %v215, %v212
      %v217 = vshrl.u32 %v216, 4
      %v218 = vand.u32 %v216, 15
      %v219 = vsub.s32 0, %v218
      %v220 = vsel %vm214, %v219, %v218
      %vm221 = vcmp.lt.s32.totalorder %v213, 0
      %v222 = vsub.s32 0, %v213
      %v223 = vsel %vm221, %v222, %v213
      %v224 = vshrl.u32 %v223, 4
      %v225 = vand.u32 %v223, 15
      %v226 = vsub.s32 0, %v225
      %v227 = vsel %vm221, %v226, %v225
      %vm228 = vcmp.ne.s32.totalorder %v220, 0
      %vm229 = vcmp.ne.s32.totalorder %v227, 0
      %vm230 = vcmp.lt.s32.totalorder %v220, 0
      %vm231 = vcmp.lt.s32.totalorder %v227, 0
      %vm232 = vmand %vm230, %vm228
      %vm233 = vmand %vm231, %vm229
      %v234 = vadd.s32 %v220, 16
      %v235 = vadd.s32 %v227, 16
      %v236 = vsel %vm232, %v234, %v220
      %v237 = vsel %vm233, %v235, %v227
      %vm238 = vcmp.ge.s32.totalorder %v236, 2
      %vm239 = vcmp.ge.s32.totalorder %v237, 2
      %vm240 = vcmp.lt.s32.totalorder %v236, 18
      %vm241 = vcmp.lt.s32.totalorder %v237, 18
      %vm242 = vmand %vm238, %vm240
      %vm243 = vmand %vm239, %vm241
      %vm244 = vcmp.ge.s32.totalorder %v236, 1
      %vm245 = vcmp.ge.s32.totalorder %v237, 1
      %vm246 = vcmp.lt.s32.totalorder %v236, 17
      %vm247 = vcmp.lt.s32.totalorder %v237, 17
      %vm248 = vmand %vm244, %vm246
      %vm249 = vmand %vm245, %vm247
      %vm250 = vcmp.ge.s32.totalorder %v236, 4294967295
      %vm251 = vcmp.ge.s32.totalorder %v237, 4294967295
      %vm252 = vcmp.lt.s32.totalorder %v236, 15
      %vm253 = vcmp.lt.s32.totalorder %v237, 15
      %vm254 = vmand %vm250, %vm252
      %vm255 = vmand %vm251, %vm253
      %vm256 = vcmp.ge.s32.totalorder %v236, 4294967294
      %vm257 = vcmp.ge.s32.totalorder %v237, 4294967294
      %vm258 = vcmp.lt.s32.totalorder %v236, 14
      %vm259 = vcmp.lt.s32.totalorder %v237, 14
      %vm260 = vmand %vm256, %vm258
      %vm261 = vmand %vm257, %vm259
      %v262 = vld [vmem:[%s195] sm:$0x3f]
      %v263 = vld [vmem:[%s195 + $0x8] sm:$0x3f]
      %v264 = vsel %vm242, 1, 0
      %v265 = vsel %vm243, 1, 0
      %vm266 = vcmp.eq.s32.totalorder %v264, 1
      %vm267 = vcmp.eq.s32.totalorder %v265, 1
      %v268 = vsel %vm266, %v262, 0.0
      %v269 = vsel %vm267, %v263, 0.0
      %v270 = vld [vmem:[%s200] sm:$0xff]
      %v271 = vld [vmem:[%s200 + $0x8] sm:$0xff]
      %v272 = vld [vmem:[%s200 + $0x10] sm:$0xff]
      %v273 = vld [vmem:[%s200 + $0x18] sm:$0xff]
      %v274 = vld [vmem:[%s200 + $0x20] sm:$0xff]
      %v275 = vld [vmem:[%s200 + $0x28] sm:$0xff]
      %v276 = vld [vmem:[%s200 + $0x30] sm:$0xff]
      %v277 = vld [vmem:[%s200 + $0x38] sm:$0xff]
      %v278 = vld [vmem:[%s195 + $0x10] sm:$0x3f]
      %v279 = vsel %vm248, 1, 0
      %v280 = vsel %vm249, 1, 0
      %vm281 = vcmp.eq.s32.totalorder %v279, 1
      %vm282 = vcmp.eq.s32.totalorder %v280, 1
      %286 = vrot.lane.b32.xlu0 %v262, 127
      %v287 = vpop.permute.xlu0 %286
      %288 = vrot.lane.b32.xlu0 %v263, 127
      %v289 = vpop.permute.xlu0 %288
      %290 = vrot.lane.b32.xlu0 %v278, 127
      %v291 = vpop.permute.xlu0 %290
      %vm292 = vcmask 1039360
      %v293 = vsel %vm292, %v287, %v289
      %v294 = vsel %vm292, %v289, %v291
      %v297 = vsel %vm281, %v293, 0.0
      %v298 = vsel %vm282, %v294, 0.0
      %s299 = scalar_lea.vmem %s200, 64
      %v300 = vld [vmem:[%s299] sm:$0xff]
      %v301 = vld [vmem:[%s299 + $0x8] sm:$0xff]
      %v302 = vld [vmem:[%s299 + $0x10] sm:$0xff]
      %v303 = vld [vmem:[%s299 + $0x18] sm:$0xff]
      %v304 = vld [vmem:[%s299 + $0x20] sm:$0xff]
      %v305 = vld [vmem:[%s299 + $0x28] sm:$0xff]
      %v306 = vld [vmem:[%s299 + $0x30] sm:$0xff]
      %v307 = vld [vmem:[%s299 + $0x38] sm:$0xff]
      %vm308 = vcmask 48128
      %v310 = vsel %vm308, %v300, 0
      %v313 = vsel %vm308, %v301, 0
      %v316 = vsel %vm308, %v302, 0
      %v319 = vsel %vm308, %v303, 0
      %v322 = vsel %vm308, %v304, 0
      %v325 = vsel %vm308, %v305, 0
      %v328 = vsel %vm308, %v306, 0
      %v331 = vsel %vm308, %v307, 0
      %vm333 = vcmask 1045504
      %v335 = vsel %vm333, %v297, 0
      %v338 = vsel %vm333, %v298, 0
      %340 = vmatprep.subr.mxu0 0.0
      %341 = vmatpush1.msra.mxu0 0.0
      %342 = vmatprep.subr.mxu0 0.0
      %343 = vmatpush1.msra.mxu0 0.0
      %344 = vmatprep.subr.mxu0 0.0
      %345 = vmatpush1.msra.mxu0 0.0
      %346 = vmatprep.subr.mxu0 0.0
      %347 = vmatpush1.msra.mxu0 0.0
      %348 = vmatprep.subr.mxu0 0.0
      %349 = vmatpush1.msra.mxu0 0.0
      %350 = vmatprep.subr.mxu0 0.0
      %351 = vmatpush1.msra.mxu0 0.0
      %352 = vmatprep.subr.mxu0 0.0
      %353 = vmatpush1.msra.mxu0 0.0
      %354 = vmatprep.subr.mxu0 0.0
      %355 = vmatpush1.msra.mxu0 0.0
      %356 = vmatprep.subr.mxu0 0.0
      %357 = vmatpush1.msra.mxu0 0.0
      %358 = vmatprep.subr.mxu0 0.0
      %359 = vmatpush1.msra.mxu0 0.0
      %360 = vmatprep.subr.mxu0 0.0
      %361 = vmatpush1.msra.mxu0 0.0
      %362 = vmatprep.subr.mxu0 0.0
      %363 = vmatpush1.msra.mxu0 0.0
      %364 = vmatprep.subr.mxu0 0.0
      %365 = vmatpush1.msra.mxu0 0.0
      %366 = vmatprep.subr.mxu0 0.0
      %367 = vmatpush1.msra.mxu0 0.0
      %368 = vmatprep.subr.mxu0 0.0
      %369 = vmatpush1.msra.mxu0 0.0
      %370 = vmatprep.subr.mxu0 %v338
      %371 = vmatpush1.msra.mxu0 %v335
      %372 = vmatprep.subr.mxu0 0.0
      %373 = vmatpush2.msra.mxu0 0.0
      %374 = vmatprep.subr.mxu0 0.0
      %375 = vmatpush2.msra.mxu0 0.0
      %376 = vmatprep.subr.mxu0 0.0
      %377 = vmatpush2.msra.mxu0 0.0
      %378 = vmatprep.subr.mxu0 0.0
      %379 = vmatpush2.msra.mxu0 0.0
      %380 = vmatprep.subr.mxu0 0.0
      %381 = vmatpush2.msra.mxu0 0.0
      %382 = vmatprep.subr.mxu0 0.0
      %383 = vmatpush2.msra.mxu0 0.0
      %384 = vmatprep.subr.mxu0 0.0
      %385 = vmatpush2.msra.mxu0 0.0
      %386 = vmatprep.subr.mxu0 0.0
      %387 = vmatpush2.msra.mxu0 0.0
      %388 = vmatprep.subr.mxu0 0.0
      %389 = vmatpush2.msra.mxu0 0.0
      %390 = vmatprep.subr.mxu0 0.0
      %391 = vmatpush2.msra.mxu0 0.0
      %392 = vmatprep.subr.mxu0 0.0
      %393 = vmatpush2.msra.mxu0 0.0
      %394 = vmatprep.subr.mxu0 0.0
      %395 = vmatpush2.msra.mxu0 0.0
      %396 = vmatprep.subr.mxu0 0.0
      %397 = vmatpush2.msra.mxu0 0.0
      %398 = vmatprep.subr.mxu0 0.0
      %399 = vmatpush2.msra.mxu0 0.0
      %400 = vmatprep.subr.mxu0 0.0
      %401 = vmatpush2.msra.mxu0 0.0
      %402 = vmatprep.subr.mxu0 0.0
      %403 = vmatpush2.msra.mxu0 0.0
      %404 = vmatprep.mubr.f32.mxu0 0.0
      %405 = vmatmul.mubr.f32.gmra.mxu0 %v310
      %v406 = vpop.f32.mrf.mxu0
      %v407 = vadd.f32 0.0, %v406
      %v408 = vpop.f32.mrf.mxu0
      %v409 = vadd.f32 0.0, %v408
      %410 = vmatprep.mubr.f32.mxu0 0.0
      %411 = vmatmul.mubr.f32.gmra.mxu0 %v313
      %v412 = vpop.f32.mrf.mxu0
      %v413 = vadd.f32 0.0, %v412
      %v414 = vpop.f32.mrf.mxu0
      %v415 = vadd.f32 0.0, %v414
      %416 = vmatprep.mubr.f32.mxu0 0.0
      %417 = vmatmul.mubr.f32.gmra.mxu0 %v316
      %v418 = vpop.f32.mrf.mxu0
      %v419 = vadd.f32 0.0, %v418
      %v420 = vpop.f32.mrf.mxu0
      %v421 = vadd.f32 0.0, %v420
      %422 = vmatprep.mubr.f32.mxu0 0.0
      %423 = vmatmul.mubr.f32.gmra.mxu0 %v319
      %v424 = vpop.f32.mrf.mxu0
      %v425 = vadd.f32 0.0, %v424
      %v426 = vpop.f32.mrf.mxu0
      %v427 = vadd.f32 0.0, %v426
      %428 = vmatprep.mubr.f32.mxu0 0.0
      %429 = vmatmul.mubr.f32.gmra.mxu0 %v322
      %v430 = vpop.f32.mrf.mxu0
      %v431 = vadd.f32 0.0, %v430
      %v432 = vpop.f32.mrf.mxu0
      %v433 = vadd.f32 0.0, %v432
      %434 = vmatprep.mubr.f32.mxu0 0.0
      %435 = vmatmul.mubr.f32.gmra.mxu0 %v325
      %v436 = vpop.f32.mrf.mxu0
      %v437 = vadd.f32 0.0, %v436
      %v438 = vpop.f32.mrf.mxu0
      %v439 = vadd.f32 0.0, %v438
      %440 = vmatprep.mubr.f32.mxu0 0.0
      %441 = vmatmul.mubr.f32.gmra.mxu0 %v328
      %v442 = vpop.f32.mrf.mxu0
      %v443 = vadd.f32 0.0, %v442
      %v444 = vpop.f32.mrf.mxu0
      %v445 = vadd.f32 0.0, %v444
      %446 = vmatprep.mubr.f32.mxu0 0.0
      %447 = vmatmul.mubr.f32.gmra.mxu0 %v331
      %v448 = vpop.f32.mrf.mxu0
      %v449 = vadd.f32 0.0, %v448
      %v450 = vpop.f32.mrf.mxu0
      %v451 = vadd.f32 0.0, %v450
      %452 = vdwg.mxu0
      %v454 = vsel %vm308, %v270, 0
      %v457 = vsel %vm308, %v271, 0
      %v460 = vsel %vm308, %v272, 0
      %v463 = vsel %vm308, %v273, 0
      %v466 = vsel %vm308, %v274, 0
      %v469 = vsel %vm308, %v275, 0
      %v472 = vsel %vm308, %v276, 0
      %v475 = vsel %vm308, %v277, 0
      %v478 = vsel %vm333, %v268, 0
      %v481 = vsel %vm333, %v269, 0
      %483 = vmatprep.subr.mxu0 0.0
      %484 = vmatpush1.msra.mxu0 0.0
      %485 = vmatprep.subr.mxu0 0.0
      %486 = vmatpush1.msra.mxu0 0.0
      %487 = vmatprep.subr.mxu0 0.0
      %488 = vmatpush1.msra.mxu0 0.0
      %489 = vmatprep.subr.mxu0 0.0
      %490 = vmatpush1.msra.mxu0 0.0
      %491 = vmatprep.subr.mxu0 0.0
      %492 = vmatpush1.msra.mxu0 0.0
      %493 = vmatprep.subr.mxu0 0.0
      %494 = vmatpush1.msra.mxu0 0.0
      %495 = vmatprep.subr.mxu0 0.0
      %496 = vmatpush1.msra.mxu0 0.0
      %497 = vmatprep.subr.mxu0 0.0
      %498 = vmatpush1.msra.mxu0 0.0
      %499 = vmatprep.subr.mxu0 0.0
      %500 = vmatpush1.msra.mxu0 0.0
      %501 = vmatprep.subr.mxu0 0.0
      %502 = vmatpush1.msra.mxu0 0.0
      %503 = vmatprep.subr.mxu0 0.0
      %504 = vmatpush1.msra.mxu0 0.0
      %505 = vmatprep.subr.mxu0 0.0
      %506 = vmatpush1.msra.mxu0 0.0
      %507 = vmatprep.subr.mxu0 0.0
      %508 = vmatpush1.msra.mxu0 0.0
      %509 = vmatprep.subr.mxu0 0.0
      %510 = vmatpush1.msra.mxu0 0.0
      %511 = vmatprep.subr.mxu0 0.0
      %512 = vmatpush1.msra.mxu0 0.0
      %513 = vmatprep.subr.mxu0 %v481
      %514 = vmatpush1.msra.mxu0 %v478
      %515 = vmatprep.subr.mxu0 0.0
      %516 = vmatpush2.msra.mxu0 0.0
      %517 = vmatprep.subr.mxu0 0.0
      %518 = vmatpush2.msra.mxu0 0.0
      %519 = vmatprep.subr.mxu0 0.0
      %520 = vmatpush2.msra.mxu0 0.0
      %521 = vmatprep.subr.mxu0 0.0
      %522 = vmatpush2.msra.mxu0 0.0
      %523 = vmatprep.subr.mxu0 0.0
      %524 = vmatpush2.msra.mxu0 0.0
      %525 = vmatprep.subr.mxu0 0.0
      %526 = vmatpush2.msra.mxu0 0.0
      %527 = vmatprep.subr.mxu0 0.0
      %528 = vmatpush2.msra.mxu0 0.0
      %529 = vmatprep.subr.mxu0 0.0
      %530 = vmatpush2.msra.mxu0 0.0
      %531 = vmatprep.subr.mxu0 0.0
      %532 = vmatpush2.msra.mxu0 0.0
      %533 = vmatprep.subr.mxu0 0.0
      %534 = vmatpush2.msra.mxu0 0.0
      %535 = vmatprep.subr.mxu0 0.0
      %536 = vmatpush2.msra.mxu0 0.0
      %537 = vmatprep.subr.mxu0 0.0
      %538 = vmatpush2.msra.mxu0 0.0
      %539 = vmatprep.subr.mxu0 0.0
      %540 = vmatpush2.msra.mxu0 0.0
      %541 = vmatprep.subr.mxu0 0.0
      %542 = vmatpush2.msra.mxu0 0.0
      %543 = vmatprep.subr.mxu0 0.0
      %544 = vmatpush2.msra.mxu0 0.0
      %545 = vmatprep.subr.mxu0 0.0
      %546 = vmatpush2.msra.mxu0 0.0
      %547 = vmatprep.mubr.f32.mxu0 0.0
      %548 = vmatmul.mubr.f32.gmra.mxu0 %v454
      %v549 = vpop.f32.mrf.mxu0
      %v550 = vadd.f32 %v407, %v549
      %v551 = vpop.f32.mrf.mxu0
      %v552 = vadd.f32 %v409, %v551
      %553 = vmatprep.mubr.f32.mxu0 0.0
      %554 = vmatmul.mubr.f32.gmra.mxu0 %v457
      %v555 = vpop.f32.mrf.mxu0
      %v556 = vadd.f32 %v413, %v555
      %v557 = vpop.f32.mrf.mxu0
      %v558 = vadd.f32 %v415, %v557
      %559 = vmatprep.mubr.f32.mxu0 0.0
      %560 = vmatmul.mubr.f32.gmra.mxu0 %v460
      %v561 = vpop.f32.mrf.mxu0
      %v562 = vadd.f32 %v419, %v561
      %v563 = vpop.f32.mrf.mxu0
      %v564 = vadd.f32 %v421, %v563
      %565 = vmatprep.mubr.f32.mxu0 0.0
      %566 = vmatmul.mubr.f32.gmra.mxu0 %v463
      %v567 = vpop.f32.mrf.mxu0
      %v568 = vadd.f32 %v425, %v567
      %v569 = vpop.f32.mrf.mxu0
      %v570 = vadd.f32 %v427, %v569
      %571 = vmatprep.mubr.f32.mxu0 0.0
      %572 = vmatmul.mubr.f32.gmra.mxu0 %v466
      %v573 = vpop.f32.mrf.mxu0
      %v574 = vadd.f32 %v431, %v573
      %v575 = vpop.f32.mrf.mxu0
      %v576 = vadd.f32 %v433, %v575
      %577 = vmatprep.mubr.f32.mxu0 0.0
      %578 = vmatmul.mubr.f32.gmra.mxu0 %v469
      %v579 = vpop.f32.mrf.mxu0
      %v580 = vadd.f32 %v437, %v579
      %v581 = vpop.f32.mrf.mxu0
      %v582 = vadd.f32 %v439, %v581
      %583 = vmatprep.mubr.f32.mxu0 0.0
      %584 = vmatmul.mubr.f32.gmra.mxu0 %v472
      %v585 = vpop.f32.mrf.mxu0
      %v586 = vadd.f32 %v443, %v585
      %v587 = vpop.f32.mrf.mxu0
      %v588 = vadd.f32 %v445, %v587
      %589 = vmatprep.mubr.f32.mxu0 0.0
      %590 = vmatmul.mubr.f32.gmra.mxu0 %v475
      %v591 = vpop.f32.mrf.mxu0
      %v592 = vadd.f32 %v449, %v591
      %v593 = vpop.f32.mrf.mxu0
      %v594 = vadd.f32 %v451, %v593
      %595 = vdwg.mxu0
      %s596 = scalar_lea.vmem %s200, 128
      %v597 = vld [vmem:[%s596] sm:$0xff]
      %v598 = vld [vmem:[%s596 + $0x8] sm:$0xff]
      %v599 = vld [vmem:[%s596 + $0x10] sm:$0xff]
      %v600 = vld [vmem:[%s596 + $0x18] sm:$0xff]
      %v601 = vld [vmem:[%s596 + $0x20] sm:$0xff]
      %v602 = vld [vmem:[%s596 + $0x28] sm:$0xff]
      %v603 = vld [vmem:[%s596 + $0x30] sm:$0xff]
      %v604 = vld [vmem:[%s596 + $0x38] sm:$0xff]
      %605 = vrot.lane.b32.xlu0 %v262, 126
      %v606 = vpop.permute.xlu0 %605
      %607 = vrot.lane.b32.xlu0 %v263, 126
      %v608 = vpop.permute.xlu0 %607
      %609 = vrot.lane.b32.xlu0 %v278, 126
      %v610 = vpop.permute.xlu0 %609
      %vm611 = vcmask 1031168
      %v612 = vsel %vm611, %v606, %v608
      %v613 = vsel %vm611, %v608, %v610
      %v615 = vsel %vm308, %v597, 0
      %v618 = vsel %vm308, %v598, 0
      %v621 = vsel %vm308, %v599, 0
      %v624 = vsel %vm308, %v600, 0
      %v627 = vsel %vm308, %v601, 0
      %v630 = vsel %vm308, %v602, 0
      %v633 = vsel %vm308, %v603, 0
      %v636 = vsel %vm308, %v604, 0
      %v638 = vsel %vm333, %v612, 0
      %v640 = vsel %vm333, %v613, 0
      %642 = vmatprep.subr.mxu0 0.0
      %643 = vmatpush1.msra.mxu0 0.0
      %644 = vmatprep.subr.mxu0 0.0
      %645 = vmatpush1.msra.mxu0 0.0
      %646 = vmatprep.subr.mxu0 0.0
      %647 = vmatpush1.msra.mxu0 0.0
      %648 = vmatprep.subr.mxu0 0.0
      %649 = vmatpush1.msra.mxu0 0.0
      %650 = vmatprep.subr.mxu0 0.0
      %651 = vmatpush1.msra.mxu0 0.0
      %652 = vmatprep.subr.mxu0 0.0
      %653 = vmatpush1.msra.mxu0 0.0
      %654 = vmatprep.subr.mxu0 0.0
      %655 = vmatpush1.msra.mxu0 0.0
      %656 = vmatprep.subr.mxu0 0.0
      %657 = vmatpush1.msra.mxu0 0.0
      %658 = vmatprep.subr.mxu0 0.0
      %659 = vmatpush1.msra.mxu0 0.0
      %660 = vmatprep.subr.mxu0 0.0
      %661 = vmatpush1.msra.mxu0 0.0
      %662 = vmatprep.subr.mxu0 0.0
      %663 = vmatpush1.msra.mxu0 0.0
      %664 = vmatprep.subr.mxu0 0.0
      %665 = vmatpush1.msra.mxu0 0.0
      %666 = vmatprep.subr.mxu0 0.0
      %667 = vmatpush1.msra.mxu0 0.0
      %668 = vmatprep.subr.mxu0 0.0
      %669 = vmatpush1.msra.mxu0 0.0
      %670 = vmatprep.subr.mxu0 0.0
      %671 = vmatpush1.msra.mxu0 0.0
      %672 = vmatprep.subr.mxu0 %v640
      %673 = vmatpush1.msra.mxu0 %v638
      %674 = vmatprep.subr.mxu0 0.0
      %675 = vmatpush2.msra.mxu0 0.0
      %676 = vmatprep.subr.mxu0 0.0
      %677 = vmatpush2.msra.mxu0 0.0
      %678 = vmatprep.subr.mxu0 0.0
      %679 = vmatpush2.msra.mxu0 0.0
      %680 = vmatprep.subr.mxu0 0.0
      %681 = vmatpush2.msra.mxu0 0.0
      %682 = vmatprep.subr.mxu0 0.0
      %683 = vmatpush2.msra.mxu0 0.0
      %684 = vmatprep.subr.mxu0 0.0
      %685 = vmatpush2.msra.mxu0 0.0
      %686 = vmatprep.subr.mxu0 0.0
      %687 = vmatpush2.msra.mxu0 0.0
      %688 = vmatprep.subr.mxu0 0.0
      %689 = vmatpush2.msra.mxu0 0.0
      %690 = vmatprep.subr.mxu0 0.0
      %691 = vmatpush2.msra.mxu0 0.0
      %692 = vmatprep.subr.mxu0 0.0
      %693 = vmatpush2.msra.mxu0 0.0
      %694 = vmatprep.subr.mxu0 0.0
      %695 = vmatpush2.msra.mxu0 0.0
      %696 = vmatprep.subr.mxu0 0.0
      %697 = vmatpush2.msra.mxu0 0.0
      %698 = vmatprep.subr.mxu0 0.0
      %699 = vmatpush2.msra.mxu0 0.0
      %700 = vmatprep.subr.mxu0 0.0
      %701 = vmatpush2.msra.mxu0 0.0
      %702 = vmatprep.subr.mxu0 0.0
      %703 = vmatpush2.msra.mxu0 0.0
      %704 = vmatprep.subr.mxu0 0.0
      %705 = vmatpush2.msra.mxu0 0.0
      %706 = vmatprep.mubr.f32.mxu0 0.0
      %707 = vmatmul.mubr.f32.gmra.mxu0 %v615
      %v708 = vpop.f32.mrf.mxu0
      %v709 = vadd.f32 0.0, %v708
      %v710 = vpop.f32.mrf.mxu0
      %v711 = vadd.f32 0.0, %v710
      %712 = vmatprep.mubr.f32.mxu0 0.0
      %713 = vmatmul.mubr.f32.gmra.mxu0 %v618
      %v714 = vpop.f32.mrf.mxu0
      %v715 = vadd.f32 0.0, %v714
      %v716 = vpop.f32.mrf.mxu0
      %v717 = vadd.f32 0.0, %v716
      %718 = vmatprep.mubr.f32.mxu0 0.0
      %719 = vmatmul.mubr.f32.gmra.mxu0 %v621
      %v720 = vpop.f32.mrf.mxu0
      %v721 = vadd.f32 0.0, %v720
      %v722 = vpop.f32.mrf.mxu0
      %v723 = vadd.f32 0.0, %v722
      %724 = vmatprep.mubr.f32.mxu0 0.0
      %725 = vmatmul.mubr.f32.gmra.mxu0 %v624
      %v726 = vpop.f32.mrf.mxu0
      %v727 = vadd.f32 0.0, %v726
      %v728 = vpop.f32.mrf.mxu0
      %v729 = vadd.f32 0.0, %v728
      %730 = vmatprep.mubr.f32.mxu0 0.0
      %731 = vmatmul.mubr.f32.gmra.mxu0 %v627
      %v732 = vpop.f32.mrf.mxu0
      %v733 = vadd.f32 0.0, %v732
      %v734 = vpop.f32.mrf.mxu0
      %v735 = vadd.f32 0.0, %v734
      %736 = vmatprep.mubr.f32.mxu0 0.0
      %737 = vmatmul.mubr.f32.gmra.mxu0 %v630
      %v738 = vpop.f32.mrf.mxu0
      %v739 = vadd.f32 0.0, %v738
      %v740 = vpop.f32.mrf.mxu0
      %v741 = vadd.f32 0.0, %v740
      %742 = vmatprep.mubr.f32.mxu0 0.0
      %743 = vmatmul.mubr.f32.gmra.mxu0 %v633
      %v744 = vpop.f32.mrf.mxu0
      %v745 = vadd.f32 0.0, %v744
      %v746 = vpop.f32.mrf.mxu0
      %v747 = vadd.f32 0.0, %v746
      %748 = vmatprep.mubr.f32.mxu0 0.0
      %749 = vmatmul.mubr.f32.gmra.mxu0 %v636
      %v750 = vpop.f32.mrf.mxu0
      %v751 = vadd.f32 0.0, %v750
      %v752 = vpop.f32.mrf.mxu0
      %v753 = vadd.f32 0.0, %v752
      %754 = vdwg.mxu0
      %v755 = vadd.f32 %v550, %v709
      %v756 = vadd.f32 %v552, %v711
      %v757 = vadd.f32 %v556, %v715
      %v758 = vadd.f32 %v558, %v717
      %v759 = vadd.f32 %v562, %v721
      %v760 = vadd.f32 %v564, %v723
      %v761 = vadd.f32 %v568, %v727
      %v762 = vadd.f32 %v570, %v729
      %v763 = vadd.f32 %v574, %v733
      %v764 = vadd.f32 %v576, %v735
      %v765 = vadd.f32 %v580, %v739
      %v766 = vadd.f32 %v582, %v741
      %v767 = vadd.f32 %v586, %v745
      %v768 = vadd.f32 %v588, %v747
      %v769 = vadd.f32 %v592, %v751
      %v770 = vadd.f32 %v594, %v753
      %v771 = vsel %vm254, 1, 0
      %v772 = vsel %vm255, 1, 0
      %vm773 = vcmp.eq.s32.totalorder %v771, 1
      %vm774 = vcmp.eq.s32.totalorder %v772, 1
      %775 = vrot.lane.b32.xlu0 %v262, 125
      %v776 = vpop.permute.xlu0 %775
      %777 = vrot.lane.b32.xlu0 %v263, 125
      %v778 = vpop.permute.xlu0 %777
      %779 = vrot.lane.b32.xlu0 %v278, 125
      %v780 = vpop.permute.xlu0 %779
      %vm781 = vcmask 1022976
      %v782 = vsel %vm781, %v776, %v778
      %v783 = vsel %vm781, %v778, %v780
      %v786 = vsel %vm773, %v782, 0.0
      %v787 = vsel %vm774, %v783, 0.0
      %s788 = scalar_lea.vmem %s200, 192
      %v789 = vld [vmem:[%s788] sm:$0xff]
      %v790 = vld [vmem:[%s788 + $0x8] sm:$0xff]
      %v791 = vld [vmem:[%s788 + $0x10] sm:$0xff]
      %v792 = vld [vmem:[%s788 + $0x18] sm:$0xff]
      %v793 = vld [vmem:[%s788 + $0x20] sm:$0xff]
      %v794 = vld [vmem:[%s788 + $0x28] sm:$0xff]
      %v795 = vld [vmem:[%s788 + $0x30] sm:$0xff]
      %v796 = vld [vmem:[%s788 + $0x38] sm:$0xff]
      %v798 = vsel %vm308, %v789, 0
      %v801 = vsel %vm308, %v790, 0
      %v804 = vsel %vm308, %v791, 0
      %v807 = vsel %vm308, %v792, 0
      %v810 = vsel %vm308, %v793, 0
      %v813 = vsel %vm308, %v794, 0
      %v816 = vsel %vm308, %v795, 0
      %v819 = vsel %vm308, %v796, 0
      %v822 = vsel %vm333, %v786, 0
      %v825 = vsel %vm333, %v787, 0
      %827 = vmatprep.subr.mxu0 0.0
      %828 = vmatpush1.msra.mxu0 0.0
      %829 = vmatprep.subr.mxu0 0.0
      %830 = vmatpush1.msra.mxu0 0.0
      %831 = vmatprep.subr.mxu0 0.0
      %832 = vmatpush1.msra.mxu0 0.0
      %833 = vmatprep.subr.mxu0 0.0
      %834 = vmatpush1.msra.mxu0 0.0
      %835 = vmatprep.subr.mxu0 0.0
      %836 = vmatpush1.msra.mxu0 0.0
      %837 = vmatprep.subr.mxu0 0.0
      %838 = vmatpush1.msra.mxu0 0.0
      %839 = vmatprep.subr.mxu0 0.0
      %840 = vmatpush1.msra.mxu0 0.0
      %841 = vmatprep.subr.mxu0 0.0
      %842 = vmatpush1.msra.mxu0 0.0
      %843 = vmatprep.subr.mxu0 0.0
      %844 = vmatpush1.msra.mxu0 0.0
      %845 = vmatprep.subr.mxu0 0.0
      %846 = vmatpush1.msra.mxu0 0.0
      %847 = vmatprep.subr.mxu0 0.0
      %848 = vmatpush1.msra.mxu0 0.0
      %849 = vmatprep.subr.mxu0 0.0
      %850 = vmatpush1.msra.mxu0 0.0
      %851 = vmatprep.subr.mxu0 0.0
      %852 = vmatpush1.msra.mxu0 0.0
      %853 = vmatprep.subr.mxu0 0.0
      %854 = vmatpush1.msra.mxu0 0.0
      %855 = vmatprep.subr.mxu0 0.0
      %856 = vmatpush1.msra.mxu0 0.0
      %857 = vmatprep.subr.mxu0 %v825
      %858 = vmatpush1.msra.mxu0 %v822
      %859 = vmatprep.subr.mxu0 0.0
      %860 = vmatpush2.msra.mxu0 0.0
      %861 = vmatprep.subr.mxu0 0.0
      %862 = vmatpush2.msra.mxu0 0.0
      %863 = vmatprep.subr.mxu0 0.0
      %864 = vmatpush2.msra.mxu0 0.0
      %865 = vmatprep.subr.mxu0 0.0
      %866 = vmatpush2.msra.mxu0 0.0
      %867 = vmatprep.subr.mxu0 0.0
      %868 = vmatpush2.msra.mxu0 0.0
      %869 = vmatprep.subr.mxu0 0.0
      %870 = vmatpush2.msra.mxu0 0.0
      %871 = vmatprep.subr.mxu0 0.0
      %872 = vmatpush2.msra.mxu0 0.0
      %873 = vmatprep.subr.mxu0 0.0
      %874 = vmatpush2.msra.mxu0 0.0
      %875 = vmatprep.subr.mxu0 0.0
      %876 = vmatpush2.msra.mxu0 0.0
      %877 = vmatprep.subr.mxu0 0.0
      %878 = vmatpush2.msra.mxu0 0.0
      %879 = vmatprep.subr.mxu0 0.0
      %880 = vmatpush2.msra.mxu0 0.0
      %881 = vmatprep.subr.mxu0 0.0
      %882 = vmatpush2.msra.mxu0 0.0
      %883 = vmatprep.subr.mxu0 0.0
      %884 = vmatpush2.msra.mxu0 0.0
      %885 = vmatprep.subr.mxu0 0.0
      %886 = vmatpush2.msra.mxu0 0.0
      %887 = vmatprep.subr.mxu0 0.0
      %888 = vmatpush2.msra.mxu0 0.0
      %889 = vmatprep.subr.mxu0 0.0
      %890 = vmatpush2.msra.mxu0 0.0
      %891 = vmatprep.mubr.f32.mxu0 0.0
      %892 = vmatmul.mubr.f32.gmra.mxu0 %v798
      %v893 = vpop.f32.mrf.mxu0
      %v894 = vadd.f32 0.0, %v893
      %v895 = vpop.f32.mrf.mxu0
      %v896 = vadd.f32 0.0, %v895
      %897 = vmatprep.mubr.f32.mxu0 0.0
      %898 = vmatmul.mubr.f32.gmra.mxu0 %v801
      %v899 = vpop.f32.mrf.mxu0
      %v900 = vadd.f32 0.0, %v899
      %v901 = vpop.f32.mrf.mxu0
      %v902 = vadd.f32 0.0, %v901
      %903 = vmatprep.mubr.f32.mxu0 0.0
      %904 = vmatmul.mubr.f32.gmra.mxu0 %v804
      %v905 = vpop.f32.mrf.mxu0
      %v906 = vadd.f32 0.0, %v905
      %v907 = vpop.f32.mrf.mxu0
      %v908 = vadd.f32 0.0, %v907
      %909 = vmatprep.mubr.f32.mxu0 0.0
      %910 = vmatmul.mubr.f32.gmra.mxu0 %v807
      %v911 = vpop.f32.mrf.mxu0
      %v912 = vadd.f32 0.0, %v911
      %v913 = vpop.f32.mrf.mxu0
      %v914 = vadd.f32 0.0, %v913
      %915 = vmatprep.mubr.f32.mxu0 0.0
      %916 = vmatmul.mubr.f32.gmra.mxu0 %v810
      %v917 = vpop.f32.mrf.mxu0
      %v918 = vadd.f32 0.0, %v917
      %v919 = vpop.f32.mrf.mxu0
      %v920 = vadd.f32 0.0, %v919
      %921 = vmatprep.mubr.f32.mxu0 0.0
      %922 = vmatmul.mubr.f32.gmra.mxu0 %v813
      %v923 = vpop.f32.mrf.mxu0
      %v924 = vadd.f32 0.0, %v923
      %v925 = vpop.f32.mrf.mxu0
      %v926 = vadd.f32 0.0, %v925
      %927 = vmatprep.mubr.f32.mxu0 0.0
      %928 = vmatmul.mubr.f32.gmra.mxu0 %v816
      %v929 = vpop.f32.mrf.mxu0
      %v930 = vadd.f32 0.0, %v929
      %v931 = vpop.f32.mrf.mxu0
      %v932 = vadd.f32 0.0, %v931
      %933 = vmatprep.mubr.f32.mxu0 0.0
      %934 = vmatmul.mubr.f32.gmra.mxu0 %v819
      %v935 = vpop.f32.mrf.mxu0
      %v936 = vadd.f32 0.0, %v935
      %v937 = vpop.f32.mrf.mxu0
      %v938 = vadd.f32 0.0, %v937
      %939 = vdwg.mxu0
      %v940 = vadd.f32 %v755, %v894
      %v941 = vadd.f32 %v756, %v896
      %v942 = vadd.f32 %v757, %v900
      %v943 = vadd.f32 %v758, %v902
      %v944 = vadd.f32 %v759, %v906
      %v945 = vadd.f32 %v760, %v908
      %v946 = vadd.f32 %v761, %v912
      %v947 = vadd.f32 %v762, %v914
      %v948 = vadd.f32 %v763, %v918
      %v949 = vadd.f32 %v764, %v920
      %v950 = vadd.f32 %v765, %v924
      %v951 = vadd.f32 %v766, %v926
      %v952 = vadd.f32 %v767, %v930
      %v953 = vadd.f32 %v768, %v932
      %v954 = vadd.f32 %v769, %v936
      %v955 = vadd.f32 %v770, %v938
      %v956 = vsel %vm260, 1, 0
      %v957 = vsel %vm261, 1, 0
      %vm958 = vcmp.eq.s32.totalorder %v956, 1
      %vm959 = vcmp.eq.s32.totalorder %v957, 1
      %960 = vrot.lane.b32.xlu0 %v262, 124
      %v961 = vpop.permute.xlu0 %960
      %962 = vrot.lane.b32.xlu0 %v263, 124
      %v963 = vpop.permute.xlu0 %962
      %964 = vrot.lane.b32.xlu0 %v278, 124
      %v965 = vpop.permute.xlu0 %964
      %vm966 = vcmask 1014784
      %v967 = vsel %vm966, %v961, %v963
      %v968 = vsel %vm966, %v963, %v965
      %v971 = vsel %vm958, %v967, 0.0
      %v972 = vsel %vm959, %v968, 0.0
      %s973 = scalar_lea.vmem %s200, 256
      %v974 = vld [vmem:[%s973] sm:$0xff]
      %v975 = vld [vmem:[%s973 + $0x8] sm:$0xff]
      %v976 = vld [vmem:[%s973 + $0x10] sm:$0xff]
      %v977 = vld [vmem:[%s973 + $0x18] sm:$0xff]
      %v978 = vld [vmem:[%s973 + $0x20] sm:$0xff]
      %v979 = vld [vmem:[%s973 + $0x28] sm:$0xff]
      %v980 = vld [vmem:[%s973 + $0x30] sm:$0xff]
      %v981 = vld [vmem:[%s973 + $0x38] sm:$0xff]
      %v983 = vsel %vm308, %v974, 0
      %v986 = vsel %vm308, %v975, 0
      %v989 = vsel %vm308, %v976, 0
      %v992 = vsel %vm308, %v977, 0
      %v995 = vsel %vm308, %v978, 0
      %v998 = vsel %vm308, %v979, 0
      %v1001 = vsel %vm308, %v980, 0
      %v1004 = vsel %vm308, %v981, 0
      %v1007 = vsel %vm333, %v971, 0
      %v1010 = vsel %vm333, %v972, 0
      %1012 = vmatprep.subr.mxu0 0.0
      %1013 = vmatpush1.msra.mxu0 0.0
      %1014 = vmatprep.subr.mxu0 0.0
      %1015 = vmatpush1.msra.mxu0 0.0
      %1016 = vmatprep.subr.mxu0 0.0
      %1017 = vmatpush1.msra.mxu0 0.0
      %1018 = vmatprep.subr.mxu0 0.0
      %1019 = vmatpush1.msra.mxu0 0.0
      %1020 = vmatprep.subr.mxu0 0.0
      %1021 = vmatpush1.msra.mxu0 0.0
      %1022 = vmatprep.subr.mxu0 0.0
      %1023 = vmatpush1.msra.mxu0 0.0
      %1024 = vmatprep.subr.mxu0 0.0
      %1025 = vmatpush1.msra.mxu0 0.0
      %1026 = vmatprep.subr.mxu0 0.0
      %1027 = vmatpush1.msra.mxu0 0.0
      %1028 = vmatprep.subr.mxu0 0.0
      %1029 = vmatpush1.msra.mxu0 0.0
      %1030 = vmatprep.subr.mxu0 0.0
      %1031 = vmatpush1.msra.mxu0 0.0
      %1032 = vmatprep.subr.mxu0 0.0
      %1033 = vmatpush1.msra.mxu0 0.0
      %1034 = vmatprep.subr.mxu0 0.0
      %1035 = vmatpush1.msra.mxu0 0.0
      %1036 = vmatprep.subr.mxu0 0.0
      %1037 = vmatpush1.msra.mxu0 0.0
      %1038 = vmatprep.subr.mxu0 0.0
      %1039 = vmatpush1.msra.mxu0 0.0
      %1040 = vmatprep.subr.mxu0 0.0
      %1041 = vmatpush1.msra.mxu0 0.0
      %1042 = vmatprep.subr.mxu0 %v1010
      %1043 = vmatpush1.msra.mxu0 %v1007
      %1044 = vmatprep.subr.mxu0 0.0
      %1045 = vmatpush2.msra.mxu0 0.0
      %1046 = vmatprep.subr.mxu0 0.0
      %1047 = vmatpush2.msra.mxu0 0.0
      %1048 = vmatprep.subr.mxu0 0.0
      %1049 = vmatpush2.msra.mxu0 0.0
      %1050 = vmatprep.subr.mxu0 0.0
      %1051 = vmatpush2.msra.mxu0 0.0
      %1052 = vmatprep.subr.mxu0 0.0
      %1053 = vmatpush2.msra.mxu0 0.0
      %1054 = vmatprep.subr.mxu0 0.0
      %1055 = vmatpush2.msra.mxu0 0.0
      %1056 = vmatprep.subr.mxu0 0.0
      %1057 = vmatpush2.msra.mxu0 0.0
      %1058 = vmatprep.subr.mxu0 0.0
      %1059 = vmatpush2.msra.mxu0 0.0
      %1060 = vmatprep.subr.mxu0 0.0
      %1061 = vmatpush2.msra.mxu0 0.0
      %1062 = vmatprep.subr.mxu0 0.0
      %1063 = vmatpush2.msra.mxu0 0.0
      %1064 = vmatprep.subr.mxu0 0.0
      %1065 = vmatpush2.msra.mxu0 0.0
      %1066 = vmatprep.subr.mxu0 0.0
      %1067 = vmatpush2.msra.mxu0 0.0
      %1068 = vmatprep.subr.mxu0 0.0
      %1069 = vmatpush2.msra.mxu0 0.0
      %1070 = vmatprep.subr.mxu0 0.0
      %1071 = vmatpush2.msra.mxu0 0.0
      %1072 = vmatprep.subr.mxu0 0.0
      %1073 = vmatpush2.msra.mxu0 0.0
      %1074 = vmatprep.subr.mxu0 0.0
      %1075 = vmatpush2.msra.mxu0 0.0
      %1076 = vmatprep.mubr.f32.mxu0 0.0
      %1077 = vmatmul.mubr.f32.gmra.mxu0 %v983
      %v1078 = vpop.f32.mrf.mxu0
      %v1079 = vadd.f32 0.0, %v1078
      %v1080 = vpop.f32.mrf.mxu0
      %v1081 = vadd.f32 0.0, %v1080
      %1082 = vmatprep.mubr.f32.mxu0 0.0
      %1083 = vmatmul.mubr.f32.gmra.mxu0 %v986
      %v1084 = vpop.f32.mrf.mxu0
      %v1085 = vadd.f32 0.0, %v1084
      %v1086 = vpop.f32.mrf.mxu0
      %v1087 = vadd.f32 0.0, %v1086
      %1088 = vmatprep.mubr.f32.mxu0 0.0
      %1089 = vmatmul.mubr.f32.gmra.mxu0 %v989
      %v1090 = vpop.f32.mrf.mxu0
      %v1091 = vadd.f32 0.0, %v1090
      %v1092 = vpop.f32.mrf.mxu0
      %v1093 = vadd.f32 0.0, %v1092
      %1094 = vmatprep.mubr.f32.mxu0 0.0
      %1095 = vmatmul.mubr.f32.gmra.mxu0 %v992
      %v1096 = vpop.f32.mrf.mxu0
      %v1097 = vadd.f32 0.0, %v1096
      %v1098 = vpop.f32.mrf.mxu0
      %v1099 = vadd.f32 0.0, %v1098
      %1100 = vmatprep.mubr.f32.mxu0 0.0
      %1101 = vmatmul.mubr.f32.gmra.mxu0 %v995
      %v1102 = vpop.f32.mrf.mxu0
      %v1103 = vadd.f32 0.0, %v1102
      %v1104 = vpop.f32.mrf.mxu0
      %v1105 = vadd.f32 0.0, %v1104
      %1106 = vmatprep.mubr.f32.mxu0 0.0
      %1107 = vmatmul.mubr.f32.gmra.mxu0 %v998
      %v1108 = vpop.f32.mrf.mxu0
      %v1109 = vadd.f32 0.0, %v1108
      %v1110 = vpop.f32.mrf.mxu0
      %v1111 = vadd.f32 0.0, %v1110
      %1112 = vmatprep.mubr.f32.mxu0 0.0
      %1113 = vmatmul.mubr.f32.gmra.mxu0 %v1001
      %v1114 = vpop.f32.mrf.mxu0
      %v1115 = vadd.f32 0.0, %v1114
      %v1116 = vpop.f32.mrf.mxu0
      %v1117 = vadd.f32 0.0, %v1116
      %1118 = vmatprep.mubr.f32.mxu0 0.0
      %1119 = vmatmul.mubr.f32.gmra.mxu0 %v1004
      %v1120 = vpop.f32.mrf.mxu0
      %v1121 = vadd.f32 0.0, %v1120
      %v1122 = vpop.f32.mrf.mxu0
      %v1123 = vadd.f32 0.0, %v1122
      %1124 = vdwg.mxu0
      %v1125 = vadd.f32 %v940, %v1079
      %v1126 = vadd.f32 %v941, %v1081
      %v1127 = vadd.f32 %v942, %v1085
      %v1128 = vadd.f32 %v943, %v1087
      %v1129 = vadd.f32 %v944, %v1091
      %v1130 = vadd.f32 %v945, %v1093
      %v1131 = vadd.f32 %v946, %v1097
      %v1132 = vadd.f32 %v947, %v1099
      %v1133 = vadd.f32 %v948, %v1103
      %v1134 = vadd.f32 %v949, %v1105
      %v1135 = vadd.f32 %v950, %v1109
      %v1136 = vadd.f32 %v951, %v1111
      %v1137 = vadd.f32 %v952, %v1115
      %v1138 = vadd.f32 %v953, %v1117
      %v1139 = vadd.f32 %v954, %v1121
      %v1140 = vadd.f32 %v955, %v1123
      %1141 = vrot.lane.b32.xlu0 %v262, 112
      %v1142 = vpop.permute.xlu0 %1141
      %1143 = vrot.lane.b32.xlu0 %v263, 112
      %v1144 = vpop.permute.xlu0 %1143
      %1145 = vrot.lane.b32.xlu0 %v278, 112
      %v1146 = vpop.permute.xlu0 %1145
      %vm1147 = vcmask 916480
      %v1148 = vsel %vm1147, %v1142, %v1144
      %v1149 = vsel %vm1147, %v1144, %v1146
      %v1152 = vsel %vm266, %v1148, 0.0
      %v1153 = vsel %vm267, %v1149, 0.0
      %s1154 = scalar_lea.vmem %s200, 320
      %v1155 = vld [vmem:[%s1154] sm:$0xff]
      %v1156 = vld [vmem:[%s1154 + $0x8] sm:$0xff]
      %v1157 = vld [vmem:[%s1154 + $0x10] sm:$0xff]
      %v1158 = vld [vmem:[%s1154 + $0x18] sm:$0xff]
      %v1159 = vld [vmem:[%s1154 + $0x20] sm:$0xff]
      %v1160 = vld [vmem:[%s1154 + $0x28] sm:$0xff]
      %v1161 = vld [vmem:[%s1154 + $0x30] sm:$0xff]
      %v1162 = vld [vmem:[%s1154 + $0x38] sm:$0xff]
      %v1164 = vsel %vm308, %v1155, 0
      %v1167 = vsel %vm308, %v1156, 0
      %v1170 = vsel %vm308, %v1157, 0
      %v1173 = vsel %vm308, %v1158, 0
      %v1176 = vsel %vm308, %v1159, 0
      %v1179 = vsel %vm308, %v1160, 0
      %v1182 = vsel %vm308, %v1161, 0
      %v1185 = vsel %vm308, %v1162, 0
      %v1188 = vsel %vm333, %v1152, 0
      %v1191 = vsel %vm333, %v1153, 0
      %1193 = vmatprep.subr.mxu0 0.0
      %1194 = vmatpush1.msra.mxu0 0.0
      %1195 = vmatprep.subr.mxu0 0.0
      %1196 = vmatpush1.msra.mxu0 0.0
      %1197 = vmatprep.subr.mxu0 0.0
      %1198 = vmatpush1.msra.mxu0 0.0
      %1199 = vmatprep.subr.mxu0 0.0
      %1200 = vmatpush1.msra.mxu0 0.0
      %1201 = vmatprep.subr.mxu0 0.0
      %1202 = vmatpush1.msra.mxu0 0.0
      %1203 = vmatprep.subr.mxu0 0.0
      %1204 = vmatpush1.msra.mxu0 0.0
      %1205 = vmatprep.subr.mxu0 0.0
      %1206 = vmatpush1.msra.mxu0 0.0
      %1207 = vmatprep.subr.mxu0 0.0
      %1208 = vmatpush1.msra.mxu0 0.0
      %1209 = vmatprep.subr.mxu0 0.0
      %1210 = vmatpush1.msra.mxu0 0.0
      %1211 = vmatprep.subr.mxu0 0.0
      %1212 = vmatpush1.msra.mxu0 0.0
      %1213 = vmatprep.subr.mxu0 0.0
      %1214 = vmatpush1.msra.mxu0 0.0
      %1215 = vmatprep.subr.mxu0 0.0
      %1216 = vmatpush1.msra.mxu0 0.0
      %1217 = vmatprep.subr.mxu0 0.0
      %1218 = vmatpush1.msra.mxu0 0.0
      %1219 = vmatprep.subr.mxu0 0.0
      %1220 = vmatpush1.msra.mxu0 0.0
      %1221 = vmatprep.subr.mxu0 0.0
      %1222 = vmatpush1.msra.mxu0 0.0
      %1223 = vmatprep.subr.mxu0 %v1191
      %1224 = vmatpush1.msra.mxu0 %v1188
      %1225 = vmatprep.subr.mxu0 0.0
      %1226 = vmatpush2.msra.mxu0 0.0
      %1227 = vmatprep.subr.mxu0 0.0
      %1228 = vmatpush2.msra.mxu0 0.0
      %1229 = vmatprep.subr.mxu0 0.0
      %1230 = vmatpush2.msra.mxu0 0.0
      %1231 = vmatprep.subr.mxu0 0.0
      %1232 = vmatpush2.msra.mxu0 0.0
      %1233 = vmatprep.subr.mxu0 0.0
      %1234 = vmatpush2.msra.mxu0 0.0
      %1235 = vmatprep.subr.mxu0 0.0
      %1236 = vmatpush2.msra.mxu0 0.0
      %1237 = vmatprep.subr.mxu0 0.0
      %1238 = vmatpush2.msra.mxu0 0.0
      %1239 = vmatprep.subr.mxu0 0.0
      %1240 = vmatpush2.msra.mxu0 0.0
      %1241 = vmatprep.subr.mxu0 0.0
      %1242 = vmatpush2.msra.mxu0 0.0
      %1243 = vmatprep.subr.mxu0 0.0
      %1244 = vmatpush2.msra.mxu0 0.0
      %1245 = vmatprep.subr.mxu0 0.0
      %1246 = vmatpush2.msra.mxu0 0.0
      %1247 = vmatprep.subr.mxu0 0.0
      %1248 = vmatpush2.msra.mxu0 0.0
      %1249 = vmatprep.subr.mxu0 0.0
      %1250 = vmatpush2.msra.mxu0 0.0
      %1251 = vmatprep.subr.mxu0 0.0
      %1252 = vmatpush2.msra.mxu0 0.0
      %1253 = vmatprep.subr.mxu0 0.0
      %1254 = vmatpush2.msra.mxu0 0.0
      %1255 = vmatprep.subr.mxu0 0.0
      %1256 = vmatpush2.msra.mxu0 0.0
      %1257 = vmatprep.mubr.f32.mxu0 0.0
      %1258 = vmatmul.mubr.f32.gmra.mxu0 %v1164
      %v1259 = vpop.f32.mrf.mxu0
      %v1260 = vadd.f32 0.0, %v1259
      %v1261 = vpop.f32.mrf.mxu0
      %v1262 = vadd.f32 0.0, %v1261
      %1263 = vmatprep.mubr.f32.mxu0 0.0
      %1264 = vmatmul.mubr.f32.gmra.mxu0 %v1167
      %v1265 = vpop.f32.mrf.mxu0
      %v1266 = vadd.f32 0.0, %v1265
      %v1267 = vpop.f32.mrf.mxu0
      %v1268 = vadd.f32 0.0, %v1267
      %1269 = vmatprep.mubr.f32.mxu0 0.0
      %1270 = vmatmul.mubr.f32.gmra.mxu0 %v1170
      %v1271 = vpop.f32.mrf.mxu0
      %v1272 = vadd.f32 0.0, %v1271
      %v1273 = vpop.f32.mrf.mxu0
      %v1274 = vadd.f32 0.0, %v1273
      %1275 = vmatprep.mubr.f32.mxu0 0.0
      %1276 = vmatmul.mubr.f32.gmra.mxu0 %v1173
      %v1277 = vpop.f32.mrf.mxu0
      %v1278 = vadd.f32 0.0, %v1277
      %v1279 = vpop.f32.mrf.mxu0
      %v1280 = vadd.f32 0.0, %v1279
      %1281 = vmatprep.mubr.f32.mxu0 0.0
      %1282 = vmatmul.mubr.f32.gmra.mxu0 %v1176
      %v1283 = vpop.f32.mrf.mxu0
      %v1284 = vadd.f32 0.0, %v1283
      %v1285 = vpop.f32.mrf.mxu0
      %v1286 = vadd.f32 0.0, %v1285
      %1287 = vmatprep.mubr.f32.mxu0 0.0
      %1288 = vmatmul.mubr.f32.gmra.mxu0 %v1179
      %v1289 = vpop.f32.mrf.mxu0
      %v1290 = vadd.f32 0.0, %v1289
      %v1291 = vpop.f32.mrf.mxu0
      %v1292 = vadd.f32 0.0, %v1291
      %1293 = vmatprep.mubr.f32.mxu0 0.0
      %1294 = vmatmul.mubr.f32.gmra.mxu0 %v1182
      %v1295 = vpop.f32.mrf.mxu0
      %v1296 = vadd.f32 0.0, %v1295
      %v1297 = vpop.f32.mrf.mxu0
      %v1298 = vadd.f32 0.0, %v1297
      %1299 = vmatprep.mubr.f32.mxu0 0.0
      %1300 = vmatmul.mubr.f32.gmra.mxu0 %v1185
      %v1301 = vpop.f32.mrf.mxu0
      %v1302 = vadd.f32 0.0, %v1301
      %v1303 = vpop.f32.mrf.mxu0
      %v1304 = vadd.f32 0.0, %v1303
      %1305 = vdwg.mxu0
      %v1306 = vadd.f32 %v1125, %v1260
      %v1307 = vadd.f32 %v1126, %v1262
      %v1308 = vadd.f32 %v1127, %v1266
      %v1309 = vadd.f32 %v1128, %v1268
      %v1310 = vadd.f32 %v1129, %v1272
      %v1311 = vadd.f32 %v1130, %v1274
      %v1312 = vadd.f32 %v1131, %v1278
      %v1313 = vadd.f32 %v1132, %v1280
      %v1314 = vadd.f32 %v1133, %v1284
      %v1315 = vadd.f32 %v1134, %v1286
      %v1316 = vadd.f32 %v1135, %v1290
      %v1317 = vadd.f32 %v1136, %v1292
      %v1318 = vadd.f32 %v1137, %v1296
      %v1319 = vadd.f32 %v1138, %v1298
      %v1320 = vadd.f32 %v1139, %v1302
      %v1321 = vadd.f32 %v1140, %v1304
      %1322 = vrot.lane.b32.xlu0 %v262, 111
      %v1323 = vpop.permute.xlu0 %1322
      %1324 = vrot.lane.b32.xlu0 %v263, 111
      %v1325 = vpop.permute.xlu0 %1324
      %1326 = vrot.lane.b32.xlu0 %v278, 111
      %v1327 = vpop.permute.xlu0 %1326
      %vm1328 = vcmask 908288
      %v1329 = vsel %vm1328, %v1323, %v1325
      %v1330 = vsel %vm1328, %v1325, %v1327
      %v1333 = vsel %vm281, %v1329, 0.0
      %v1334 = vsel %vm282, %v1330, 0.0
      %s1335 = scalar_lea.vmem %s200, 384
      %v1336 = vld [vmem:[%s1335] sm:$0xff]
      %v1337 = vld [vmem:[%s1335 + $0x8] sm:$0xff]
      %v1338 = vld [vmem:[%s1335 + $0x10] sm:$0xff]
      %v1339 = vld [vmem:[%s1335 + $0x18] sm:$0xff]
      %v1340 = vld [vmem:[%s1335 + $0x20] sm:$0xff]
      %v1341 = vld [vmem:[%s1335 + $0x28] sm:$0xff]
      %v1342 = vld [vmem:[%s1335 + $0x30] sm:$0xff]
      %v1343 = vld [vmem:[%s1335 + $0x38] sm:$0xff]
      %v1345 = vsel %vm308, %v1336, 0
      %v1348 = vsel %vm308, %v1337, 0
      %v1351 = vsel %vm308, %v1338, 0
      %v1354 = vsel %vm308, %v1339, 0
      %v1357 = vsel %vm308, %v1340, 0
      %v1360 = vsel %vm308, %v1341, 0
      %v1363 = vsel %vm308, %v1342, 0
      %v1366 = vsel %vm308, %v1343, 0
      %v1369 = vsel %vm333, %v1333, 0
      %v1372 = vsel %vm333, %v1334, 0
      %1374 = vmatprep.subr.mxu0 0.0
      %1375 = vmatpush1.msra.mxu0 0.0
      %1376 = vmatprep.subr.mxu0 0.0
      %1377 = vmatpush1.msra.mxu0 0.0
      %1378 = vmatprep.subr.mxu0 0.0
      %1379 = vmatpush1.msra.mxu0 0.0
      %1380 = vmatprep.subr.mxu0 0.0
      %1381 = vmatpush1.msra.mxu0 0.0
      %1382 = vmatprep.subr.mxu0 0.0
      %1383 = vmatpush1.msra.mxu0 0.0
      %1384 = vmatprep.subr.mxu0 0.0
      %1385 = vmatpush1.msra.mxu0 0.0
      %1386 = vmatprep.subr.mxu0 0.0
      %1387 = vmatpush1.msra.mxu0 0.0
      %1388 = vmatprep.subr.mxu0 0.0
      %1389 = vmatpush1.msra.mxu0 0.0
      %1390 = vmatprep.subr.mxu0 0.0
      %1391 = vmatpush1.msra.mxu0 0.0
      %1392 = vmatprep.subr.mxu0 0.0
      %1393 = vmatpush1.msra.mxu0 0.0
      %1394 = vmatprep.subr.mxu0 0.0
      %1395 = vmatpush1.msra.mxu0 0.0
      %1396 = vmatprep.subr.mxu0 0.0
      %1397 = vmatpush1.msra.mxu0 0.0
      %1398 = vmatprep.subr.mxu0 0.0
      %1399 = vmatpush1.msra.mxu0 0.0
      %1400 = vmatprep.subr.mxu0 0.0
      %1401 = vmatpush1.msra.mxu0 0.0
      %1402 = vmatprep.subr.mxu0 0.0
      %1403 = vmatpush1.msra.mxu0 0.0
      %1404 = vmatprep.subr.mxu0 %v1372
      %1405 = vmatpush1.msra.mxu0 %v1369
      %1406 = vmatprep.subr.mxu0 0.0
      %1407 = vmatpush2.msra.mxu0 0.0
      %1408 = vmatprep.subr.mxu0 0.0
      %1409 = vmatpush2.msra.mxu0 0.0
      %1410 = vmatprep.subr.mxu0 0.0
      %1411 = vmatpush2.msra.mxu0 0.0
      %1412 = vmatprep.subr.mxu0 0.0
      %1413 = vmatpush2.msra.mxu0 0.0
      %1414 = vmatprep.subr.mxu0 0.0
      %1415 = vmatpush2.msra.mxu0 0.0
      %1416 = vmatprep.subr.mxu0 0.0
      %1417 = vmatpush2.msra.mxu0 0.0
      %1418 = vmatprep.subr.mxu0 0.0
      %1419 = vmatpush2.msra.mxu0 0.0
      %1420 = vmatprep.subr.mxu0 0.0
      %1421 = vmatpush2.msra.mxu0 0.0
      %1422 = vmatprep.subr.mxu0 0.0
      %1423 = vmatpush2.msra.mxu0 0.0
      %1424 = vmatprep.subr.mxu0 0.0
      %1425 = vmatpush2.msra.mxu0 0.0
      %1426 = vmatprep.subr.mxu0 0.0
      %1427 = vmatpush2.msra.mxu0 0.0
      %1428 = vmatprep.subr.mxu0 0.0
      %1429 = vmatpush2.msra.mxu0 0.0
      %1430 = vmatprep.subr.mxu0 0.0
      %1431 = vmatpush2.msra.mxu0 0.0
      %1432 = vmatprep.subr.mxu0 0.0
      %1433 = vmatpush2.msra.mxu0 0.0
      %1434 = vmatprep.subr.mxu0 0.0
      %1435 = vmatpush2.msra.mxu0 0.0
      %1436 = vmatprep.subr.mxu0 0.0
      %1437 = vmatpush2.msra.mxu0 0.0
      %1438 = vmatprep.mubr.f32.mxu0 0.0
      %1439 = vmatmul.mubr.f32.gmra.mxu0 %v1345
      %v1440 = vpop.f32.mrf.mxu0
      %v1441 = vadd.f32 0.0, %v1440
      %v1442 = vpop.f32.mrf.mxu0
      %v1443 = vadd.f32 0.0, %v1442
      %1444 = vmatprep.mubr.f32.mxu0 0.0
      %1445 = vmatmul.mubr.f32.gmra.mxu0 %v1348
      %v1446 = vpop.f32.mrf.mxu0
      %v1447 = vadd.f32 0.0, %v1446
      %v1448 = vpop.f32.mrf.mxu0
      %v1449 = vadd.f32 0.0, %v1448
      %1450 = vmatprep.mubr.f32.mxu0 0.0
      %1451 = vmatmul.mubr.f32.gmra.mxu0 %v1351
      %v1452 = vpop.f32.mrf.mxu0
      %v1453 = vadd.f32 0.0, %v1452
      %v1454 = vpop.f32.mrf.mxu0
      %v1455 = vadd.f32 0.0, %v1454
      %1456 = vmatprep.mubr.f32.mxu0 0.0
      %1457 = vmatmul.mubr.f32.gmra.mxu0 %v1354
      %v1458 = vpop.f32.mrf.mxu0
      %v1459 = vadd.f32 0.0, %v1458
      %v1460 = vpop.f32.mrf.mxu0
      %v1461 = vadd.f32 0.0, %v1460
      %1462 = vmatprep.mubr.f32.mxu0 0.0
      %1463 = vmatmul.mubr.f32.gmra.mxu0 %v1357
      %v1464 = vpop.f32.mrf.mxu0
      %v1465 = vadd.f32 0.0, %v1464
      %v1466 = vpop.f32.mrf.mxu0
      %v1467 = vadd.f32 0.0, %v1466
      %1468 = vmatprep.mubr.f32.mxu0 0.0
      %1469 = vmatmul.mubr.f32.gmra.mxu0 %v1360
      %v1470 = vpop.f32.mrf.mxu0
      %v1471 = vadd.f32 0.0, %v1470
      %v1472 = vpop.f32.mrf.mxu0
      %v1473 = vadd.f32 0.0, %v1472
      %1474 = vmatprep.mubr.f32.mxu0 0.0
      %1475 = vmatmul.mubr.f32.gmra.mxu0 %v1363
      %v1476 = vpop.f32.mrf.mxu0
      %v1477 = vadd.f32 0.0, %v1476
      %v1478 = vpop.f32.mrf.mxu0
      %v1479 = vadd.f32 0.0, %v1478
      %1480 = vmatprep.mubr.f32.mxu0 0.0
      %1481 = vmatmul.mubr.f32.gmra.mxu0 %v1366
      %v1482 = vpop.f32.mrf.mxu0
      %v1483 = vadd.f32 0.0, %v1482
      %v1484 = vpop.f32.mrf.mxu0
      %v1485 = vadd.f32 0.0, %v1484
      %1486 = vdwg.mxu0
      %v1487 = vadd.f32 %v1306, %v1441
      %v1488 = vadd.f32 %v1307, %v1443
      %v1489 = vadd.f32 %v1308, %v1447
      %v1490 = vadd.f32 %v1309, %v1449
      %v1491 = vadd.f32 %v1310, %v1453
      %v1492 = vadd.f32 %v1311, %v1455
      %v1493 = vadd.f32 %v1312, %v1459
      %v1494 = vadd.f32 %v1313, %v1461
      %v1495 = vadd.f32 %v1314, %v1465
      %v1496 = vadd.f32 %v1315, %v1467
      %v1497 = vadd.f32 %v1316, %v1471
      %v1498 = vadd.f32 %v1317, %v1473
      %v1499 = vadd.f32 %v1318, %v1477
      %v1500 = vadd.f32 %v1319, %v1479
      %v1501 = vadd.f32 %v1320, %v1483
      %v1502 = vadd.f32 %v1321, %v1485
      %s1503 = scalar_lea.vmem %s200, 448
      %v1504 = vld [vmem:[%s1503] sm:$0xff]
      %v1505 = vld [vmem:[%s1503 + $0x8] sm:$0xff]
      %v1506 = vld [vmem:[%s1503 + $0x10] sm:$0xff]
      %v1507 = vld [vmem:[%s1503 + $0x18] sm:$0xff]
      %v1508 = vld [vmem:[%s1503 + $0x20] sm:$0xff]
      %v1509 = vld [vmem:[%s1503 + $0x28] sm:$0xff]
      %v1510 = vld [vmem:[%s1503 + $0x30] sm:$0xff]
      %v1511 = vld [vmem:[%s1503 + $0x38] sm:$0xff]
      %1512 = vrot.lane.b32.xlu0 %v262, 110
      %v1513 = vpop.permute.xlu0 %1512
      %1514 = vrot.lane.b32.xlu0 %v263, 110
      %v1515 = vpop.permute.xlu0 %1514
      %1516 = vrot.lane.b32.xlu0 %v278, 110
      %v1517 = vpop.permute.xlu0 %1516
      %vm1518 = vcmask 900096
      %v1519 = vsel %vm1518, %v1513, %v1515
      %v1520 = vsel %vm1518, %v1515, %v1517
      %v1522 = vsel %vm308, %v1504, 0
      %v1525 = vsel %vm308, %v1505, 0
      %v1528 = vsel %vm308, %v1506, 0
      %v1531 = vsel %vm308, %v1507, 0
      %v1534 = vsel %vm308, %v1508, 0
      %v1537 = vsel %vm308, %v1509, 0
      %v1540 = vsel %vm308, %v1510, 0
      %v1543 = vsel %vm308, %v1511, 0
      %v1545 = vsel %vm333, %v1519, 0
      %v1547 = vsel %vm333, %v1520, 0
      %1549 = vmatprep.subr.mxu0 0.0
      %1550 = vmatpush1.msra.mxu0 0.0
      %1551 = vmatprep.subr.mxu0 0.0
      %1552 = vmatpush1.msra.mxu0 0.0
      %1553 = vmatprep.subr.mxu0 0.0
      %1554 = vmatpush1.msra.mxu0 0.0
      %1555 = vmatprep.subr.mxu0 0.0
      %1556 = vmatpush1.msra.mxu0 0.0
      %1557 = vmatprep.subr.mxu0 0.0
      %1558 = vmatpush1.msra.mxu0 0.0
      %1559 = vmatprep.subr.mxu0 0.0
      %1560 = vmatpush1.msra.mxu0 0.0
      %1561 = vmatprep.subr.mxu0 0.0
      %1562 = vmatpush1.msra.mxu0 0.0
      %1563 = vmatprep.subr.mxu0 0.0
      %1564 = vmatpush1.msra.mxu0 0.0
      %1565 = vmatprep.subr.mxu0 0.0
      %1566 = vmatpush1.msra.mxu0 0.0
      %1567 = vmatprep.subr.mxu0 0.0
      %1568 = vmatpush1.msra.mxu0 0.0
      %1569 = vmatprep.subr.mxu0 0.0
      %1570 = vmatpush1.msra.mxu0 0.0
      %1571 = vmatprep.subr.mxu0 0.0
      %1572 = vmatpush1.msra.mxu0 0.0
      %1573 = vmatprep.subr.mxu0 0.0
      %1574 = vmatpush1.msra.mxu0 0.0
      %1575 = vmatprep.subr.mxu0 0.0
      %1576 = vmatpush1.msra.mxu0 0.0
      %1577 = vmatprep.subr.mxu0 0.0
      %1578 = vmatpush1.msra.mxu0 0.0
      %1579 = vmatprep.subr.mxu0 %v1547
      %1580 = vmatpush1.msra.mxu0 %v1545
      %1581 = vmatprep.subr.mxu0 0.0
      %1582 = vmatpush2.msra.mxu0 0.0
      %1583 = vmatprep.subr.mxu0 0.0
      %1584 = vmatpush2.msra.mxu0 0.0
      %1585 = vmatprep.subr.mxu0 0.0
      %1586 = vmatpush2.msra.mxu0 0.0
      %1587 = vmatprep.subr.mxu0 0.0
      %1588 = vmatpush2.msra.mxu0 0.0
      %1589 = vmatprep.subr.mxu0 0.0
      %1590 = vmatpush2.msra.mxu0 0.0
      %1591 = vmatprep.subr.mxu0 0.0
      %1592 = vmatpush2.msra.mxu0 0.0
      %1593 = vmatprep.subr.mxu0 0.0
      %1594 = vmatpush2.msra.mxu0 0.0
      %1595 = vmatprep.subr.mxu0 0.0
      %1596 = vmatpush2.msra.mxu0 0.0
      %1597 = vmatprep.subr.mxu0 0.0
      %1598 = vmatpush2.msra.mxu0 0.0
      %1599 = vmatprep.subr.mxu0 0.0
      %1600 = vmatpush2.msra.mxu0 0.0
      %1601 = vmatprep.subr.mxu0 0.0
      %1602 = vmatpush2.msra.mxu0 0.0
      %1603 = vmatprep.subr.mxu0 0.0
      %1604 = vmatpush2.msra.mxu0 0.0
      %1605 = vmatprep.subr.mxu0 0.0
      %1606 = vmatpush2.msra.mxu0 0.0
      %1607 = vmatprep.subr.mxu0 0.0
      %1608 = vmatpush2.msra.mxu0 0.0
      %1609 = vmatprep.subr.mxu0 0.0
      %1610 = vmatpush2.msra.mxu0 0.0
      %1611 = vmatprep.subr.mxu0 0.0
      %1612 = vmatpush2.msra.mxu0 0.0
      %1613 = vmatprep.mubr.f32.mxu0 0.0
      %1614 = vmatmul.mubr.f32.gmra.mxu0 %v1522
      %v1615 = vpop.f32.mrf.mxu0
      %v1616 = vadd.f32 0.0, %v1615
      %v1617 = vpop.f32.mrf.mxu0
      %v1618 = vadd.f32 0.0, %v1617
      %1619 = vmatprep.mubr.f32.mxu0 0.0
      %1620 = vmatmul.mubr.f32.gmra.mxu0 %v1525
      %v1621 = vpop.f32.mrf.mxu0
      %v1622 = vadd.f32 0.0, %v1621
      %v1623 = vpop.f32.mrf.mxu0
      %v1624 = vadd.f32 0.0, %v1623
      %1625 = vmatprep.mubr.f32.mxu0 0.0
      %1626 = vmatmul.mubr.f32.gmra.mxu0 %v1528
      %v1627 = vpop.f32.mrf.mxu0
      %v1628 = vadd.f32 0.0, %v1627
      %v1629 = vpop.f32.mrf.mxu0
      %v1630 = vadd.f32 0.0, %v1629
      %1631 = vmatprep.mubr.f32.mxu0 0.0
      %1632 = vmatmul.mubr.f32.gmra.mxu0 %v1531
      %v1633 = vpop.f32.mrf.mxu0
      %v1634 = vadd.f32 0.0, %v1633
      %v1635 = vpop.f32.mrf.mxu0
      %v1636 = vadd.f32 0.0, %v1635
      %1637 = vmatprep.mubr.f32.mxu0 0.0
      %1638 = vmatmul.mubr.f32.gmra.mxu0 %v1534
      %v1639 = vpop.f32.mrf.mxu0
      %v1640 = vadd.f32 0.0, %v1639
      %v1641 = vpop.f32.mrf.mxu0
      %v1642 = vadd.f32 0.0, %v1641
      %1643 = vmatprep.mubr.f32.mxu0 0.0
      %1644 = vmatmul.mubr.f32.gmra.mxu0 %v1537
      %v1645 = vpop.f32.mrf.mxu0
      %v1646 = vadd.f32 0.0, %v1645
      %v1647 = vpop.f32.mrf.mxu0
      %v1648 = vadd.f32 0.0, %v1647
      %1649 = vmatprep.mubr.f32.mxu0 0.0
      %1650 = vmatmul.mubr.f32.gmra.mxu0 %v1540
      %v1651 = vpop.f32.mrf.mxu0
      %v1652 = vadd.f32 0.0, %v1651
      %v1653 = vpop.f32.mrf.mxu0
      %v1654 = vadd.f32 0.0, %v1653
      %1655 = vmatprep.mubr.f32.mxu0 0.0
      %1656 = vmatmul.mubr.f32.gmra.mxu0 %v1543
      %v1657 = vpop.f32.mrf.mxu0
      %v1658 = vadd.f32 0.0, %v1657
      %v1659 = vpop.f32.mrf.mxu0
      %v1660 = vadd.f32 0.0, %v1659
      %1661 = vdwg.mxu0
      %v1662 = vadd.f32 %v1487, %v1616
      %v1663 = vadd.f32 %v1488, %v1618
      %v1664 = vadd.f32 %v1489, %v1622
      %v1665 = vadd.f32 %v1490, %v1624
      %v1666 = vadd.f32 %v1491, %v1628
      %v1667 = vadd.f32 %v1492, %v1630
      %v1668 = vadd.f32 %v1493, %v1634
      %v1669 = vadd.f32 %v1494, %v1636
      %v1670 = vadd.f32 %v1495, %v1640
      %v1671 = vadd.f32 %v1496, %v1642
      %v1672 = vadd.f32 %v1497, %v1646
      %v1673 = vadd.f32 %v1498, %v1648
      %v1674 = vadd.f32 %v1499, %v1652
      %v1675 = vadd.f32 %v1500, %v1654
      %v1676 = vadd.f32 %v1501, %v1658
      %v1677 = vadd.f32 %v1502, %v1660
      %1678 = vrot.lane.b32.xlu0 %v262, 109
      %v1679 = vpop.permute.xlu0 %1678
      %1680 = vrot.lane.b32.xlu0 %v263, 109
      %v1681 = vpop.permute.xlu0 %1680
      %1682 = vrot.lane.b32.xlu0 %v278, 109
      %v1683 = vpop.permute.xlu0 %1682
      %vm1684 = vcmask 891904
      %v1685 = vsel %vm1684, %v1679, %v1681
      %v1686 = vsel %vm1684, %v1681, %v1683
      %v1689 = vsel %vm773, %v1685, 0.0
      %v1690 = vsel %vm774, %v1686, 0.0
      %s1691 = scalar_lea.vmem %s200, 512
      %v1692 = vld [vmem:[%s1691] sm:$0xff]
      %v1693 = vld [vmem:[%s1691 + $0x8] sm:$0xff]
      %v1694 = vld [vmem:[%s1691 + $0x10] sm:$0xff]
      %v1695 = vld [vmem:[%s1691 + $0x18] sm:$0xff]
      %v1696 = vld [vmem:[%s1691 + $0x20] sm:$0xff]
      %v1697 = vld [vmem:[%s1691 + $0x28] sm:$0xff]
      %v1698 = vld [vmem:[%s1691 + $0x30] sm:$0xff]
      %v1699 = vld [vmem:[%s1691 + $0x38] sm:$0xff]
      %v1701 = vsel %vm308, %v1692, 0
      %v1704 = vsel %vm308, %v1693, 0
      %v1707 = vsel %vm308, %v1694, 0
      %v1710 = vsel %vm308, %v1695, 0
      %v1713 = vsel %vm308, %v1696, 0
      %v1716 = vsel %vm308, %v1697, 0
      %v1719 = vsel %vm308, %v1698, 0
      %v1722 = vsel %vm308, %v1699, 0
      %v1725 = vsel %vm333, %v1689, 0
      %v1728 = vsel %vm333, %v1690, 0
      %1730 = vmatprep.subr.mxu0 0.0
      %1731 = vmatpush1.msra.mxu0 0.0
      %1732 = vmatprep.subr.mxu0 0.0
      %1733 = vmatpush1.msra.mxu0 0.0
      %1734 = vmatprep.subr.mxu0 0.0
      %1735 = vmatpush1.msra.mxu0 0.0
      %1736 = vmatprep.subr.mxu0 0.0
      %1737 = vmatpush1.msra.mxu0 0.0
      %1738 = vmatprep.subr.mxu0 0.0
      %1739 = vmatpush1.msra.mxu0 0.0
      %1740 = vmatprep.subr.mxu0 0.0
      %1741 = vmatpush1.msra.mxu0 0.0
      %1742 = vmatprep.subr.mxu0 0.0
      %1743 = vmatpush1.msra.mxu0 0.0
      %1744 = vmatprep.subr.mxu0 0.0
      %1745 = vmatpush1.msra.mxu0 0.0
      %1746 = vmatprep.subr.mxu0 0.0
      %1747 = vmatpush1.msra.mxu0 0.0
      %1748 = vmatprep.subr.mxu0 0.0
      %1749 = vmatpush1.msra.mxu0 0.0
      %1750 = vmatprep.subr.mxu0 0.0
      %1751 = vmatpush1.msra.mxu0 0.0
      %1752 = vmatprep.subr.mxu0 0.0
      %1753 = vmatpush1.msra.mxu0 0.0
      %1754 = vmatprep.subr.mxu0 0.0
      %1755 = vmatpush1.msra.mxu0 0.0
      %1756 = vmatprep.subr.mxu0 0.0
      %1757 = vmatpush1.msra.mxu0 0.0
      %1758 = vmatprep.subr.mxu0 0.0
      %1759 = vmatpush1.msra.mxu0 0.0
      %1760 = vmatprep.subr.mxu0 %v1728
      %1761 = vmatpush1.msra.mxu0 %v1725
      %1762 = vmatprep.subr.mxu0 0.0
      %1763 = vmatpush2.msra.mxu0 0.0
      %1764 = vmatprep.subr.mxu0 0.0
      %1765 = vmatpush2.msra.mxu0 0.0
      %1766 = vmatprep.subr.mxu0 0.0
      %1767 = vmatpush2.msra.mxu0 0.0
      %1768 = vmatprep.subr.mxu0 0.0
      %1769 = vmatpush2.msra.mxu0 0.0
      %1770 = vmatprep.subr.mxu0 0.0
      %1771 = vmatpush2.msra.mxu0 0.0
      %1772 = vmatprep.subr.mxu0 0.0
      %1773 = vmatpush2.msra.mxu0 0.0
      %1774 = vmatprep.subr.mxu0 0.0
      %1775 = vmatpush2.msra.mxu0 0.0
      %1776 = vmatprep.subr.mxu0 0.0
      %1777 = vmatpush2.msra.mxu0 0.0
      %1778 = vmatprep.subr.mxu0 0.0
      %1779 = vmatpush2.msra.mxu0 0.0
      %1780 = vmatprep.subr.mxu0 0.0
      %1781 = vmatpush2.msra.mxu0 0.0
      %1782 = vmatprep.subr.mxu0 0.0
      %1783 = vmatpush2.msra.mxu0 0.0
      %1784 = vmatprep.subr.mxu0 0.0
      %1785 = vmatpush2.msra.mxu0 0.0
      %1786 = vmatprep.subr.mxu0 0.0
      %1787 = vmatpush2.msra.mxu0 0.0
      %1788 = vmatprep.subr.mxu0 0.0
      %1789 = vmatpush2.msra.mxu0 0.0
      %1790 = vmatprep.subr.mxu0 0.0
      %1791 = vmatpush2.msra.mxu0 0.0
      %1792 = vmatprep.subr.mxu0 0.0
      %1793 = vmatpush2.msra.mxu0 0.0
      %1794 = vmatprep.mubr.f32.mxu0 0.0
      %1795 = vmatmul.mubr.f32.gmra.mxu0 %v1701
      %v1796 = vpop.f32.mrf.mxu0
      %v1797 = vadd.f32 0.0, %v1796
      %v1798 = vpop.f32.mrf.mxu0
      %v1799 = vadd.f32 0.0, %v1798
      %1800 = vmatprep.mubr.f32.mxu0 0.0
      %1801 = vmatmul.mubr.f32.gmra.mxu0 %v1704
      %v1802 = vpop.f32.mrf.mxu0
      %v1803 = vadd.f32 0.0, %v1802
      %v1804 = vpop.f32.mrf.mxu0
      %v1805 = vadd.f32 0.0, %v1804
      %1806 = vmatprep.mubr.f32.mxu0 0.0
      %1807 = vmatmul.mubr.f32.gmra.mxu0 %v1707
      %v1808 = vpop.f32.mrf.mxu0
      %v1809 = vadd.f32 0.0, %v1808
      %v1810 = vpop.f32.mrf.mxu0
      %v1811 = vadd.f32 0.0, %v1810
      %1812 = vmatprep.mubr.f32.mxu0 0.0
      %1813 = vmatmul.mubr.f32.gmra.mxu0 %v1710
      %v1814 = vpop.f32.mrf.mxu0
      %v1815 = vadd.f32 0.0, %v1814
      %v1816 = vpop.f32.mrf.mxu0
      %v1817 = vadd.f32 0.0, %v1816
      %1818 = vmatprep.mubr.f32.mxu0 0.0
      %1819 = vmatmul.mubr.f32.gmra.mxu0 %v1713
      %v1820 = vpop.f32.mrf.mxu0
      %v1821 = vadd.f32 0.0, %v1820
      %v1822 = vpop.f32.mrf.mxu0
      %v1823 = vadd.f32 0.0, %v1822
      %1824 = vmatprep.mubr.f32.mxu0 0.0
      %1825 = vmatmul.mubr.f32.gmra.mxu0 %v1716
      %v1826 = vpop.f32.mrf.mxu0
      %v1827 = vadd.f32 0.0, %v1826
      %v1828 = vpop.f32.mrf.mxu0
      %v1829 = vadd.f32 0.0, %v1828
      %1830 = vmatprep.mubr.f32.mxu0 0.0
      %1831 = vmatmul.mubr.f32.gmra.mxu0 %v1719
      %v1832 = vpop.f32.mrf.mxu0
      %v1833 = vadd.f32 0.0, %v1832
      %v1834 = vpop.f32.mrf.mxu0
      %v1835 = vadd.f32 0.0, %v1834
      %1836 = vmatprep.mubr.f32.mxu0 0.0
      %1837 = vmatmul.mubr.f32.gmra.mxu0 %v1722
      %v1838 = vpop.f32.mrf.mxu0
      %v1839 = vadd.f32 0.0, %v1838
      %v1840 = vpop.f32.mrf.mxu0
      %v1841 = vadd.f32 0.0, %v1840
      %1842 = vdwg.mxu0
      %v1843 = vadd.f32 %v1662, %v1797
      %v1844 = vadd.f32 %v1663, %v1799
      %v1845 = vadd.f32 %v1664, %v1803
      %v1846 = vadd.f32 %v1665, %v1805
      %v1847 = vadd.f32 %v1666, %v1809
      %v1848 = vadd.f32 %v1667, %v1811
      %v1849 = vadd.f32 %v1668, %v1815
      %v1850 = vadd.f32 %v1669, %v1817
      %v1851 = vadd.f32 %v1670, %v1821
      %v1852 = vadd.f32 %v1671, %v1823
      %v1853 = vadd.f32 %v1672, %v1827
      %v1854 = vadd.f32 %v1673, %v1829
      %v1855 = vadd.f32 %v1674, %v1833
      %v1856 = vadd.f32 %v1675, %v1835
      %v1857 = vadd.f32 %v1676, %v1839
      %v1858 = vadd.f32 %v1677, %v1841
      %1859 = vrot.lane.b32.xlu0 %v262, 108
      %v1860 = vpop.permute.xlu0 %1859
      %1861 = vrot.lane.b32.xlu0 %v263, 108
      %v1862 = vpop.permute.xlu0 %1861
      %1863 = vrot.lane.b32.xlu0 %v278, 108
      %v1864 = vpop.permute.xlu0 %1863
      %vm1865 = vcmask 883712
      %v1866 = vsel %vm1865, %v1860, %v1862
      %v1867 = vsel %vm1865, %v1862, %v1864
      %v1870 = vsel %vm958, %v1866, 0.0
      %v1871 = vsel %vm959, %v1867, 0.0
      %s1872 = scalar_lea.vmem %s200, 576
      %v1873 = vld [vmem:[%s1872] sm:$0xff]
      %v1874 = vld [vmem:[%s1872 + $0x8] sm:$0xff]
      %v1875 = vld [vmem:[%s1872 + $0x10] sm:$0xff]
      %v1876 = vld [vmem:[%s1872 + $0x18] sm:$0xff]
      %v1877 = vld [vmem:[%s1872 + $0x20] sm:$0xff]
      %v1878 = vld [vmem:[%s1872 + $0x28] sm:$0xff]
      %v1879 = vld [vmem:[%s1872 + $0x30] sm:$0xff]
      %v1880 = vld [vmem:[%s1872 + $0x38] sm:$0xff]
      %v1882 = vsel %vm308, %v1873, 0
      %v1885 = vsel %vm308, %v1874, 0
      %v1888 = vsel %vm308, %v1875, 0
      %v1891 = vsel %vm308, %v1876, 0
      %v1894 = vsel %vm308, %v1877, 0
      %v1897 = vsel %vm308, %v1878, 0
      %v1900 = vsel %vm308, %v1879, 0
      %v1903 = vsel %vm308, %v1880, 0
      %v1906 = vsel %vm333, %v1870, 0
      %v1909 = vsel %vm333, %v1871, 0
      %1911 = vmatprep.subr.mxu0 0.0
      %1912 = vmatpush1.msra.mxu0 0.0
      %1913 = vmatprep.subr.mxu0 0.0
      %1914 = vmatpush1.msra.mxu0 0.0
      %1915 = vmatprep.subr.mxu0 0.0
      %1916 = vmatpush1.msra.mxu0 0.0
      %1917 = vmatprep.subr.mxu0 0.0
      %1918 = vmatpush1.msra.mxu0 0.0
      %1919 = vmatprep.subr.mxu0 0.0
      %1920 = vmatpush1.msra.mxu0 0.0
      %1921 = vmatprep.subr.mxu0 0.0
      %1922 = vmatpush1.msra.mxu0 0.0
      %1923 = vmatprep.subr.mxu0 0.0
      %1924 = vmatpush1.msra.mxu0 0.0
      %1925 = vmatprep.subr.mxu0 0.0
      %1926 = vmatpush1.msra.mxu0 0.0
      %1927 = vmatprep.subr.mxu0 0.0
      %1928 = vmatpush1.msra.mxu0 0.0
      %1929 = vmatprep.subr.mxu0 0.0
      %1930 = vmatpush1.msra.mxu0 0.0
      %1931 = vmatprep.subr.mxu0 0.0
      %1932 = vmatpush1.msra.mxu0 0.0
      %1933 = vmatprep.subr.mxu0 0.0
      %1934 = vmatpush1.msra.mxu0 0.0
      %1935 = vmatprep.subr.mxu0 0.0
      %1936 = vmatpush1.msra.mxu0 0.0
      %1937 = vmatprep.subr.mxu0 0.0
      %1938 = vmatpush1.msra.mxu0 0.0
      %1939 = vmatprep.subr.mxu0 0.0
      %1940 = vmatpush1.msra.mxu0 0.0
      %1941 = vmatprep.subr.mxu0 %v1909
      %1942 = vmatpush1.msra.mxu0 %v1906
      %1943 = vmatprep.subr.mxu0 0.0
      %1944 = vmatpush2.msra.mxu0 0.0
      %1945 = vmatprep.subr.mxu0 0.0
      %1946 = vmatpush2.msra.mxu0 0.0
      %1947 = vmatprep.subr.mxu0 0.0
      %1948 = vmatpush2.msra.mxu0 0.0
      %1949 = vmatprep.subr.mxu0 0.0
      %1950 = vmatpush2.msra.mxu0 0.0
      %1951 = vmatprep.subr.mxu0 0.0
      %1952 = vmatpush2.msra.mxu0 0.0
      %1953 = vmatprep.subr.mxu0 0.0
      %1954 = vmatpush2.msra.mxu0 0.0
      %1955 = vmatprep.subr.mxu0 0.0
      %1956 = vmatpush2.msra.mxu0 0.0
      %1957 = vmatprep.subr.mxu0 0.0
      %1958 = vmatpush2.msra.mxu0 0.0
      %1959 = vmatprep.subr.mxu0 0.0
      %1960 = vmatpush2.msra.mxu0 0.0
      %1961 = vmatprep.subr.mxu0 0.0
      %1962 = vmatpush2.msra.mxu0 0.0
      %1963 = vmatprep.subr.mxu0 0.0
      %1964 = vmatpush2.msra.mxu0 0.0
      %1965 = vmatprep.subr.mxu0 0.0
      %1966 = vmatpush2.msra.mxu0 0.0
      %1967 = vmatprep.subr.mxu0 0.0
      %1968 = vmatpush2.msra.mxu0 0.0
      %1969 = vmatprep.subr.mxu0 0.0
      %1970 = vmatpush2.msra.mxu0 0.0
      %1971 = vmatprep.subr.mxu0 0.0
      %1972 = vmatpush2.msra.mxu0 0.0
      %1973 = vmatprep.subr.mxu0 0.0
      %1974 = vmatpush2.msra.mxu0 0.0
      %1975 = vmatprep.mubr.f32.mxu0 0.0
      %1976 = vmatmul.mubr.f32.gmra.mxu0 %v1882
      %v1977 = vpop.f32.mrf.mxu0
      %v1978 = vadd.f32 0.0, %v1977
      %v1979 = vpop.f32.mrf.mxu0
      %v1980 = vadd.f32 0.0, %v1979
      %1981 = vmatprep.mubr.f32.mxu0 0.0
      %1982 = vmatmul.mubr.f32.gmra.mxu0 %v1885
      %v1983 = vpop.f32.mrf.mxu0
      %v1984 = vadd.f32 0.0, %v1983
      %v1985 = vpop.f32.mrf.mxu0
      %v1986 = vadd.f32 0.0, %v1985
      %1987 = vmatprep.mubr.f32.mxu0 0.0
      %1988 = vmatmul.mubr.f32.gmra.mxu0 %v1888
      %v1989 = vpop.f32.mrf.mxu0
      %v1990 = vadd.f32 0.0, %v1989
      %v1991 = vpop.f32.mrf.mxu0
      %v1992 = vadd.f32 0.0, %v1991
      %1993 = vmatprep.mubr.f32.mxu0 0.0
      %1994 = vmatmul.mubr.f32.gmra.mxu0 %v1891
      %v1995 = vpop.f32.mrf.mxu0
      %v1996 = vadd.f32 0.0, %v1995
      %v1997 = vpop.f32.mrf.mxu0
      %v1998 = vadd.f32 0.0, %v1997
      %1999 = vmatprep.mubr.f32.mxu0 0.0
      %2000 = vmatmul.mubr.f32.gmra.mxu0 %v1894
      %v2001 = vpop.f32.mrf.mxu0
      %v2002 = vadd.f32 0.0, %v2001
      %v2003 = vpop.f32.mrf.mxu0
      %v2004 = vadd.f32 0.0, %v2003
      %2005 = vmatprep.mubr.f32.mxu0 0.0
      %2006 = vmatmul.mubr.f32.gmra.mxu0 %v1897
      %v2007 = vpop.f32.mrf.mxu0
      %v2008 = vadd.f32 0.0, %v2007
      %v2009 = vpop.f32.mrf.mxu0
      %v2010 = vadd.f32 0.0, %v2009
      %2011 = vmatprep.mubr.f32.mxu0 0.0
      %2012 = vmatmul.mubr.f32.gmra.mxu0 %v1900
      %v2013 = vpop.f32.mrf.mxu0
      %v2014 = vadd.f32 0.0, %v2013
      %v2015 = vpop.f32.mrf.mxu0
      %v2016 = vadd.f32 0.0, %v2015
      %2017 = vmatprep.mubr.f32.mxu0 0.0
      %2018 = vmatmul.mubr.f32.gmra.mxu0 %v1903
      %v2019 = vpop.f32.mrf.mxu0
      %v2020 = vadd.f32 0.0, %v2019
      %v2021 = vpop.f32.mrf.mxu0
      %v2022 = vadd.f32 0.0, %v2021
      %2023 = vdwg.mxu0
      %v2024 = vadd.f32 %v1843, %v1978
      %v2025 = vadd.f32 %v1844, %v1980
      %v2026 = vadd.f32 %v1845, %v1984
      %v2027 = vadd.f32 %v1846, %v1986
      %v2028 = vadd.f32 %v1847, %v1990
      %v2029 = vadd.f32 %v1848, %v1992
      %v2030 = vadd.f32 %v1849, %v1996
      %v2031 = vadd.f32 %v1850, %v1998
      %v2032 = vadd.f32 %v1851, %v2002
      %v2033 = vadd.f32 %v1852, %v2004
      %v2034 = vadd.f32 %v1853, %v2008
      %v2035 = vadd.f32 %v1854, %v2010
      %v2036 = vadd.f32 %v1855, %v2014
      %v2037 = vadd.f32 %v1856, %v2016
      %v2038 = vadd.f32 %v1857, %v2020
      %v2039 = vadd.f32 %v1858, %v2022
      %2040 = vrot.lane.b32.xlu0 %v262, 96
      %v2041 = vpop.permute.xlu0 %2040
      %2042 = vrot.lane.b32.xlu0 %v263, 96
      %v2043 = vpop.permute.xlu0 %2042
      %2044 = vrot.lane.b32.xlu0 %v278, 96
      %v2045 = vpop.permute.xlu0 %2044
      %vm2046 = vcmask 785408
      %v2047 = vsel %vm2046, %v2041, %v2043
      %v2048 = vsel %vm2046, %v2043, %v2045
      %v2051 = vsel %vm266, %v2047, 0.0
      %v2052 = vsel %vm267, %v2048, 0.0
      %s2053 = scalar_lea.vmem %s200, 640
      %v2054 = vld [vmem:[%s2053] sm:$0xff]
      %v2055 = vld [vmem:[%s2053 + $0x8] sm:$0xff]
      %v2056 = vld [vmem:[%s2053 + $0x10] sm:$0xff]
      %v2057 = vld [vmem:[%s2053 + $0x18] sm:$0xff]
      %v2058 = vld [vmem:[%s2053 + $0x20] sm:$0xff]
      %v2059 = vld [vmem:[%s2053 + $0x28] sm:$0xff]
      %v2060 = vld [vmem:[%s2053 + $0x30] sm:$0xff]
      %v2061 = vld [vmem:[%s2053 + $0x38] sm:$0xff]
      %v2063 = vsel %vm308, %v2054, 0
      %v2066 = vsel %vm308, %v2055, 0
      %v2069 = vsel %vm308, %v2056, 0
      %v2072 = vsel %vm308, %v2057, 0
      %v2075 = vsel %vm308, %v2058, 0
      %v2078 = vsel %vm308, %v2059, 0
      %v2081 = vsel %vm308, %v2060, 0
      %v2084 = vsel %vm308, %v2061, 0
      %v2087 = vsel %vm333, %v2051, 0
      %v2090 = vsel %vm333, %v2052, 0
      %2092 = vmatprep.subr.mxu0 0.0
      %2093 = vmatpush1.msra.mxu0 0.0
      %2094 = vmatprep.subr.mxu0 0.0
      %2095 = vmatpush1.msra.mxu0 0.0
      %2096 = vmatprep.subr.mxu0 0.0
      %2097 = vmatpush1.msra.mxu0 0.0
      %2098 = vmatprep.subr.mxu0 0.0
      %2099 = vmatpush1.msra.mxu0 0.0
      %2100 = vmatprep.subr.mxu0 0.0
      %2101 = vmatpush1.msra.mxu0 0.0
      %2102 = vmatprep.subr.mxu0 0.0
      %2103 = vmatpush1.msra.mxu0 0.0
      %2104 = vmatprep.subr.mxu0 0.0
      %2105 = vmatpush1.msra.mxu0 0.0
      %2106 = vmatprep.subr.mxu0 0.0
      %2107 = vmatpush1.msra.mxu0 0.0
      %2108 = vmatprep.subr.mxu0 0.0
      %2109 = vmatpush1.msra.mxu0 0.0
      %2110 = vmatprep.subr.mxu0 0.0
      %2111 = vmatpush1.msra.mxu0 0.0
      %2112 = vmatprep.subr.mxu0 0.0
      %2113 = vmatpush1.msra.mxu0 0.0
      %2114 = vmatprep.subr.mxu0 0.0
      %2115 = vmatpush1.msra.mxu0 0.0
      %2116 = vmatprep.subr.mxu0 0.0
      %2117 = vmatpush1.msra.mxu0 0.0
      %2118 = vmatprep.subr.mxu0 0.0
      %2119 = vmatpush1.msra.mxu0 0.0
      %2120 = vmatprep.subr.mxu0 0.0
      %2121 = vmatpush1.msra.mxu0 0.0
      %2122 = vmatprep.subr.mxu0 %v2090
      %2123 = vmatpush1.msra.mxu0 %v2087
      %2124 = vmatprep.subr.mxu0 0.0
      %2125 = vmatpush2.msra.mxu0 0.0
      %2126 = vmatprep.subr.mxu0 0.0
      %2127 = vmatpush2.msra.mxu0 0.0
      %2128 = vmatprep.subr.mxu0 0.0
      %2129 = vmatpush2.msra.mxu0 0.0
      %2130 = vmatprep.subr.mxu0 0.0
      %2131 = vmatpush2.msra.mxu0 0.0
      %2132 = vmatprep.subr.mxu0 0.0
      %2133 = vmatpush2.msra.mxu0 0.0
      %2134 = vmatprep.subr.mxu0 0.0
      %2135 = vmatpush2.msra.mxu0 0.0
      %2136 = vmatprep.subr.mxu0 0.0
      %2137 = vmatpush2.msra.mxu0 0.0
      %2138 = vmatprep.subr.mxu0 0.0
      %2139 = vmatpush2.msra.mxu0 0.0
      %2140 = vmatprep.subr.mxu0 0.0
      %2141 = vmatpush2.msra.mxu0 0.0
      %2142 = vmatprep.subr.mxu0 0.0
      %2143 = vmatpush2.msra.mxu0 0.0
      %2144 = vmatprep.subr.mxu0 0.0
      %2145 = vmatpush2.msra.mxu0 0.0
      %2146 = vmatprep.subr.mxu0 0.0
      %2147 = vmatpush2.msra.mxu0 0.0
      %2148 = vmatprep.subr.mxu0 0.0
      %2149 = vmatpush2.msra.mxu0 0.0
      %2150 = vmatprep.subr.mxu0 0.0
      %2151 = vmatpush2.msra.mxu0 0.0
      %2152 = vmatprep.subr.mxu0 0.0
      %2153 = vmatpush2.msra.mxu0 0.0
      %2154 = vmatprep.subr.mxu0 0.0
      %2155 = vmatpush2.msra.mxu0 0.0
      %2156 = vmatprep.mubr.f32.mxu0 0.0
      %2157 = vmatmul.mubr.f32.gmra.mxu0 %v2063
      %v2158 = vpop.f32.mrf.mxu0
      %v2159 = vadd.f32 0.0, %v2158
      %v2160 = vpop.f32.mrf.mxu0
      %v2161 = vadd.f32 0.0, %v2160
      %2162 = vmatprep.mubr.f32.mxu0 0.0
      %2163 = vmatmul.mubr.f32.gmra.mxu0 %v2066
      %v2164 = vpop.f32.mrf.mxu0
      %v2165 = vadd.f32 0.0, %v2164
      %v2166 = vpop.f32.mrf.mxu0
      %v2167 = vadd.f32 0.0, %v2166
      %2168 = vmatprep.mubr.f32.mxu0 0.0
      %2169 = vmatmul.mubr.f32.gmra.mxu0 %v2069
      %v2170 = vpop.f32.mrf.mxu0
      %v2171 = vadd.f32 0.0, %v2170
      %v2172 = vpop.f32.mrf.mxu0
      %v2173 = vadd.f32 0.0, %v2172
      %2174 = vmatprep.mubr.f32.mxu0 0.0
      %2175 = vmatmul.mubr.f32.gmra.mxu0 %v2072
      %v2176 = vpop.f32.mrf.mxu0
      %v2177 = vadd.f32 0.0, %v2176
      %v2178 = vpop.f32.mrf.mxu0
      %v2179 = vadd.f32 0.0, %v2178
      %2180 = vmatprep.mubr.f32.mxu0 0.0
      %2181 = vmatmul.mubr.f32.gmra.mxu0 %v2075
      %v2182 = vpop.f32.mrf.mxu0
      %v2183 = vadd.f32 0.0, %v2182
      %v2184 = vpop.f32.mrf.mxu0
      %v2185 = vadd.f32 0.0, %v2184
      %2186 = vmatprep.mubr.f32.mxu0 0.0
      %2187 = vmatmul.mubr.f32.gmra.mxu0 %v2078
      %v2188 = vpop.f32.mrf.mxu0
      %v2189 = vadd.f32 0.0, %v2188
      %v2190 = vpop.f32.mrf.mxu0
      %v2191 = vadd.f32 0.0, %v2190
      %2192 = vmatprep.mubr.f32.mxu0 0.0
      %2193 = vmatmul.mubr.f32.gmra.mxu0 %v2081
      %v2194 = vpop.f32.mrf.mxu0
      %v2195 = vadd.f32 0.0, %v2194
      %v2196 = vpop.f32.mrf.mxu0
      %v2197 = vadd.f32 0.0, %v2196
      %2198 = vmatprep.mubr.f32.mxu0 0.0
      %2199 = vmatmul.mubr.f32.gmra.mxu0 %v2084
      %v2200 = vpop.f32.mrf.mxu0
      %v2201 = vadd.f32 0.0, %v2200
      %v2202 = vpop.f32.mrf.mxu0
      %v2203 = vadd.f32 0.0, %v2202
      %2204 = vdwg.mxu0
      %v2205 = vadd.f32 %v2024, %v2159
      %v2206 = vadd.f32 %v2025, %v2161
      %v2207 = vadd.f32 %v2026, %v2165
      %v2208 = vadd.f32 %v2027, %v2167
      %v2209 = vadd.f32 %v2028, %v2171
      %v2210 = vadd.f32 %v2029, %v2173
      %v2211 = vadd.f32 %v2030, %v2177
      %v2212 = vadd.f32 %v2031, %v2179
      %v2213 = vadd.f32 %v2032, %v2183
      %v2214 = vadd.f32 %v2033, %v2185
      %v2215 = vadd.f32 %v2034, %v2189
      %v2216 = vadd.f32 %v2035, %v2191
      %v2217 = vadd.f32 %v2036, %v2195
      %v2218 = vadd.f32 %v2037, %v2197
      %v2219 = vadd.f32 %v2038, %v2201
      %v2220 = vadd.f32 %v2039, %v2203
      %2221 = vrot.lane.b32.xlu0 %v262, 95
      %v2222 = vpop.permute.xlu0 %2221
      %2223 = vrot.lane.b32.xlu0 %v263, 95
      %v2224 = vpop.permute.xlu0 %2223
      %2225 = vrot.lane.b32.xlu0 %v278, 95
      %v2226 = vpop.permute.xlu0 %2225
      %vm2227 = vcmask 777216
      %v2228 = vsel %vm2227, %v2222, %v2224
      %v2229 = vsel %vm2227, %v2224, %v2226
      %v2232 = vsel %vm281, %v2228, 0.0
      %v2233 = vsel %vm282, %v2229, 0.0
      %s2234 = scalar_lea.vmem %s200, 704
      %v2235 = vld [vmem:[%s2234] sm:$0xff]
      %v2236 = vld [vmem:[%s2234 + $0x8] sm:$0xff]
      %v2237 = vld [vmem:[%s2234 + $0x10] sm:$0xff]
      %v2238 = vld [vmem:[%s2234 + $0x18] sm:$0xff]
      %v2239 = vld [vmem:[%s2234 + $0x20] sm:$0xff]
      %v2240 = vld [vmem:[%s2234 + $0x28] sm:$0xff]
      %v2241 = vld [vmem:[%s2234 + $0x30] sm:$0xff]
      %v2242 = vld [vmem:[%s2234 + $0x38] sm:$0xff]
      %v2244 = vsel %vm308, %v2235, 0
      %v2247 = vsel %vm308, %v2236, 0
      %v2250 = vsel %vm308, %v2237, 0
      %v2253 = vsel %vm308, %v2238, 0
      %v2256 = vsel %vm308, %v2239, 0
      %v2259 = vsel %vm308, %v2240, 0
      %v2262 = vsel %vm308, %v2241, 0
      %v2265 = vsel %vm308, %v2242, 0
      %v2268 = vsel %vm333, %v2232, 0
      %v2271 = vsel %vm333, %v2233, 0
      %2273 = vmatprep.subr.mxu0 0.0
      %2274 = vmatpush1.msra.mxu0 0.0
      %2275 = vmatprep.subr.mxu0 0.0
      %2276 = vmatpush1.msra.mxu0 0.0
      %2277 = vmatprep.subr.mxu0 0.0
      %2278 = vmatpush1.msra.mxu0 0.0
      %2279 = vmatprep.subr.mxu0 0.0
      %2280 = vmatpush1.msra.mxu0 0.0
      %2281 = vmatprep.subr.mxu0 0.0
      %2282 = vmatpush1.msra.mxu0 0.0
      %2283 = vmatprep.subr.mxu0 0.0
      %2284 = vmatpush1.msra.mxu0 0.0
      %2285 = vmatprep.subr.mxu0 0.0
      %2286 = vmatpush1.msra.mxu0 0.0
      %2287 = vmatprep.subr.mxu0 0.0
      %2288 = vmatpush1.msra.mxu0 0.0
      %2289 = vmatprep.subr.mxu0 0.0
      %2290 = vmatpush1.msra.mxu0 0.0
      %2291 = vmatprep.subr.mxu0 0.0
      %2292 = vmatpush1.msra.mxu0 0.0
      %2293 = vmatprep.subr.mxu0 0.0
      %2294 = vmatpush1.msra.mxu0 0.0
      %2295 = vmatprep.subr.mxu0 0.0
      %2296 = vmatpush1.msra.mxu0 0.0
      %2297 = vmatprep.subr.mxu0 0.0
      %2298 = vmatpush1.msra.mxu0 0.0
      %2299 = vmatprep.subr.mxu0 0.0
      %2300 = vmatpush1.msra.mxu0 0.0
      %2301 = vmatprep.subr.mxu0 0.0
      %2302 = vmatpush1.msra.mxu0 0.0
      %2303 = vmatprep.subr.mxu0 %v2271
      %2304 = vmatpush1.msra.mxu0 %v2268
      %2305 = vmatprep.subr.mxu0 0.0
      %2306 = vmatpush2.msra.mxu0 0.0
      %2307 = vmatprep.subr.mxu0 0.0
      %2308 = vmatpush2.msra.mxu0 0.0
      %2309 = vmatprep.subr.mxu0 0.0
      %2310 = vmatpush2.msra.mxu0 0.0
      %2311 = vmatprep.subr.mxu0 0.0
      %2312 = vmatpush2.msra.mxu0 0.0
      %2313 = vmatprep.subr.mxu0 0.0
      %2314 = vmatpush2.msra.mxu0 0.0
      %2315 = vmatprep.subr.mxu0 0.0
      %2316 = vmatpush2.msra.mxu0 0.0
      %2317 = vmatprep.subr.mxu0 0.0
      %2318 = vmatpush2.msra.mxu0 0.0
      %2319 = vmatprep.subr.mxu0 0.0
      %2320 = vmatpush2.msra.mxu0 0.0
      %2321 = vmatprep.subr.mxu0 0.0
      %2322 = vmatpush2.msra.mxu0 0.0
      %2323 = vmatprep.subr.mxu0 0.0
      %2324 = vmatpush2.msra.mxu0 0.0
      %2325 = vmatprep.subr.mxu0 0.0
      %2326 = vmatpush2.msra.mxu0 0.0
      %2327 = vmatprep.subr.mxu0 0.0
      %2328 = vmatpush2.msra.mxu0 0.0
      %2329 = vmatprep.subr.mxu0 0.0
      %2330 = vmatpush2.msra.mxu0 0.0
      %2331 = vmatprep.subr.mxu0 0.0
      %2332 = vmatpush2.msra.mxu0 0.0
      %2333 = vmatprep.subr.mxu0 0.0
      %2334 = vmatpush2.msra.mxu0 0.0
      %2335 = vmatprep.subr.mxu0 0.0
      %2336 = vmatpush2.msra.mxu0 0.0
      %2337 = vmatprep.mubr.f32.mxu0 0.0
      %2338 = vmatmul.mubr.f32.gmra.mxu0 %v2244
      %v2339 = vpop.f32.mrf.mxu0
      %v2340 = vadd.f32 0.0, %v2339
      %v2341 = vpop.f32.mrf.mxu0
      %v2342 = vadd.f32 0.0, %v2341
      %2343 = vmatprep.mubr.f32.mxu0 0.0
      %2344 = vmatmul.mubr.f32.gmra.mxu0 %v2247
      %v2345 = vpop.f32.mrf.mxu0
      %v2346 = vadd.f32 0.0, %v2345
      %v2347 = vpop.f32.mrf.mxu0
      %v2348 = vadd.f32 0.0, %v2347
      %2349 = vmatprep.mubr.f32.mxu0 0.0
      %2350 = vmatmul.mubr.f32.gmra.mxu0 %v2250
      %v2351 = vpop.f32.mrf.mxu0
      %v2352 = vadd.f32 0.0, %v2351
      %v2353 = vpop.f32.mrf.mxu0
      %v2354 = vadd.f32 0.0, %v2353
      %2355 = vmatprep.mubr.f32.mxu0 0.0
      %2356 = vmatmul.mubr.f32.gmra.mxu0 %v2253
      %v2357 = vpop.f32.mrf.mxu0
      %v2358 = vadd.f32 0.0, %v2357
      %v2359 = vpop.f32.mrf.mxu0
      %v2360 = vadd.f32 0.0, %v2359
      %2361 = vmatprep.mubr.f32.mxu0 0.0
      %2362 = vmatmul.mubr.f32.gmra.mxu0 %v2256
      %v2363 = vpop.f32.mrf.mxu0
      %v2364 = vadd.f32 0.0, %v2363
      %v2365 = vpop.f32.mrf.mxu0
      %v2366 = vadd.f32 0.0, %v2365
      %2367 = vmatprep.mubr.f32.mxu0 0.0
      %2368 = vmatmul.mubr.f32.gmra.mxu0 %v2259
      %v2369 = vpop.f32.mrf.mxu0
      %v2370 = vadd.f32 0.0, %v2369
      %v2371 = vpop.f32.mrf.mxu0
      %v2372 = vadd.f32 0.0, %v2371
      %2373 = vmatprep.mubr.f32.mxu0 0.0
      %2374 = vmatmul.mubr.f32.gmra.mxu0 %v2262
      %v2375 = vpop.f32.mrf.mxu0
      %v2376 = vadd.f32 0.0, %v2375
      %v2377 = vpop.f32.mrf.mxu0
      %v2378 = vadd.f32 0.0, %v2377
      %2379 = vmatprep.mubr.f32.mxu0 0.0
      %2380 = vmatmul.mubr.f32.gmra.mxu0 %v2265
      %v2381 = vpop.f32.mrf.mxu0
      %v2382 = vadd.f32 0.0, %v2381
      %v2383 = vpop.f32.mrf.mxu0
      %v2384 = vadd.f32 0.0, %v2383
      %2385 = vdwg.mxu0
      %v2386 = vadd.f32 %v2205, %v2340
      %v2387 = vadd.f32 %v2206, %v2342
      %v2388 = vadd.f32 %v2207, %v2346
      %v2389 = vadd.f32 %v2208, %v2348
      %v2390 = vadd.f32 %v2209, %v2352
      %v2391 = vadd.f32 %v2210, %v2354
      %v2392 = vadd.f32 %v2211, %v2358
      %v2393 = vadd.f32 %v2212, %v2360
      %v2394 = vadd.f32 %v2213, %v2364
      %v2395 = vadd.f32 %v2214, %v2366
      %v2396 = vadd.f32 %v2215, %v2370
      %v2397 = vadd.f32 %v2216, %v2372
      %v2398 = vadd.f32 %v2217, %v2376
      %v2399 = vadd.f32 %v2218, %v2378
      %v2400 = vadd.f32 %v2219, %v2382
      %v2401 = vadd.f32 %v2220, %v2384
      %s2402 = scalar_lea.vmem %s200, 768
      %v2403 = vld [vmem:[%s2402] sm:$0xff]
      %v2404 = vld [vmem:[%s2402 + $0x8] sm:$0xff]
      %v2405 = vld [vmem:[%s2402 + $0x10] sm:$0xff]
      %v2406 = vld [vmem:[%s2402 + $0x18] sm:$0xff]
      %v2407 = vld [vmem:[%s2402 + $0x20] sm:$0xff]
      %v2408 = vld [vmem:[%s2402 + $0x28] sm:$0xff]
      %v2409 = vld [vmem:[%s2402 + $0x30] sm:$0xff]
      %v2410 = vld [vmem:[%s2402 + $0x38] sm:$0xff]
      %2411 = vrot.lane.b32.xlu0 %v262, 94
      %v2412 = vpop.permute.xlu0 %2411
      %2413 = vrot.lane.b32.xlu0 %v263, 94
      %v2414 = vpop.permute.xlu0 %2413
      %2415 = vrot.lane.b32.xlu0 %v278, 94
      %v2416 = vpop.permute.xlu0 %2415
      %vm2417 = vcmask 769024
      %v2418 = vsel %vm2417, %v2412, %v2414
      %v2419 = vsel %vm2417, %v2414, %v2416
      %v2421 = vsel %vm308, %v2403, 0
      %v2424 = vsel %vm308, %v2404, 0
      %v2427 = vsel %vm308, %v2405, 0
      %v2430 = vsel %vm308, %v2406, 0
      %v2433 = vsel %vm308, %v2407, 0
      %v2436 = vsel %vm308, %v2408, 0
      %v2439 = vsel %vm308, %v2409, 0
      %v2442 = vsel %vm308, %v2410, 0
      %v2444 = vsel %vm333, %v2418, 0
      %v2446 = vsel %vm333, %v2419, 0
      %2448 = vmatprep.subr.mxu0 0.0
      %2449 = vmatpush1.msra.mxu0 0.0
      %2450 = vmatprep.subr.mxu0 0.0
      %2451 = vmatpush1.msra.mxu0 0.0
      %2452 = vmatprep.subr.mxu0 0.0
      %2453 = vmatpush1.msra.mxu0 0.0
      %2454 = vmatprep.subr.mxu0 0.0
      %2455 = vmatpush1.msra.mxu0 0.0
      %2456 = vmatprep.subr.mxu0 0.0
      %2457 = vmatpush1.msra.mxu0 0.0
      %2458 = vmatprep.subr.mxu0 0.0
      %2459 = vmatpush1.msra.mxu0 0.0
      %2460 = vmatprep.subr.mxu0 0.0
      %2461 = vmatpush1.msra.mxu0 0.0
      %2462 = vmatprep.subr.mxu0 0.0
      %2463 = vmatpush1.msra.mxu0 0.0
      %2464 = vmatprep.subr.mxu0 0.0
      %2465 = vmatpush1.msra.mxu0 0.0
      %2466 = vmatprep.subr.mxu0 0.0
      %2467 = vmatpush1.msra.mxu0 0.0
      %2468 = vmatprep.subr.mxu0 0.0
      %2469 = vmatpush1.msra.mxu0 0.0
      %2470 = vmatprep.subr.mxu0 0.0
      %2471 = vmatpush1.msra.mxu0 0.0
      %2472 = vmatprep.subr.mxu0 0.0
      %2473 = vmatpush1.msra.mxu0 0.0
      %2474 = vmatprep.subr.mxu0 0.0
      %2475 = vmatpush1.msra.mxu0 0.0
      %2476 = vmatprep.subr.mxu0 0.0
      %2477 = vmatpush1.msra.mxu0 0.0
      %2478 = vmatprep.subr.mxu0 %v2446
      %2479 = vmatpush1.msra.mxu0 %v2444
      %2480 = vmatprep.subr.mxu0 0.0
      %2481 = vmatpush2.msra.mxu0 0.0
      %2482 = vmatprep.subr.mxu0 0.0
      %2483 = vmatpush2.msra.mxu0 0.0
      %2484 = vmatprep.subr.mxu0 0.0
      %2485 = vmatpush2.msra.mxu0 0.0
      %2486 = vmatprep.subr.mxu0 0.0
      %2487 = vmatpush2.msra.mxu0 0.0
      %2488 = vmatprep.subr.mxu0 0.0
      %2489 = vmatpush2.msra.mxu0 0.0
      %2490 = vmatprep.subr.mxu0 0.0
      %2491 = vmatpush2.msra.mxu0 0.0
      %2492 = vmatprep.subr.mxu0 0.0
      %2493 = vmatpush2.msra.mxu0 0.0
      %2494 = vmatprep.subr.mxu0 0.0
      %2495 = vmatpush2.msra.mxu0 0.0
      %2496 = vmatprep.subr.mxu0 0.0
      %2497 = vmatpush2.msra.mxu0 0.0
      %2498 = vmatprep.subr.mxu0 0.0
      %2499 = vmatpush2.msra.mxu0 0.0
      %2500 = vmatprep.subr.mxu0 0.0
      %2501 = vmatpush2.msra.mxu0 0.0
      %2502 = vmatprep.subr.mxu0 0.0
      %2503 = vmatpush2.msra.mxu0 0.0
      %2504 = vmatprep.subr.mxu0 0.0
      %2505 = vmatpush2.msra.mxu0 0.0
      %2506 = vmatprep.subr.mxu0 0.0
      %2507 = vmatpush2.msra.mxu0 0.0
      %2508 = vmatprep.subr.mxu0 0.0
      %2509 = vmatpush2.msra.mxu0 0.0
      %2510 = vmatprep.subr.mxu0 0.0
      %2511 = vmatpush2.msra.mxu0 0.0
      %2512 = vmatprep.mubr.f32.mxu0 0.0
      %2513 = vmatmul.mubr.f32.gmra.mxu0 %v2421
      %v2514 = vpop.f32.mrf.mxu0
      %v2515 = vadd.f32 0.0, %v2514
      %v2516 = vpop.f32.mrf.mxu0
      %v2517 = vadd.f32 0.0, %v2516
      %2518 = vmatprep.mubr.f32.mxu0 0.0
      %2519 = vmatmul.mubr.f32.gmra.mxu0 %v2424
      %v2520 = vpop.f32.mrf.mxu0
      %v2521 = vadd.f32 0.0, %v2520
      %v2522 = vpop.f32.mrf.mxu0
      %v2523 = vadd.f32 0.0, %v2522
      %2524 = vmatprep.mubr.f32.mxu0 0.0
      %2525 = vmatmul.mubr.f32.gmra.mxu0 %v2427
      %v2526 = vpop.f32.mrf.mxu0
      %v2527 = vadd.f32 0.0, %v2526
      %v2528 = vpop.f32.mrf.mxu0
      %v2529 = vadd.f32 0.0, %v2528
      %2530 = vmatprep.mubr.f32.mxu0 0.0
      %2531 = vmatmul.mubr.f32.gmra.mxu0 %v2430
      %v2532 = vpop.f32.mrf.mxu0
      %v2533 = vadd.f32 0.0, %v2532
      %v2534 = vpop.f32.mrf.mxu0
      %v2535 = vadd.f32 0.0, %v2534
      %2536 = vmatprep.mubr.f32.mxu0 0.0
      %2537 = vmatmul.mubr.f32.gmra.mxu0 %v2433
      %v2538 = vpop.f32.mrf.mxu0
      %v2539 = vadd.f32 0.0, %v2538
      %v2540 = vpop.f32.mrf.mxu0
      %v2541 = vadd.f32 0.0, %v2540
      %2542 = vmatprep.mubr.f32.mxu0 0.0
      %2543 = vmatmul.mubr.f32.gmra.mxu0 %v2436
      %v2544 = vpop.f32.mrf.mxu0
      %v2545 = vadd.f32 0.0, %v2544
      %v2546 = vpop.f32.mrf.mxu0
      %v2547 = vadd.f32 0.0, %v2546
      %2548 = vmatprep.mubr.f32.mxu0 0.0
      %2549 = vmatmul.mubr.f32.gmra.mxu0 %v2439
      %v2550 = vpop.f32.mrf.mxu0
      %v2551 = vadd.f32 0.0, %v2550
      %v2552 = vpop.f32.mrf.mxu0
      %v2553 = vadd.f32 0.0, %v2552
      %2554 = vmatprep.mubr.f32.mxu0 0.0
      %2555 = vmatmul.mubr.f32.gmra.mxu0 %v2442
      %v2556 = vpop.f32.mrf.mxu0
      %v2557 = vadd.f32 0.0, %v2556
      %v2558 = vpop.f32.mrf.mxu0
      %v2559 = vadd.f32 0.0, %v2558
      %2560 = vdwg.mxu0
      %v2561 = vadd.f32 %v2386, %v2515
      %v2562 = vadd.f32 %v2387, %v2517
      %v2563 = vadd.f32 %v2388, %v2521
      %v2564 = vadd.f32 %v2389, %v2523
      %v2565 = vadd.f32 %v2390, %v2527
      %v2566 = vadd.f32 %v2391, %v2529
      %v2567 = vadd.f32 %v2392, %v2533
      %v2568 = vadd.f32 %v2393, %v2535
      %v2569 = vadd.f32 %v2394, %v2539
      %v2570 = vadd.f32 %v2395, %v2541
      %v2571 = vadd.f32 %v2396, %v2545
      %v2572 = vadd.f32 %v2397, %v2547
      %v2573 = vadd.f32 %v2398, %v2551
      %v2574 = vadd.f32 %v2399, %v2553
      %v2575 = vadd.f32 %v2400, %v2557
      %v2576 = vadd.f32 %v2401, %v2559
      %2577 = vrot.lane.b32.xlu0 %v262, 93
      %v2578 = vpop.permute.xlu0 %2577
      %2579 = vrot.lane.b32.xlu0 %v263, 93
      %v2580 = vpop.permute.xlu0 %2579
      %2581 = vrot.lane.b32.xlu0 %v278, 93
      %v2582 = vpop.permute.xlu0 %2581
      %vm2583 = vcmask 760832
      %v2584 = vsel %vm2583, %v2578, %v2580
      %v2585 = vsel %vm2583, %v2580, %v2582
      %v2588 = vsel %vm773, %v2584, 0.0
      %v2589 = vsel %vm774, %v2585, 0.0
      %s2590 = scalar_lea.vmem %s200, 832
      %v2591 = vld [vmem:[%s2590] sm:$0xff]
      %v2592 = vld [vmem:[%s2590 + $0x8] sm:$0xff]
      %v2593 = vld [vmem:[%s2590 + $0x10] sm:$0xff]
      %v2594 = vld [vmem:[%s2590 + $0x18] sm:$0xff]
      %v2595 = vld [vmem:[%s2590 + $0x20] sm:$0xff]
      %v2596 = vld [vmem:[%s2590 + $0x28] sm:$0xff]
      %v2597 = vld [vmem:[%s2590 + $0x30] sm:$0xff]
      %v2598 = vld [vmem:[%s2590 + $0x38] sm:$0xff]
      %v2600 = vsel %vm308, %v2591, 0
      %v2603 = vsel %vm308, %v2592, 0
      %v2606 = vsel %vm308, %v2593, 0
      %v2609 = vsel %vm308, %v2594, 0
      %v2612 = vsel %vm308, %v2595, 0
      %v2615 = vsel %vm308, %v2596, 0
      %v2618 = vsel %vm308, %v2597, 0
      %v2621 = vsel %vm308, %v2598, 0
      %v2624 = vsel %vm333, %v2588, 0
      %v2627 = vsel %vm333, %v2589, 0
      %2629 = vmatprep.subr.mxu0 0.0
      %2630 = vmatpush1.msra.mxu0 0.0
      %2631 = vmatprep.subr.mxu0 0.0
      %2632 = vmatpush1.msra.mxu0 0.0
      %2633 = vmatprep.subr.mxu0 0.0
      %2634 = vmatpush1.msra.mxu0 0.0
      %2635 = vmatprep.subr.mxu0 0.0
      %2636 = vmatpush1.msra.mxu0 0.0
      %2637 = vmatprep.subr.mxu0 0.0
      %2638 = vmatpush1.msra.mxu0 0.0
      %2639 = vmatprep.subr.mxu0 0.0
      %2640 = vmatpush1.msra.mxu0 0.0
      %2641 = vmatprep.subr.mxu0 0.0
      %2642 = vmatpush1.msra.mxu0 0.0
      %2643 = vmatprep.subr.mxu0 0.0
      %2644 = vmatpush1.msra.mxu0 0.0
      %2645 = vmatprep.subr.mxu0 0.0
      %2646 = vmatpush1.msra.mxu0 0.0
      %2647 = vmatprep.subr.mxu0 0.0
      %2648 = vmatpush1.msra.mxu0 0.0
      %2649 = vmatprep.subr.mxu0 0.0
      %2650 = vmatpush1.msra.mxu0 0.0
      %2651 = vmatprep.subr.mxu0 0.0
      %2652 = vmatpush1.msra.mxu0 0.0
      %2653 = vmatprep.subr.mxu0 0.0
      %2654 = vmatpush1.msra.mxu0 0.0
      %2655 = vmatprep.subr.mxu0 0.0
      %2656 = vmatpush1.msra.mxu0 0.0
      %2657 = vmatprep.subr.mxu0 0.0
      %2658 = vmatpush1.msra.mxu0 0.0
      %2659 = vmatprep.subr.mxu0 %v2627
      %2660 = vmatpush1.msra.mxu0 %v2624
      %2661 = vmatprep.subr.mxu0 0.0
      %2662 = vmatpush2.msra.mxu0 0.0
      %2663 = vmatprep.subr.mxu0 0.0
      %2664 = vmatpush2.msra.mxu0 0.0
      %2665 = vmatprep.subr.mxu0 0.0
      %2666 = vmatpush2.msra.mxu0 0.0
      %2667 = vmatprep.subr.mxu0 0.0
      %2668 = vmatpush2.msra.mxu0 0.0
      %2669 = vmatprep.subr.mxu0 0.0
      %2670 = vmatpush2.msra.mxu0 0.0
      %2671 = vmatprep.subr.mxu0 0.0
      %2672 = vmatpush2.msra.mxu0 0.0
      %2673 = vmatprep.subr.mxu0 0.0
      %2674 = vmatpush2.msra.mxu0 0.0
      %2675 = vmatprep.subr.mxu0 0.0
      %2676 = vmatpush2.msra.mxu0 0.0
      %2677 = vmatprep.subr.mxu0 0.0
      %2678 = vmatpush2.msra.mxu0 0.0
      %2679 = vmatprep.subr.mxu0 0.0
      %2680 = vmatpush2.msra.mxu0 0.0
      %2681 = vmatprep.subr.mxu0 0.0
      %2682 = vmatpush2.msra.mxu0 0.0
      %2683 = vmatprep.subr.mxu0 0.0
      %2684 = vmatpush2.msra.mxu0 0.0
      %2685 = vmatprep.subr.mxu0 0.0
      %2686 = vmatpush2.msra.mxu0 0.0
      %2687 = vmatprep.subr.mxu0 0.0
      %2688 = vmatpush2.msra.mxu0 0.0
      %2689 = vmatprep.subr.mxu0 0.0
      %2690 = vmatpush2.msra.mxu0 0.0
      %2691 = vmatprep.subr.mxu0 0.0
      %2692 = vmatpush2.msra.mxu0 0.0
      %2693 = vmatprep.mubr.f32.mxu0 0.0
      %2694 = vmatmul.mubr.f32.gmra.mxu0 %v2600
      %v2695 = vpop.f32.mrf.mxu0
      %v2696 = vadd.f32 0.0, %v2695
      %v2697 = vpop.f32.mrf.mxu0
      %v2698 = vadd.f32 0.0, %v2697
      %2699 = vmatprep.mubr.f32.mxu0 0.0
      %2700 = vmatmul.mubr.f32.gmra.mxu0 %v2603
      %v2701 = vpop.f32.mrf.mxu0
      %v2702 = vadd.f32 0.0, %v2701
      %v2703 = vpop.f32.mrf.mxu0
      %v2704 = vadd.f32 0.0, %v2703
      %2705 = vmatprep.mubr.f32.mxu0 0.0
      %2706 = vmatmul.mubr.f32.gmra.mxu0 %v2606
      %v2707 = vpop.f32.mrf.mxu0
      %v2708 = vadd.f32 0.0, %v2707
      %v2709 = vpop.f32.mrf.mxu0
      %v2710 = vadd.f32 0.0, %v2709
      %2711 = vmatprep.mubr.f32.mxu0 0.0
      %2712 = vmatmul.mubr.f32.gmra.mxu0 %v2609
      %v2713 = vpop.f32.mrf.mxu0
      %v2714 = vadd.f32 0.0, %v2713
      %v2715 = vpop.f32.mrf.mxu0
      %v2716 = vadd.f32 0.0, %v2715
      %2717 = vmatprep.mubr.f32.mxu0 0.0
      %2718 = vmatmul.mubr.f32.gmra.mxu0 %v2612
      %v2719 = vpop.f32.mrf.mxu0
      %v2720 = vadd.f32 0.0, %v2719
      %v2721 = vpop.f32.mrf.mxu0
      %v2722 = vadd.f32 0.0, %v2721
      %2723 = vmatprep.mubr.f32.mxu0 0.0
      %2724 = vmatmul.mubr.f32.gmra.mxu0 %v2615
      %v2725 = vpop.f32.mrf.mxu0
      %v2726 = vadd.f32 0.0, %v2725
      %v2727 = vpop.f32.mrf.mxu0
      %v2728 = vadd.f32 0.0, %v2727
      %2729 = vmatprep.mubr.f32.mxu0 0.0
      %2730 = vmatmul.mubr.f32.gmra.mxu0 %v2618
      %v2731 = vpop.f32.mrf.mxu0
      %v2732 = vadd.f32 0.0, %v2731
      %v2733 = vpop.f32.mrf.mxu0
      %v2734 = vadd.f32 0.0, %v2733
      %2735 = vmatprep.mubr.f32.mxu0 0.0
      %2736 = vmatmul.mubr.f32.gmra.mxu0 %v2621
      %v2737 = vpop.f32.mrf.mxu0
      %v2738 = vadd.f32 0.0, %v2737
      %v2739 = vpop.f32.mrf.mxu0
      %v2740 = vadd.f32 0.0, %v2739
      %2741 = vdwg.mxu0
      %v2742 = vadd.f32 %v2561, %v2696
      %v2743 = vadd.f32 %v2562, %v2698
      %v2744 = vadd.f32 %v2563, %v2702
      %v2745 = vadd.f32 %v2564, %v2704
      %v2746 = vadd.f32 %v2565, %v2708
      %v2747 = vadd.f32 %v2566, %v2710
      %v2748 = vadd.f32 %v2567, %v2714
      %v2749 = vadd.f32 %v2568, %v2716
      %v2750 = vadd.f32 %v2569, %v2720
      %v2751 = vadd.f32 %v2570, %v2722
      %v2752 = vadd.f32 %v2571, %v2726
      %v2753 = vadd.f32 %v2572, %v2728
      %v2754 = vadd.f32 %v2573, %v2732
      %v2755 = vadd.f32 %v2574, %v2734
      %v2756 = vadd.f32 %v2575, %v2738
      %v2757 = vadd.f32 %v2576, %v2740
      %2758 = vrot.lane.b32.xlu0 %v262, 92
      %v2759 = vpop.permute.xlu0 %2758
      %2760 = vrot.lane.b32.xlu0 %v263, 92
      %v2761 = vpop.permute.xlu0 %2760
      %2762 = vrot.lane.b32.xlu0 %v278, 92
      %v2763 = vpop.permute.xlu0 %2762
      %vm2764 = vcmask 752640
      %v2765 = vsel %vm2764, %v2759, %v2761
      %v2766 = vsel %vm2764, %v2761, %v2763
      %v2769 = vsel %vm958, %v2765, 0.0
      %v2770 = vsel %vm959, %v2766, 0.0
      %s2771 = scalar_lea.vmem %s200, 896
      %v2772 = vld [vmem:[%s2771] sm:$0xff]
      %v2773 = vld [vmem:[%s2771 + $0x8] sm:$0xff]
      %v2774 = vld [vmem:[%s2771 + $0x10] sm:$0xff]
      %v2775 = vld [vmem:[%s2771 + $0x18] sm:$0xff]
      %v2776 = vld [vmem:[%s2771 + $0x20] sm:$0xff]
      %v2777 = vld [vmem:[%s2771 + $0x28] sm:$0xff]
      %v2778 = vld [vmem:[%s2771 + $0x30] sm:$0xff]
      %v2779 = vld [vmem:[%s2771 + $0x38] sm:$0xff]
      %v2781 = vsel %vm308, %v2772, 0
      %v2784 = vsel %vm308, %v2773, 0
      %v2787 = vsel %vm308, %v2774, 0
      %v2790 = vsel %vm308, %v2775, 0
      %v2793 = vsel %vm308, %v2776, 0
      %v2796 = vsel %vm308, %v2777, 0
      %v2799 = vsel %vm308, %v2778, 0
      %v2802 = vsel %vm308, %v2779, 0
      %v2805 = vsel %vm333, %v2769, 0
      %v2808 = vsel %vm333, %v2770, 0
      %2810 = vmatprep.subr.mxu0 0.0
      %2811 = vmatpush1.msra.mxu0 0.0
      %2812 = vmatprep.subr.mxu0 0.0
      %2813 = vmatpush1.msra.mxu0 0.0
      %2814 = vmatprep.subr.mxu0 0.0
      %2815 = vmatpush1.msra.mxu0 0.0
      %2816 = vmatprep.subr.mxu0 0.0
      %2817 = vmatpush1.msra.mxu0 0.0
      %2818 = vmatprep.subr.mxu0 0.0
      %2819 = vmatpush1.msra.mxu0 0.0
      %2820 = vmatprep.subr.mxu0 0.0
      %2821 = vmatpush1.msra.mxu0 0.0
      %2822 = vmatprep.subr.mxu0 0.0
      %2823 = vmatpush1.msra.mxu0 0.0
      %2824 = vmatprep.subr.mxu0 0.0
      %2825 = vmatpush1.msra.mxu0 0.0
      %2826 = vmatprep.subr.mxu0 0.0
      %2827 = vmatpush1.msra.mxu0 0.0
      %2828 = vmatprep.subr.mxu0 0.0
      %2829 = vmatpush1.msra.mxu0 0.0
      %2830 = vmatprep.subr.mxu0 0.0
      %2831 = vmatpush1.msra.mxu0 0.0
      %2832 = vmatprep.subr.mxu0 0.0
      %2833 = vmatpush1.msra.mxu0 0.0
      %2834 = vmatprep.subr.mxu0 0.0
      %2835 = vmatpush1.msra.mxu0 0.0
      %2836 = vmatprep.subr.mxu0 0.0
      %2837 = vmatpush1.msra.mxu0 0.0
      %2838 = vmatprep.subr.mxu0 0.0
      %2839 = vmatpush1.msra.mxu0 0.0
      %2840 = vmatprep.subr.mxu0 %v2808
      %2841 = vmatpush1.msra.mxu0 %v2805
      %2842 = vmatprep.subr.mxu0 0.0
      %2843 = vmatpush2.msra.mxu0 0.0
      %2844 = vmatprep.subr.mxu0 0.0
      %2845 = vmatpush2.msra.mxu0 0.0
      %2846 = vmatprep.subr.mxu0 0.0
      %2847 = vmatpush2.msra.mxu0 0.0
      %2848 = vmatprep.subr.mxu0 0.0
      %2849 = vmatpush2.msra.mxu0 0.0
      %2850 = vmatprep.subr.mxu0 0.0
      %2851 = vmatpush2.msra.mxu0 0.0
      %2852 = vmatprep.subr.mxu0 0.0
      %2853 = vmatpush2.msra.mxu0 0.0
      %2854 = vmatprep.subr.mxu0 0.0
      %2855 = vmatpush2.msra.mxu0 0.0
      %2856 = vmatprep.subr.mxu0 0.0
      %2857 = vmatpush2.msra.mxu0 0.0
      %2858 = vmatprep.subr.mxu0 0.0
      %2859 = vmatpush2.msra.mxu0 0.0
      %2860 = vmatprep.subr.mxu0 0.0
      %2861 = vmatpush2.msra.mxu0 0.0
      %2862 = vmatprep.subr.mxu0 0.0
      %2863 = vmatpush2.msra.mxu0 0.0
      %2864 = vmatprep.subr.mxu0 0.0
      %2865 = vmatpush2.msra.mxu0 0.0
      %2866 = vmatprep.subr.mxu0 0.0
      %2867 = vmatpush2.msra.mxu0 0.0
      %2868 = vmatprep.subr.mxu0 0.0
      %2869 = vmatpush2.msra.mxu0 0.0
      %2870 = vmatprep.subr.mxu0 0.0
      %2871 = vmatpush2.msra.mxu0 0.0
      %2872 = vmatprep.subr.mxu0 0.0
      %2873 = vmatpush2.msra.mxu0 0.0
      %2874 = vmatprep.mubr.f32.mxu0 0.0
      %2875 = vmatmul.mubr.f32.gmra.mxu0 %v2781
      %v2876 = vpop.f32.mrf.mxu0
      %v2877 = vadd.f32 0.0, %v2876
      %v2878 = vpop.f32.mrf.mxu0
      %v2879 = vadd.f32 0.0, %v2878
      %2880 = vmatprep.mubr.f32.mxu0 0.0
      %2881 = vmatmul.mubr.f32.gmra.mxu0 %v2784
      %v2882 = vpop.f32.mrf.mxu0
      %v2883 = vadd.f32 0.0, %v2882
      %v2884 = vpop.f32.mrf.mxu0
      %v2885 = vadd.f32 0.0, %v2884
      %2886 = vmatprep.mubr.f32.mxu0 0.0
      %2887 = vmatmul.mubr.f32.gmra.mxu0 %v2787
      %v2888 = vpop.f32.mrf.mxu0
      %v2889 = vadd.f32 0.0, %v2888
      %v2890 = vpop.f32.mrf.mxu0
      %v2891 = vadd.f32 0.0, %v2890
      %2892 = vmatprep.mubr.f32.mxu0 0.0
      %2893 = vmatmul.mubr.f32.gmra.mxu0 %v2790
      %v2894 = vpop.f32.mrf.mxu0
      %v2895 = vadd.f32 0.0, %v2894
      %v2896 = vpop.f32.mrf.mxu0
      %v2897 = vadd.f32 0.0, %v2896
      %2898 = vmatprep.mubr.f32.mxu0 0.0
      %2899 = vmatmul.mubr.f32.gmra.mxu0 %v2793
      %v2900 = vpop.f32.mrf.mxu0
      %v2901 = vadd.f32 0.0, %v2900
      %v2902 = vpop.f32.mrf.mxu0
      %v2903 = vadd.f32 0.0, %v2902
      %2904 = vmatprep.mubr.f32.mxu0 0.0
      %2905 = vmatmul.mubr.f32.gmra.mxu0 %v2796
      %v2906 = vpop.f32.mrf.mxu0
      %v2907 = vadd.f32 0.0, %v2906
      %v2908 = vpop.f32.mrf.mxu0
      %v2909 = vadd.f32 0.0, %v2908
      %2910 = vmatprep.mubr.f32.mxu0 0.0
      %2911 = vmatmul.mubr.f32.gmra.mxu0 %v2799
      %v2912 = vpop.f32.mrf.mxu0
      %v2913 = vadd.f32 0.0, %v2912
      %v2914 = vpop.f32.mrf.mxu0
      %v2915 = vadd.f32 0.0, %v2914
      %2916 = vmatprep.mubr.f32.mxu0 0.0
      %2917 = vmatmul.mubr.f32.gmra.mxu0 %v2802
      %v2918 = vpop.f32.mrf.mxu0
      %v2919 = vadd.f32 0.0, %v2918
      %v2920 = vpop.f32.mrf.mxu0
      %v2921 = vadd.f32 0.0, %v2920
      %2922 = vdwg.mxu0
      %v2923 = vadd.f32 %v2742, %v2877
      %v2924 = vadd.f32 %v2743, %v2879
      %v2925 = vadd.f32 %v2744, %v2883
      %v2926 = vadd.f32 %v2745, %v2885
      %v2927 = vadd.f32 %v2746, %v2889
      %v2928 = vadd.f32 %v2747, %v2891
      %v2929 = vadd.f32 %v2748, %v2895
      %v2930 = vadd.f32 %v2749, %v2897
      %v2931 = vadd.f32 %v2750, %v2901
      %v2932 = vadd.f32 %v2751, %v2903
      %v2933 = vadd.f32 %v2752, %v2907
      %v2934 = vadd.f32 %v2753, %v2909
      %v2935 = vadd.f32 %v2754, %v2913
      %v2936 = vadd.f32 %v2755, %v2915
      %v2937 = vadd.f32 %v2756, %v2919
      %v2938 = vadd.f32 %v2757, %v2921
      %2939 = vrot.lane.b32.xlu0 %v262, 80
      %v2940 = vpop.permute.xlu0 %2939
      %2941 = vrot.lane.b32.xlu0 %v263, 80
      %v2942 = vpop.permute.xlu0 %2941
      %2943 = vrot.lane.b32.xlu0 %v278, 80
      %v2944 = vpop.permute.xlu0 %2943
      %vm2945 = vcmask 654336
      %v2946 = vsel %vm2945, %v2940, %v2942
      %v2947 = vsel %vm2945, %v2942, %v2944
      %v2950 = vsel %vm266, %v2946, 0.0
      %v2951 = vsel %vm267, %v2947, 0.0
      %s2952 = scalar_lea.vmem %s200, 960
      %v2953 = vld [vmem:[%s2952] sm:$0xff]
      %v2954 = vld [vmem:[%s2952 + $0x8] sm:$0xff]
      %v2955 = vld [vmem:[%s2952 + $0x10] sm:$0xff]
      %v2956 = vld [vmem:[%s2952 + $0x18] sm:$0xff]
      %v2957 = vld [vmem:[%s2952 + $0x20] sm:$0xff]
      %v2958 = vld [vmem:[%s2952 + $0x28] sm:$0xff]
      %v2959 = vld [vmem:[%s2952 + $0x30] sm:$0xff]
      %v2960 = vld [vmem:[%s2952 + $0x38] sm:$0xff]
      %v2962 = vsel %vm308, %v2953, 0
      %v2965 = vsel %vm308, %v2954, 0
      %v2968 = vsel %vm308, %v2955, 0
      %v2971 = vsel %vm308, %v2956, 0
      %v2974 = vsel %vm308, %v2957, 0
      %v2977 = vsel %vm308, %v2958, 0
      %v2980 = vsel %vm308, %v2959, 0
      %v2983 = vsel %vm308, %v2960, 0
      %v2986 = vsel %vm333, %v2950, 0
      %v2989 = vsel %vm333, %v2951, 0
      %2991 = vmatprep.subr.mxu0 0.0
      %2992 = vmatpush1.msra.mxu0 0.0
      %2993 = vmatprep.subr.mxu0 0.0
      %2994 = vmatpush1.msra.mxu0 0.0
      %2995 = vmatprep.subr.mxu0 0.0
      %2996 = vmatpush1.msra.mxu0 0.0
      %2997 = vmatprep.subr.mxu0 0.0
      %2998 = vmatpush1.msra.mxu0 0.0
      %2999 = vmatprep.subr.mxu0 0.0
      %3000 = vmatpush1.msra.mxu0 0.0
      %3001 = vmatprep.subr.mxu0 0.0
      %3002 = vmatpush1.msra.mxu0 0.0
      %3003 = vmatprep.subr.mxu0 0.0
      %3004 = vmatpush1.msra.mxu0 0.0
      %3005 = vmatprep.subr.mxu0 0.0
      %3006 = vmatpush1.msra.mxu0 0.0
      %3007 = vmatprep.subr.mxu0 0.0
      %3008 = vmatpush1.msra.mxu0 0.0
      %3009 = vmatprep.subr.mxu0 0.0
      %3010 = vmatpush1.msra.mxu0 0.0
      %3011 = vmatprep.subr.mxu0 0.0
      %3012 = vmatpush1.msra.mxu0 0.0
      %3013 = vmatprep.subr.mxu0 0.0
      %3014 = vmatpush1.msra.mxu0 0.0
      %3015 = vmatprep.subr.mxu0 0.0
      %3016 = vmatpush1.msra.mxu0 0.0
      %3017 = vmatprep.subr.mxu0 0.0
      %3018 = vmatpush1.msra.mxu0 0.0
      %3019 = vmatprep.subr.mxu0 0.0
      %3020 = vmatpush1.msra.mxu0 0.0
      %3021 = vmatprep.subr.mxu0 %v2989
      %3022 = vmatpush1.msra.mxu0 %v2986
      %3023 = vmatprep.subr.mxu0 0.0
      %3024 = vmatpush2.msra.mxu0 0.0
      %3025 = vmatprep.subr.mxu0 0.0
      %3026 = vmatpush2.msra.mxu0 0.0
      %3027 = vmatprep.subr.mxu0 0.0
      %3028 = vmatpush2.msra.mxu0 0.0
      %3029 = vmatprep.subr.mxu0 0.0
      %3030 = vmatpush2.msra.mxu0 0.0
      %3031 = vmatprep.subr.mxu0 0.0
      %3032 = vmatpush2.msra.mxu0 0.0
      %3033 = vmatprep.subr.mxu0 0.0
      %3034 = vmatpush2.msra.mxu0 0.0
      %3035 = vmatprep.subr.mxu0 0.0
      %3036 = vmatpush2.msra.mxu0 0.0
      %3037 = vmatprep.subr.mxu0 0.0
      %3038 = vmatpush2.msra.mxu0 0.0
      %3039 = vmatprep.subr.mxu0 0.0
      %3040 = vmatpush2.msra.mxu0 0.0
      %3041 = vmatprep.subr.mxu0 0.0
      %3042 = vmatpush2.msra.mxu0 0.0
      %3043 = vmatprep.subr.mxu0 0.0
      %3044 = vmatpush2.msra.mxu0 0.0
      %3045 = vmatprep.subr.mxu0 0.0
      %3046 = vmatpush2.msra.mxu0 0.0
      %3047 = vmatprep.subr.mxu0 0.0
      %3048 = vmatpush2.msra.mxu0 0.0
      %3049 = vmatprep.subr.mxu0 0.0
      %3050 = vmatpush2.msra.mxu0 0.0
      %3051 = vmatprep.subr.mxu0 0.0
      %3052 = vmatpush2.msra.mxu0 0.0
      %3053 = vmatprep.subr.mxu0 0.0
      %3054 = vmatpush2.msra.mxu0 0.0
      %3055 = vmatprep.mubr.f32.mxu0 0.0
      %3056 = vmatmul.mubr.f32.gmra.mxu0 %v2962
      %v3057 = vpop.f32.mrf.mxu0
      %v3058 = vadd.f32 0.0, %v3057
      %v3059 = vpop.f32.mrf.mxu0
      %v3060 = vadd.f32 0.0, %v3059
      %3061 = vmatprep.mubr.f32.mxu0 0.0
      %3062 = vmatmul.mubr.f32.gmra.mxu0 %v2965
      %v3063 = vpop.f32.mrf.mxu0
      %v3064 = vadd.f32 0.0, %v3063
      %v3065 = vpop.f32.mrf.mxu0
      %v3066 = vadd.f32 0.0, %v3065
      %3067 = vmatprep.mubr.f32.mxu0 0.0
      %3068 = vmatmul.mubr.f32.gmra.mxu0 %v2968
      %v3069 = vpop.f32.mrf.mxu0
      %v3070 = vadd.f32 0.0, %v3069
      %v3071 = vpop.f32.mrf.mxu0
      %v3072 = vadd.f32 0.0, %v3071
      %3073 = vmatprep.mubr.f32.mxu0 0.0
      %3074 = vmatmul.mubr.f32.gmra.mxu0 %v2971
      %v3075 = vpop.f32.mrf.mxu0
      %v3076 = vadd.f32 0.0, %v3075
      %v3077 = vpop.f32.mrf.mxu0
      %v3078 = vadd.f32 0.0, %v3077
      %3079 = vmatprep.mubr.f32.mxu0 0.0
      %3080 = vmatmul.mubr.f32.gmra.mxu0 %v2974
      %v3081 = vpop.f32.mrf.mxu0
      %v3082 = vadd.f32 0.0, %v3081
      %v3083 = vpop.f32.mrf.mxu0
      %v3084 = vadd.f32 0.0, %v3083
      %3085 = vmatprep.mubr.f32.mxu0 0.0
      %3086 = vmatmul.mubr.f32.gmra.mxu0 %v2977
      %v3087 = vpop.f32.mrf.mxu0
      %v3088 = vadd.f32 0.0, %v3087
      %v3089 = vpop.f32.mrf.mxu0
      %v3090 = vadd.f32 0.0, %v3089
      %3091 = vmatprep.mubr.f32.mxu0 0.0
      %3092 = vmatmul.mubr.f32.gmra.mxu0 %v2980
      %v3093 = vpop.f32.mrf.mxu0
      %v3094 = vadd.f32 0.0, %v3093
      %v3095 = vpop.f32.mrf.mxu0
      %v3096 = vadd.f32 0.0, %v3095
      %3097 = vmatprep.mubr.f32.mxu0 0.0
      %3098 = vmatmul.mubr.f32.gmra.mxu0 %v2983
      %v3099 = vpop.f32.mrf.mxu0
      %v3100 = vadd.f32 0.0, %v3099
      %v3101 = vpop.f32.mrf.mxu0
      %v3102 = vadd.f32 0.0, %v3101
      %3103 = vdwg.mxu0
      %v3104 = vadd.f32 %v2923, %v3058
      %v3105 = vadd.f32 %v2924, %v3060
      %v3106 = vadd.f32 %v2925, %v3064
      %v3107 = vadd.f32 %v2926, %v3066
      %v3108 = vadd.f32 %v2927, %v3070
      %v3109 = vadd.f32 %v2928, %v3072
      %v3110 = vadd.f32 %v2929, %v3076
      %v3111 = vadd.f32 %v2930, %v3078
      %v3112 = vadd.f32 %v2931, %v3082
      %v3113 = vadd.f32 %v2932, %v3084
      %v3114 = vadd.f32 %v2933, %v3088
      %v3115 = vadd.f32 %v2934, %v3090
      %v3116 = vadd.f32 %v2935, %v3094
      %v3117 = vadd.f32 %v2936, %v3096
      %v3118 = vadd.f32 %v2937, %v3100
      %v3119 = vadd.f32 %v2938, %v3102
      %3120 = vrot.lane.b32.xlu0 %v262, 79
      %v3121 = vpop.permute.xlu0 %3120
      %3122 = vrot.lane.b32.xlu0 %v263, 79
      %v3123 = vpop.permute.xlu0 %3122
      %3124 = vrot.lane.b32.xlu0 %v278, 79
      %v3125 = vpop.permute.xlu0 %3124
      %vm3126 = vcmask 646144
      %v3127 = vsel %vm3126, %v3121, %v3123
      %v3128 = vsel %vm3126, %v3123, %v3125
      %v3131 = vsel %vm281, %v3127, 0.0
      %v3132 = vsel %vm282, %v3128, 0.0
      %s3133 = scalar_lea.vmem %s200, 1024
      %v3134 = vld [vmem:[%s3133] sm:$0xff]
      %v3135 = vld [vmem:[%s3133 + $0x8] sm:$0xff]
      %v3136 = vld [vmem:[%s3133 + $0x10] sm:$0xff]
      %v3137 = vld [vmem:[%s3133 + $0x18] sm:$0xff]
      %v3138 = vld [vmem:[%s3133 + $0x20] sm:$0xff]
      %v3139 = vld [vmem:[%s3133 + $0x28] sm:$0xff]
      %v3140 = vld [vmem:[%s3133 + $0x30] sm:$0xff]
      %v3141 = vld [vmem:[%s3133 + $0x38] sm:$0xff]
      %v3143 = vsel %vm308, %v3134, 0
      %v3146 = vsel %vm308, %v3135, 0
      %v3149 = vsel %vm308, %v3136, 0
      %v3152 = vsel %vm308, %v3137, 0
      %v3155 = vsel %vm308, %v3138, 0
      %v3158 = vsel %vm308, %v3139, 0
      %v3161 = vsel %vm308, %v3140, 0
      %v3164 = vsel %vm308, %v3141, 0
      %v3167 = vsel %vm333, %v3131, 0
      %v3170 = vsel %vm333, %v3132, 0
      %3172 = vmatprep.subr.mxu0 0.0
      %3173 = vmatpush1.msra.mxu0 0.0
      %3174 = vmatprep.subr.mxu0 0.0
      %3175 = vmatpush1.msra.mxu0 0.0
      %3176 = vmatprep.subr.mxu0 0.0
      %3177 = vmatpush1.msra.mxu0 0.0
      %3178 = vmatprep.subr.mxu0 0.0
      %3179 = vmatpush1.msra.mxu0 0.0
      %3180 = vmatprep.subr.mxu0 0.0
      %3181 = vmatpush1.msra.mxu0 0.0
      %3182 = vmatprep.subr.mxu0 0.0
      %3183 = vmatpush1.msra.mxu0 0.0
      %3184 = vmatprep.subr.mxu0 0.0
      %3185 = vmatpush1.msra.mxu0 0.0
      %3186 = vmatprep.subr.mxu0 0.0
      %3187 = vmatpush1.msra.mxu0 0.0
      %3188 = vmatprep.subr.mxu0 0.0
      %3189 = vmatpush1.msra.mxu0 0.0
      %3190 = vmatprep.subr.mxu0 0.0
      %3191 = vmatpush1.msra.mxu0 0.0
      %3192 = vmatprep.subr.mxu0 0.0
      %3193 = vmatpush1.msra.mxu0 0.0
      %3194 = vmatprep.subr.mxu0 0.0
      %3195 = vmatpush1.msra.mxu0 0.0
      %3196 = vmatprep.subr.mxu0 0.0
      %3197 = vmatpush1.msra.mxu0 0.0
      %3198 = vmatprep.subr.mxu0 0.0
      %3199 = vmatpush1.msra.mxu0 0.0
      %3200 = vmatprep.subr.mxu0 0.0
      %3201 = vmatpush1.msra.mxu0 0.0
      %3202 = vmatprep.subr.mxu0 %v3170
      %3203 = vmatpush1.msra.mxu0 %v3167
      %3204 = vmatprep.subr.mxu0 0.0
      %3205 = vmatpush2.msra.mxu0 0.0
      %3206 = vmatprep.subr.mxu0 0.0
      %3207 = vmatpush2.msra.mxu0 0.0
      %3208 = vmatprep.subr.mxu0 0.0
      %3209 = vmatpush2.msra.mxu0 0.0
      %3210 = vmatprep.subr.mxu0 0.0
      %3211 = vmatpush2.msra.mxu0 0.0
      %3212 = vmatprep.subr.mxu0 0.0
      %3213 = vmatpush2.msra.mxu0 0.0
      %3214 = vmatprep.subr.mxu0 0.0
      %3215 = vmatpush2.msra.mxu0 0.0
      %3216 = vmatprep.subr.mxu0 0.0
      %3217 = vmatpush2.msra.mxu0 0.0
      %3218 = vmatprep.subr.mxu0 0.0
      %3219 = vmatpush2.msra.mxu0 0.0
      %3220 = vmatprep.subr.mxu0 0.0
      %3221 = vmatpush2.msra.mxu0 0.0
      %3222 = vmatprep.subr.mxu0 0.0
      %3223 = vmatpush2.msra.mxu0 0.0
      %3224 = vmatprep.subr.mxu0 0.0
      %3225 = vmatpush2.msra.mxu0 0.0
      %3226 = vmatprep.subr.mxu0 0.0
      %3227 = vmatpush2.msra.mxu0 0.0
      %3228 = vmatprep.subr.mxu0 0.0
      %3229 = vmatpush2.msra.mxu0 0.0
      %3230 = vmatprep.subr.mxu0 0.0
      %3231 = vmatpush2.msra.mxu0 0.0
      %3232 = vmatprep.subr.mxu0 0.0
      %3233 = vmatpush2.msra.mxu0 0.0
      %3234 = vmatprep.subr.mxu0 0.0
      %3235 = vmatpush2.msra.mxu0 0.0
      %3236 = vmatprep.mubr.f32.mxu0 0.0
      %3237 = vmatmul.mubr.f32.gmra.mxu0 %v3143
      %v3238 = vpop.f32.mrf.mxu0
      %v3239 = vadd.f32 0.0, %v3238
      %v3240 = vpop.f32.mrf.mxu0
      %v3241 = vadd.f32 0.0, %v3240
      %3242 = vmatprep.mubr.f32.mxu0 0.0
      %3243 = vmatmul.mubr.f32.gmra.mxu0 %v3146
      %v3244 = vpop.f32.mrf.mxu0
      %v3245 = vadd.f32 0.0, %v3244
      %v3246 = vpop.f32.mrf.mxu0
      %v3247 = vadd.f32 0.0, %v3246
      %3248 = vmatprep.mubr.f32.mxu0 0.0
      %3249 = vmatmul.mubr.f32.gmra.mxu0 %v3149
      %v3250 = vpop.f32.mrf.mxu0
      %v3251 = vadd.f32 0.0, %v3250
      %v3252 = vpop.f32.mrf.mxu0
      %v3253 = vadd.f32 0.0, %v3252
      %3254 = vmatprep.mubr.f32.mxu0 0.0
      %3255 = vmatmul.mubr.f32.gmra.mxu0 %v3152
      %v3256 = vpop.f32.mrf.mxu0
      %v3257 = vadd.f32 0.0, %v3256
      %v3258 = vpop.f32.mrf.mxu0
      %v3259 = vadd.f32 0.0, %v3258
      %3260 = vmatprep.mubr.f32.mxu0 0.0
      %3261 = vmatmul.mubr.f32.gmra.mxu0 %v3155
      %v3262 = vpop.f32.mrf.mxu0
      %v3263 = vadd.f32 0.0, %v3262
      %v3264 = vpop.f32.mrf.mxu0
      %v3265 = vadd.f32 0.0, %v3264
      %3266 = vmatprep.mubr.f32.mxu0 0.0
      %3267 = vmatmul.mubr.f32.gmra.mxu0 %v3158
      %v3268 = vpop.f32.mrf.mxu0
      %v3269 = vadd.f32 0.0, %v3268
      %v3270 = vpop.f32.mrf.mxu0
      %v3271 = vadd.f32 0.0, %v3270
      %3272 = vmatprep.mubr.f32.mxu0 0.0
      %3273 = vmatmul.mubr.f32.gmra.mxu0 %v3161
      %v3274 = vpop.f32.mrf.mxu0
      %v3275 = vadd.f32 0.0, %v3274
      %v3276 = vpop.f32.mrf.mxu0
      %v3277 = vadd.f32 0.0, %v3276
      %3278 = vmatprep.mubr.f32.mxu0 0.0
      %3279 = vmatmul.mubr.f32.gmra.mxu0 %v3164
      %v3280 = vpop.f32.mrf.mxu0
      %v3281 = vadd.f32 0.0, %v3280
      %v3282 = vpop.f32.mrf.mxu0
      %v3283 = vadd.f32 0.0, %v3282
      %3284 = vdwg.mxu0
      %v3285 = vadd.f32 %v3104, %v3239
      %v3286 = vadd.f32 %v3105, %v3241
      %v3287 = vadd.f32 %v3106, %v3245
      %v3288 = vadd.f32 %v3107, %v3247
      %v3289 = vadd.f32 %v3108, %v3251
      %v3290 = vadd.f32 %v3109, %v3253
      %v3291 = vadd.f32 %v3110, %v3257
      %v3292 = vadd.f32 %v3111, %v3259
      %v3293 = vadd.f32 %v3112, %v3263
      %v3294 = vadd.f32 %v3113, %v3265
      %v3295 = vadd.f32 %v3114, %v3269
      %v3296 = vadd.f32 %v3115, %v3271
      %v3297 = vadd.f32 %v3116, %v3275
      %v3298 = vadd.f32 %v3117, %v3277
      %v3299 = vadd.f32 %v3118, %v3281
      %v3300 = vadd.f32 %v3119, %v3283
      %s3301 = scalar_lea.vmem %s200, 1088
      %v3302 = vld [vmem:[%s3301] sm:$0xff]
      %v3303 = vld [vmem:[%s3301 + $0x8] sm:$0xff]
      %v3304 = vld [vmem:[%s3301 + $0x10] sm:$0xff]
      %v3305 = vld [vmem:[%s3301 + $0x18] sm:$0xff]
      %v3306 = vld [vmem:[%s3301 + $0x20] sm:$0xff]
      %v3307 = vld [vmem:[%s3301 + $0x28] sm:$0xff]
      %v3308 = vld [vmem:[%s3301 + $0x30] sm:$0xff]
      %v3309 = vld [vmem:[%s3301 + $0x38] sm:$0xff]
      %3310 = vrot.lane.b32.xlu0 %v262, 78
      %v3311 = vpop.permute.xlu0 %3310
      %3312 = vrot.lane.b32.xlu0 %v263, 78
      %v3313 = vpop.permute.xlu0 %3312
      %3314 = vrot.lane.b32.xlu0 %v278, 78
      %v3315 = vpop.permute.xlu0 %3314
      %vm3316 = vcmask 637952
      %v3317 = vsel %vm3316, %v3311, %v3313
      %v3318 = vsel %vm3316, %v3313, %v3315
      %v3320 = vsel %vm308, %v3302, 0
      %v3323 = vsel %vm308, %v3303, 0
      %v3326 = vsel %vm308, %v3304, 0
      %v3329 = vsel %vm308, %v3305, 0
      %v3332 = vsel %vm308, %v3306, 0
      %v3335 = vsel %vm308, %v3307, 0
      %v3338 = vsel %vm308, %v3308, 0
      %v3341 = vsel %vm308, %v3309, 0
      %v3343 = vsel %vm333, %v3317, 0
      %v3345 = vsel %vm333, %v3318, 0
      %3347 = vmatprep.subr.mxu0 0.0
      %3348 = vmatpush1.msra.mxu0 0.0
      %3349 = vmatprep.subr.mxu0 0.0
      %3350 = vmatpush1.msra.mxu0 0.0
      %3351 = vmatprep.subr.mxu0 0.0
      %3352 = vmatpush1.msra.mxu0 0.0
      %3353 = vmatprep.subr.mxu0 0.0
      %3354 = vmatpush1.msra.mxu0 0.0
      %3355 = vmatprep.subr.mxu0 0.0
      %3356 = vmatpush1.msra.mxu0 0.0
      %3357 = vmatprep.subr.mxu0 0.0
      %3358 = vmatpush1.msra.mxu0 0.0
      %3359 = vmatprep.subr.mxu0 0.0
      %3360 = vmatpush1.msra.mxu0 0.0
      %3361 = vmatprep.subr.mxu0 0.0
      %3362 = vmatpush1.msra.mxu0 0.0
      %3363 = vmatprep.subr.mxu0 0.0
      %3364 = vmatpush1.msra.mxu0 0.0
      %3365 = vmatprep.subr.mxu0 0.0
      %3366 = vmatpush1.msra.mxu0 0.0
      %3367 = vmatprep.subr.mxu0 0.0
      %3368 = vmatpush1.msra.mxu0 0.0
      %3369 = vmatprep.subr.mxu0 0.0
      %3370 = vmatpush1.msra.mxu0 0.0
      %3371 = vmatprep.subr.mxu0 0.0
      %3372 = vmatpush1.msra.mxu0 0.0
      %3373 = vmatprep.subr.mxu0 0.0
      %3374 = vmatpush1.msra.mxu0 0.0
      %3375 = vmatprep.subr.mxu0 0.0
      %3376 = vmatpush1.msra.mxu0 0.0
      %3377 = vmatprep.subr.mxu0 %v3345
      %3378 = vmatpush1.msra.mxu0 %v3343
      %3379 = vmatprep.subr.mxu0 0.0
      %3380 = vmatpush2.msra.mxu0 0.0
      %3381 = vmatprep.subr.mxu0 0.0
      %3382 = vmatpush2.msra.mxu0 0.0
      %3383 = vmatprep.subr.mxu0 0.0
      %3384 = vmatpush2.msra.mxu0 0.0
      %3385 = vmatprep.subr.mxu0 0.0
      %3386 = vmatpush2.msra.mxu0 0.0
      %3387 = vmatprep.subr.mxu0 0.0
      %3388 = vmatpush2.msra.mxu0 0.0
      %3389 = vmatprep.subr.mxu0 0.0
      %3390 = vmatpush2.msra.mxu0 0.0
      %3391 = vmatprep.subr.mxu0 0.0
      %3392 = vmatpush2.msra.mxu0 0.0
      %3393 = vmatprep.subr.mxu0 0.0
      %3394 = vmatpush2.msra.mxu0 0.0
      %3395 = vmatprep.subr.mxu0 0.0
      %3396 = vmatpush2.msra.mxu0 0.0
      %3397 = vmatprep.subr.mxu0 0.0
      %3398 = vmatpush2.msra.mxu0 0.0
      %3399 = vmatprep.subr.mxu0 0.0
      %3400 = vmatpush2.msra.mxu0 0.0
      %3401 = vmatprep.subr.mxu0 0.0
      %3402 = vmatpush2.msra.mxu0 0.0
      %3403 = vmatprep.subr.mxu0 0.0
      %3404 = vmatpush2.msra.mxu0 0.0
      %3405 = vmatprep.subr.mxu0 0.0
      %3406 = vmatpush2.msra.mxu0 0.0
      %3407 = vmatprep.subr.mxu0 0.0
      %3408 = vmatpush2.msra.mxu0 0.0
      %3409 = vmatprep.subr.mxu0 0.0
      %3410 = vmatpush2.msra.mxu0 0.0
      %3411 = vmatprep.mubr.f32.mxu0 0.0
      %3412 = vmatmul.mubr.f32.gmra.mxu0 %v3320
      %v3413 = vpop.f32.mrf.mxu0
      %v3414 = vadd.f32 0.0, %v3413
      %v3415 = vpop.f32.mrf.mxu0
      %v3416 = vadd.f32 0.0, %v3415
      %3417 = vmatprep.mubr.f32.mxu0 0.0
      %3418 = vmatmul.mubr.f32.gmra.mxu0 %v3323
      %v3419 = vpop.f32.mrf.mxu0
      %v3420 = vadd.f32 0.0, %v3419
      %v3421 = vpop.f32.mrf.mxu0
      %v3422 = vadd.f32 0.0, %v3421
      %3423 = vmatprep.mubr.f32.mxu0 0.0
      %3424 = vmatmul.mubr.f32.gmra.mxu0 %v3326
      %v3425 = vpop.f32.mrf.mxu0
      %v3426 = vadd.f32 0.0, %v3425
      %v3427 = vpop.f32.mrf.mxu0
      %v3428 = vadd.f32 0.0, %v3427
      %3429 = vmatprep.mubr.f32.mxu0 0.0
      %3430 = vmatmul.mubr.f32.gmra.mxu0 %v3329
      %v3431 = vpop.f32.mrf.mxu0
      %v3432 = vadd.f32 0.0, %v3431
      %v3433 = vpop.f32.mrf.mxu0
      %v3434 = vadd.f32 0.0, %v3433
      %3435 = vmatprep.mubr.f32.mxu0 0.0
      %3436 = vmatmul.mubr.f32.gmra.mxu0 %v3332
      %v3437 = vpop.f32.mrf.mxu0
      %v3438 = vadd.f32 0.0, %v3437
      %v3439 = vpop.f32.mrf.mxu0
      %v3440 = vadd.f32 0.0, %v3439
      %3441 = vmatprep.mubr.f32.mxu0 0.0
      %3442 = vmatmul.mubr.f32.gmra.mxu0 %v3335
      %v3443 = vpop.f32.mrf.mxu0
      %v3444 = vadd.f32 0.0, %v3443
      %v3445 = vpop.f32.mrf.mxu0
      %v3446 = vadd.f32 0.0, %v3445
      %3447 = vmatprep.mubr.f32.mxu0 0.0
      %3448 = vmatmul.mubr.f32.gmra.mxu0 %v3338
      %v3449 = vpop.f32.mrf.mxu0
      %v3450 = vadd.f32 0.0, %v3449
      %v3451 = vpop.f32.mrf.mxu0
      %v3452 = vadd.f32 0.0, %v3451
      %3453 = vmatprep.mubr.f32.mxu0 0.0
      %3454 = vmatmul.mubr.f32.gmra.mxu0 %v3341
      %v3455 = vpop.f32.mrf.mxu0
      %v3456 = vadd.f32 0.0, %v3455
      %v3457 = vpop.f32.mrf.mxu0
      %v3458 = vadd.f32 0.0, %v3457
      %3459 = vdwg.mxu0
      %v3460 = vadd.f32 %v3285, %v3414
      %v3461 = vadd.f32 %v3286, %v3416
      %v3462 = vadd.f32 %v3287, %v3420
      %v3463 = vadd.f32 %v3288, %v3422
      %v3464 = vadd.f32 %v3289, %v3426
      %v3465 = vadd.f32 %v3290, %v3428
      %v3466 = vadd.f32 %v3291, %v3432
      %v3467 = vadd.f32 %v3292, %v3434
      %v3468 = vadd.f32 %v3293, %v3438
      %v3469 = vadd.f32 %v3294, %v3440
      %v3470 = vadd.f32 %v3295, %v3444
      %v3471 = vadd.f32 %v3296, %v3446
      %v3472 = vadd.f32 %v3297, %v3450
      %v3473 = vadd.f32 %v3298, %v3452
      %v3474 = vadd.f32 %v3299, %v3456
      %v3475 = vadd.f32 %v3300, %v3458
      %3476 = vrot.lane.b32.xlu0 %v262, 77
      %v3477 = vpop.permute.xlu0 %3476
      %3478 = vrot.lane.b32.xlu0 %v263, 77
      %v3479 = vpop.permute.xlu0 %3478
      %3480 = vrot.lane.b32.xlu0 %v278, 77
      %v3481 = vpop.permute.xlu0 %3480
      %vm3482 = vcmask 629760
      %v3483 = vsel %vm3482, %v3477, %v3479
      %v3484 = vsel %vm3482, %v3479, %v3481
      %v3487 = vsel %vm773, %v3483, 0.0
      %v3488 = vsel %vm774, %v3484, 0.0
      %s3489 = scalar_lea.vmem %s200, 1152
      %v3490 = vld [vmem:[%s3489] sm:$0xff]
      %v3491 = vld [vmem:[%s3489 + $0x8] sm:$0xff]
      %v3492 = vld [vmem:[%s3489 + $0x10] sm:$0xff]
      %v3493 = vld [vmem:[%s3489 + $0x18] sm:$0xff]
      %v3494 = vld [vmem:[%s3489 + $0x20] sm:$0xff]
      %v3495 = vld [vmem:[%s3489 + $0x28] sm:$0xff]
      %v3496 = vld [vmem:[%s3489 + $0x30] sm:$0xff]
      %v3497 = vld [vmem:[%s3489 + $0x38] sm:$0xff]
      %v3499 = vsel %vm308, %v3490, 0
      %v3502 = vsel %vm308, %v3491, 0
      %v3505 = vsel %vm308, %v3492, 0
      %v3508 = vsel %vm308, %v3493, 0
      %v3511 = vsel %vm308, %v3494, 0
      %v3514 = vsel %vm308, %v3495, 0
      %v3517 = vsel %vm308, %v3496, 0
      %v3520 = vsel %vm308, %v3497, 0
      %v3523 = vsel %vm333, %v3487, 0
      %v3526 = vsel %vm333, %v3488, 0
      %3528 = vmatprep.subr.mxu0 0.0
      %3529 = vmatpush1.msra.mxu0 0.0
      %3530 = vmatprep.subr.mxu0 0.0
      %3531 = vmatpush1.msra.mxu0 0.0
      %3532 = vmatprep.subr.mxu0 0.0
      %3533 = vmatpush1.msra.mxu0 0.0
      %3534 = vmatprep.subr.mxu0 0.0
      %3535 = vmatpush1.msra.mxu0 0.0
      %3536 = vmatprep.subr.mxu0 0.0
      %3537 = vmatpush1.msra.mxu0 0.0
      %3538 = vmatprep.subr.mxu0 0.0
      %3539 = vmatpush1.msra.mxu0 0.0
      %3540 = vmatprep.subr.mxu0 0.0
      %3541 = vmatpush1.msra.mxu0 0.0
      %3542 = vmatprep.subr.mxu0 0.0
      %3543 = vmatpush1.msra.mxu0 0.0
      %3544 = vmatprep.subr.mxu0 0.0
      %3545 = vmatpush1.msra.mxu0 0.0
      %3546 = vmatprep.subr.mxu0 0.0
      %3547 = vmatpush1.msra.mxu0 0.0
      %3548 = vmatprep.subr.mxu0 0.0
      %3549 = vmatpush1.msra.mxu0 0.0
      %3550 = vmatprep.subr.mxu0 0.0
      %3551 = vmatpush1.msra.mxu0 0.0
      %3552 = vmatprep.subr.mxu0 0.0
      %3553 = vmatpush1.msra.mxu0 0.0
      %3554 = vmatprep.subr.mxu0 0.0
      %3555 = vmatpush1.msra.mxu0 0.0
      %3556 = vmatprep.subr.mxu0 0.0
      %3557 = vmatpush1.msra.mxu0 0.0
      %3558 = vmatprep.subr.mxu0 %v3526
      %3559 = vmatpush1.msra.mxu0 %v3523
      %3560 = vmatprep.subr.mxu0 0.0
      %3561 = vmatpush2.msra.mxu0 0.0
      %3562 = vmatprep.subr.mxu0 0.0
      %3563 = vmatpush2.msra.mxu0 0.0
      %3564 = vmatprep.subr.mxu0 0.0
      %3565 = vmatpush2.msra.mxu0 0.0
      %3566 = vmatprep.subr.mxu0 0.0
      %3567 = vmatpush2.msra.mxu0 0.0
      %3568 = vmatprep.subr.mxu0 0.0
      %3569 = vmatpush2.msra.mxu0 0.0
      %3570 = vmatprep.subr.mxu0 0.0
      %3571 = vmatpush2.msra.mxu0 0.0
      %3572 = vmatprep.subr.mxu0 0.0
      %3573 = vmatpush2.msra.mxu0 0.0
      %3574 = vmatprep.subr.mxu0 0.0
      %3575 = vmatpush2.msra.mxu0 0.0
      %3576 = vmatprep.subr.mxu0 0.0
      %3577 = vmatpush2.msra.mxu0 0.0
      %3578 = vmatprep.subr.mxu0 0.0
      %3579 = vmatpush2.msra.mxu0 0.0
      %3580 = vmatprep.subr.mxu0 0.0
      %3581 = vmatpush2.msra.mxu0 0.0
      %3582 = vmatprep.subr.mxu0 0.0
      %3583 = vmatpush2.msra.mxu0 0.0
      %3584 = vmatprep.subr.mxu0 0.0
      %3585 = vmatpush2.msra.mxu0 0.0
      %3586 = vmatprep.subr.mxu0 0.0
      %3587 = vmatpush2.msra.mxu0 0.0
      %3588 = vmatprep.subr.mxu0 0.0
      %3589 = vmatpush2.msra.mxu0 0.0
      %3590 = vmatprep.subr.mxu0 0.0
      %3591 = vmatpush2.msra.mxu0 0.0
      %3592 = vmatprep.mubr.f32.mxu0 0.0
      %3593 = vmatmul.mubr.f32.gmra.mxu0 %v3499
      %v3594 = vpop.f32.mrf.mxu0
      %v3595 = vadd.f32 0.0, %v3594
      %v3596 = vpop.f32.mrf.mxu0
      %v3597 = vadd.f32 0.0, %v3596
      %3598 = vmatprep.mubr.f32.mxu0 0.0
      %3599 = vmatmul.mubr.f32.gmra.mxu0 %v3502
      %v3600 = vpop.f32.mrf.mxu0
      %v3601 = vadd.f32 0.0, %v3600
      %v3602 = vpop.f32.mrf.mxu0
      %v3603 = vadd.f32 0.0, %v3602
      %3604 = vmatprep.mubr.f32.mxu0 0.0
      %3605 = vmatmul.mubr.f32.gmra.mxu0 %v3505
      %v3606 = vpop.f32.mrf.mxu0
      %v3607 = vadd.f32 0.0, %v3606
      %v3608 = vpop.f32.mrf.mxu0
      %v3609 = vadd.f32 0.0, %v3608
      %3610 = vmatprep.mubr.f32.mxu0 0.0
      %3611 = vmatmul.mubr.f32.gmra.mxu0 %v3508
      %v3612 = vpop.f32.mrf.mxu0
      %v3613 = vadd.f32 0.0, %v3612
      %v3614 = vpop.f32.mrf.mxu0
      %v3615 = vadd.f32 0.0, %v3614
      %3616 = vmatprep.mubr.f32.mxu0 0.0
      %3617 = vmatmul.mubr.f32.gmra.mxu0 %v3511
      %v3618 = vpop.f32.mrf.mxu0
      %v3619 = vadd.f32 0.0, %v3618
      %v3620 = vpop.f32.mrf.mxu0
      %v3621 = vadd.f32 0.0, %v3620
      %3622 = vmatprep.mubr.f32.mxu0 0.0
      %3623 = vmatmul.mubr.f32.gmra.mxu0 %v3514
      %v3624 = vpop.f32.mrf.mxu0
      %v3625 = vadd.f32 0.0, %v3624
      %v3626 = vpop.f32.mrf.mxu0
      %v3627 = vadd.f32 0.0, %v3626
      %3628 = vmatprep.mubr.f32.mxu0 0.0
      %3629 = vmatmul.mubr.f32.gmra.mxu0 %v3517
      %v3630 = vpop.f32.mrf.mxu0
      %v3631 = vadd.f32 0.0, %v3630
      %v3632 = vpop.f32.mrf.mxu0
      %v3633 = vadd.f32 0.0, %v3632
      %3634 = vmatprep.mubr.f32.mxu0 0.0
      %3635 = vmatmul.mubr.f32.gmra.mxu0 %v3520
      %v3636 = vpop.f32.mrf.mxu0
      %v3637 = vadd.f32 0.0, %v3636
      %v3638 = vpop.f32.mrf.mxu0
      %v3639 = vadd.f32 0.0, %v3638
      %3640 = vdwg.mxu0
      %v3641 = vadd.f32 %v3460, %v3595
      %v3642 = vadd.f32 %v3461, %v3597
      %v3643 = vadd.f32 %v3462, %v3601
      %v3644 = vadd.f32 %v3463, %v3603
      %v3645 = vadd.f32 %v3464, %v3607
      %v3646 = vadd.f32 %v3465, %v3609
      %v3647 = vadd.f32 %v3466, %v3613
      %v3648 = vadd.f32 %v3467, %v3615
      %v3649 = vadd.f32 %v3468, %v3619
      %v3650 = vadd.f32 %v3469, %v3621
      %v3651 = vadd.f32 %v3470, %v3625
      %v3652 = vadd.f32 %v3471, %v3627
      %v3653 = vadd.f32 %v3472, %v3631
      %v3654 = vadd.f32 %v3473, %v3633
      %v3655 = vadd.f32 %v3474, %v3637
      %v3656 = vadd.f32 %v3475, %v3639
      %3657 = vrot.lane.b32.xlu0 %v262, 76
      %v3658 = vpop.permute.xlu0 %3657
      %3659 = vrot.lane.b32.xlu0 %v263, 76
      %v3660 = vpop.permute.xlu0 %3659
      %3661 = vrot.lane.b32.xlu0 %v278, 76
      %v3662 = vpop.permute.xlu0 %3661
      %vm3663 = vcmask 621568
      %v3664 = vsel %vm3663, %v3658, %v3660
      %v3665 = vsel %vm3663, %v3660, %v3662
      %v3668 = vsel %vm958, %v3664, 0.0
      %v3669 = vsel %vm959, %v3665, 0.0
      %s3670 = scalar_lea.vmem %s200, 1216
      %v3671 = vld [vmem:[%s3670] sm:$0xff]
      %v3672 = vld [vmem:[%s3670 + $0x8] sm:$0xff]
      %v3673 = vld [vmem:[%s3670 + $0x10] sm:$0xff]
      %v3674 = vld [vmem:[%s3670 + $0x18] sm:$0xff]
      %v3675 = vld [vmem:[%s3670 + $0x20] sm:$0xff]
      %v3676 = vld [vmem:[%s3670 + $0x28] sm:$0xff]
      %v3677 = vld [vmem:[%s3670 + $0x30] sm:$0xff]
      %v3678 = vld [vmem:[%s3670 + $0x38] sm:$0xff]
      %v3680 = vsel %vm308, %v3671, 0
      %v3683 = vsel %vm308, %v3672, 0
      %v3686 = vsel %vm308, %v3673, 0
      %v3689 = vsel %vm308, %v3674, 0
      %v3692 = vsel %vm308, %v3675, 0
      %v3695 = vsel %vm308, %v3676, 0
      %v3698 = vsel %vm308, %v3677, 0
      %v3701 = vsel %vm308, %v3678, 0
      %v3704 = vsel %vm333, %v3668, 0
      %v3707 = vsel %vm333, %v3669, 0
      %3709 = vmatprep.subr.mxu0 0.0
      %3710 = vmatpush1.msra.mxu0 0.0
      %3711 = vmatprep.subr.mxu0 0.0
      %3712 = vmatpush1.msra.mxu0 0.0
      %3713 = vmatprep.subr.mxu0 0.0
      %3714 = vmatpush1.msra.mxu0 0.0
      %3715 = vmatprep.subr.mxu0 0.0
      %3716 = vmatpush1.msra.mxu0 0.0
      %3717 = vmatprep.subr.mxu0 0.0
      %3718 = vmatpush1.msra.mxu0 0.0
      %3719 = vmatprep.subr.mxu0 0.0
      %3720 = vmatpush1.msra.mxu0 0.0
      %3721 = vmatprep.subr.mxu0 0.0
      %3722 = vmatpush1.msra.mxu0 0.0
      %3723 = vmatprep.subr.mxu0 0.0
      %3724 = vmatpush1.msra.mxu0 0.0
      %3725 = vmatprep.subr.mxu0 0.0
      %3726 = vmatpush1.msra.mxu0 0.0
      %3727 = vmatprep.subr.mxu0 0.0
      %3728 = vmatpush1.msra.mxu0 0.0
      %3729 = vmatprep.subr.mxu0 0.0
      %3730 = vmatpush1.msra.mxu0 0.0
      %3731 = vmatprep.subr.mxu0 0.0
      %3732 = vmatpush1.msra.mxu0 0.0
      %3733 = vmatprep.subr.mxu0 0.0
      %3734 = vmatpush1.msra.mxu0 0.0
      %3735 = vmatprep.subr.mxu0 0.0
      %3736 = vmatpush1.msra.mxu0 0.0
      %3737 = vmatprep.subr.mxu0 0.0
      %3738 = vmatpush1.msra.mxu0 0.0
      %3739 = vmatprep.subr.mxu0 %v3707
      %3740 = vmatpush1.msra.mxu0 %v3704
      %3741 = vmatprep.subr.mxu0 0.0
      %3742 = vmatpush2.msra.mxu0 0.0
      %3743 = vmatprep.subr.mxu0 0.0
      %3744 = vmatpush2.msra.mxu0 0.0
      %3745 = vmatprep.subr.mxu0 0.0
      %3746 = vmatpush2.msra.mxu0 0.0
      %3747 = vmatprep.subr.mxu0 0.0
      %3748 = vmatpush2.msra.mxu0 0.0
      %3749 = vmatprep.subr.mxu0 0.0
      %3750 = vmatpush2.msra.mxu0 0.0
      %3751 = vmatprep.subr.mxu0 0.0
      %3752 = vmatpush2.msra.mxu0 0.0
      %3753 = vmatprep.subr.mxu0 0.0
      %3754 = vmatpush2.msra.mxu0 0.0
      %3755 = vmatprep.subr.mxu0 0.0
      %3756 = vmatpush2.msra.mxu0 0.0
      %3757 = vmatprep.subr.mxu0 0.0
      %3758 = vmatpush2.msra.mxu0 0.0
      %3759 = vmatprep.subr.mxu0 0.0
      %3760 = vmatpush2.msra.mxu0 0.0
      %3761 = vmatprep.subr.mxu0 0.0
      %3762 = vmatpush2.msra.mxu0 0.0
      %3763 = vmatprep.subr.mxu0 0.0
      %3764 = vmatpush2.msra.mxu0 0.0
      %3765 = vmatprep.subr.mxu0 0.0
      %3766 = vmatpush2.msra.mxu0 0.0
      %3767 = vmatprep.subr.mxu0 0.0
      %3768 = vmatpush2.msra.mxu0 0.0
      %3769 = vmatprep.subr.mxu0 0.0
      %3770 = vmatpush2.msra.mxu0 0.0
      %3771 = vmatprep.subr.mxu0 0.0
      %3772 = vmatpush2.msra.mxu0 0.0
      %3773 = vmatprep.mubr.f32.mxu0 0.0
      %3774 = vmatmul.mubr.f32.gmra.mxu0 %v3680
      %v3775 = vpop.f32.mrf.mxu0
      %v3776 = vadd.f32 0.0, %v3775
      %v3777 = vpop.f32.mrf.mxu0
      %v3778 = vadd.f32 0.0, %v3777
      %3779 = vmatprep.mubr.f32.mxu0 0.0
      %3780 = vmatmul.mubr.f32.gmra.mxu0 %v3683
      %v3781 = vpop.f32.mrf.mxu0
      %v3782 = vadd.f32 0.0, %v3781
      %v3783 = vpop.f32.mrf.mxu0
      %v3784 = vadd.f32 0.0, %v3783
      %3785 = vmatprep.mubr.f32.mxu0 0.0
      %3786 = vmatmul.mubr.f32.gmra.mxu0 %v3686
      %v3787 = vpop.f32.mrf.mxu0
      %v3788 = vadd.f32 0.0, %v3787
      %v3789 = vpop.f32.mrf.mxu0
      %v3790 = vadd.f32 0.0, %v3789
      %3791 = vmatprep.mubr.f32.mxu0 0.0
      %3792 = vmatmul.mubr.f32.gmra.mxu0 %v3689
      %v3793 = vpop.f32.mrf.mxu0
      %v3794 = vadd.f32 0.0, %v3793
      %v3795 = vpop.f32.mrf.mxu0
      %v3796 = vadd.f32 0.0, %v3795
      %3797 = vmatprep.mubr.f32.mxu0 0.0
      %3798 = vmatmul.mubr.f32.gmra.mxu0 %v3692
      %v3799 = vpop.f32.mrf.mxu0
      %v3800 = vadd.f32 0.0, %v3799
      %v3801 = vpop.f32.mrf.mxu0
      %v3802 = vadd.f32 0.0, %v3801
      %3803 = vmatprep.mubr.f32.mxu0 0.0
      %3804 = vmatmul.mubr.f32.gmra.mxu0 %v3695
      %v3805 = vpop.f32.mrf.mxu0
      %v3806 = vadd.f32 0.0, %v3805
      %v3807 = vpop.f32.mrf.mxu0
      %v3808 = vadd.f32 0.0, %v3807
      %3809 = vmatprep.mubr.f32.mxu0 0.0
      %3810 = vmatmul.mubr.f32.gmra.mxu0 %v3698
      %v3811 = vpop.f32.mrf.mxu0
      %v3812 = vadd.f32 0.0, %v3811
      %v3813 = vpop.f32.mrf.mxu0
      %v3814 = vadd.f32 0.0, %v3813
      %3815 = vmatprep.mubr.f32.mxu0 0.0
      %3816 = vmatmul.mubr.f32.gmra.mxu0 %v3701
      %v3817 = vpop.f32.mrf.mxu0
      %v3818 = vadd.f32 0.0, %v3817
      %v3819 = vpop.f32.mrf.mxu0
      %v3820 = vadd.f32 0.0, %v3819
      %3821 = vdwg.mxu0
      %v3822 = vadd.f32 %v3641, %v3776
      %v3823 = vadd.f32 %v3642, %v3778
      %v3824 = vadd.f32 %v3643, %v3782
      %v3825 = vadd.f32 %v3644, %v3784
      %v3826 = vadd.f32 %v3645, %v3788
      %v3827 = vadd.f32 %v3646, %v3790
      %v3828 = vadd.f32 %v3647, %v3794
      %v3829 = vadd.f32 %v3648, %v3796
      %v3830 = vadd.f32 %v3649, %v3800
      %v3831 = vadd.f32 %v3650, %v3802
      %v3832 = vadd.f32 %v3651, %v3806
      %v3833 = vadd.f32 %v3652, %v3808
      %v3834 = vadd.f32 %v3653, %v3812
      %v3835 = vadd.f32 %v3654, %v3814
      %v3836 = vadd.f32 %v3655, %v3818
      %v3837 = vadd.f32 %v3656, %v3820
      %3838 = vrot.lane.b32.xlu0 %v262, 64
      %v3839 = vpop.permute.xlu0 %3838
      %3840 = vrot.lane.b32.xlu0 %v263, 64
      %v3841 = vpop.permute.xlu0 %3840
      %3842 = vrot.lane.b32.xlu0 %v278, 64
      %v3843 = vpop.permute.xlu0 %3842
      %vm3844 = vcmask 523264
      %v3845 = vsel %vm3844, %v3839, %v3841
      %v3846 = vsel %vm3844, %v3841, %v3843
      %v3849 = vsel %vm266, %v3845, 0.0
      %v3850 = vsel %vm267, %v3846, 0.0
      %s3851 = scalar_lea.vmem %s200, 1280
      %v3852 = vld [vmem:[%s3851] sm:$0xff]
      %v3853 = vld [vmem:[%s3851 + $0x8] sm:$0xff]
      %v3854 = vld [vmem:[%s3851 + $0x10] sm:$0xff]
      %v3855 = vld [vmem:[%s3851 + $0x18] sm:$0xff]
      %v3856 = vld [vmem:[%s3851 + $0x20] sm:$0xff]
      %v3857 = vld [vmem:[%s3851 + $0x28] sm:$0xff]
      %v3858 = vld [vmem:[%s3851 + $0x30] sm:$0xff]
      %v3859 = vld [vmem:[%s3851 + $0x38] sm:$0xff]
      %v3861 = vsel %vm308, %v3852, 0
      %v3864 = vsel %vm308, %v3853, 0
      %v3867 = vsel %vm308, %v3854, 0
      %v3870 = vsel %vm308, %v3855, 0
      %v3873 = vsel %vm308, %v3856, 0
      %v3876 = vsel %vm308, %v3857, 0
      %v3879 = vsel %vm308, %v3858, 0
      %v3882 = vsel %vm308, %v3859, 0
      %v3885 = vsel %vm333, %v3849, 0
      %v3888 = vsel %vm333, %v3850, 0
      %3890 = vmatprep.subr.mxu0 0.0
      %3891 = vmatpush1.msra.mxu0 0.0
      %3892 = vmatprep.subr.mxu0 0.0
      %3893 = vmatpush1.msra.mxu0 0.0
      %3894 = vmatprep.subr.mxu0 0.0
      %3895 = vmatpush1.msra.mxu0 0.0
      %3896 = vmatprep.subr.mxu0 0.0
      %3897 = vmatpush1.msra.mxu0 0.0
      %3898 = vmatprep.subr.mxu0 0.0
      %3899 = vmatpush1.msra.mxu0 0.0
      %3900 = vmatprep.subr.mxu0 0.0
      %3901 = vmatpush1.msra.mxu0 0.0
      %3902 = vmatprep.subr.mxu0 0.0
      %3903 = vmatpush1.msra.mxu0 0.0
      %3904 = vmatprep.subr.mxu0 0.0
      %3905 = vmatpush1.msra.mxu0 0.0
      %3906 = vmatprep.subr.mxu0 0.0
      %3907 = vmatpush1.msra.mxu0 0.0
      %3908 = vmatprep.subr.mxu0 0.0
      %3909 = vmatpush1.msra.mxu0 0.0
      %3910 = vmatprep.subr.mxu0 0.0
      %3911 = vmatpush1.msra.mxu0 0.0
      %3912 = vmatprep.subr.mxu0 0.0
      %3913 = vmatpush1.msra.mxu0 0.0
      %3914 = vmatprep.subr.mxu0 0.0
      %3915 = vmatpush1.msra.mxu0 0.0
      %3916 = vmatprep.subr.mxu0 0.0
      %3917 = vmatpush1.msra.mxu0 0.0
      %3918 = vmatprep.subr.mxu0 0.0
      %3919 = vmatpush1.msra.mxu0 0.0
      %3920 = vmatprep.subr.mxu0 %v3888
      %3921 = vmatpush1.msra.mxu0 %v3885
      %3922 = vmatprep.subr.mxu0 0.0
      %3923 = vmatpush2.msra.mxu0 0.0
      %3924 = vmatprep.subr.mxu0 0.0
      %3925 = vmatpush2.msra.mxu0 0.0
      %3926 = vmatprep.subr.mxu0 0.0
      %3927 = vmatpush2.msra.mxu0 0.0
      %3928 = vmatprep.subr.mxu0 0.0
      %3929 = vmatpush2.msra.mxu0 0.0
      %3930 = vmatprep.subr.mxu0 0.0
      %3931 = vmatpush2.msra.mxu0 0.0
      %3932 = vmatprep.subr.mxu0 0.0
      %3933 = vmatpush2.msra.mxu0 0.0
      %3934 = vmatprep.subr.mxu0 0.0
      %3935 = vmatpush2.msra.mxu0 0.0
      %3936 = vmatprep.subr.mxu0 0.0
      %3937 = vmatpush2.msra.mxu0 0.0
      %3938 = vmatprep.subr.mxu0 0.0
      %3939 = vmatpush2.msra.mxu0 0.0
      %3940 = vmatprep.subr.mxu0 0.0
      %3941 = vmatpush2.msra.mxu0 0.0
      %3942 = vmatprep.subr.mxu0 0.0
      %3943 = vmatpush2.msra.mxu0 0.0
      %3944 = vmatprep.subr.mxu0 0.0
      %3945 = vmatpush2.msra.mxu0 0.0
      %3946 = vmatprep.subr.mxu0 0.0
      %3947 = vmatpush2.msra.mxu0 0.0
      %3948 = vmatprep.subr.mxu0 0.0
      %3949 = vmatpush2.msra.mxu0 0.0
      %3950 = vmatprep.subr.mxu0 0.0
      %3951 = vmatpush2.msra.mxu0 0.0
      %3952 = vmatprep.subr.mxu0 0.0
      %3953 = vmatpush2.msra.mxu0 0.0
      %3954 = vmatprep.mubr.f32.mxu0 0.0
      %3955 = vmatmul.mubr.f32.gmra.mxu0 %v3861
      %v3956 = vpop.f32.mrf.mxu0
      %v3957 = vadd.f32 0.0, %v3956
      %v3958 = vpop.f32.mrf.mxu0
      %v3959 = vadd.f32 0.0, %v3958
      %3960 = vmatprep.mubr.f32.mxu0 0.0
      %3961 = vmatmul.mubr.f32.gmra.mxu0 %v3864
      %v3962 = vpop.f32.mrf.mxu0
      %v3963 = vadd.f32 0.0, %v3962
      %v3964 = vpop.f32.mrf.mxu0
      %v3965 = vadd.f32 0.0, %v3964
      %3966 = vmatprep.mubr.f32.mxu0 0.0
      %3967 = vmatmul.mubr.f32.gmra.mxu0 %v3867
      %v3968 = vpop.f32.mrf.mxu0
      %v3969 = vadd.f32 0.0, %v3968
      %v3970 = vpop.f32.mrf.mxu0
      %v3971 = vadd.f32 0.0, %v3970
      %3972 = vmatprep.mubr.f32.mxu0 0.0
      %3973 = vmatmul.mubr.f32.gmra.mxu0 %v3870
      %v3974 = vpop.f32.mrf.mxu0
      %v3975 = vadd.f32 0.0, %v3974
      %v3976 = vpop.f32.mrf.mxu0
      %v3977 = vadd.f32 0.0, %v3976
      %3978 = vmatprep.mubr.f32.mxu0 0.0
      %3979 = vmatmul.mubr.f32.gmra.mxu0 %v3873
      %v3980 = vpop.f32.mrf.mxu0
      %v3981 = vadd.f32 0.0, %v3980
      %v3982 = vpop.f32.mrf.mxu0
      %v3983 = vadd.f32 0.0, %v3982
      %3984 = vmatprep.mubr.f32.mxu0 0.0
      %3985 = vmatmul.mubr.f32.gmra.mxu0 %v3876
      %v3986 = vpop.f32.mrf.mxu0
      %v3987 = vadd.f32 0.0, %v3986
      %v3988 = vpop.f32.mrf.mxu0
      %v3989 = vadd.f32 0.0, %v3988
      %3990 = vmatprep.mubr.f32.mxu0 0.0
      %3991 = vmatmul.mubr.f32.gmra.mxu0 %v3879
      %v3992 = vpop.f32.mrf.mxu0
      %v3993 = vadd.f32 0.0, %v3992
      %v3994 = vpop.f32.mrf.mxu0
      %v3995 = vadd.f32 0.0, %v3994
      %3996 = vmatprep.mubr.f32.mxu0 0.0
      %3997 = vmatmul.mubr.f32.gmra.mxu0 %v3882
      %v3998 = vpop.f32.mrf.mxu0
      %v3999 = vadd.f32 0.0, %v3998
      %v4000 = vpop.f32.mrf.mxu0
      %v4001 = vadd.f32 0.0, %v4000
      %4002 = vdwg.mxu0
      %v4003 = vadd.f32 %v3822, %v3957
      %v4004 = vadd.f32 %v3823, %v3959
      %v4005 = vadd.f32 %v3824, %v3963
      %v4006 = vadd.f32 %v3825, %v3965
      %v4007 = vadd.f32 %v3826, %v3969
      %v4008 = vadd.f32 %v3827, %v3971
      %v4009 = vadd.f32 %v3828, %v3975
      %v4010 = vadd.f32 %v3829, %v3977
      %v4011 = vadd.f32 %v3830, %v3981
      %v4012 = vadd.f32 %v3831, %v3983
      %v4013 = vadd.f32 %v3832, %v3987
      %v4014 = vadd.f32 %v3833, %v3989
      %v4015 = vadd.f32 %v3834, %v3993
      %v4016 = vadd.f32 %v3835, %v3995
      %v4017 = vadd.f32 %v3836, %v3999
      %v4018 = vadd.f32 %v3837, %v4001
      %4019 = vrot.lane.b32.xlu0 %v262, 63
      %v4020 = vpop.permute.xlu0 %4019
      %4021 = vrot.lane.b32.xlu0 %v263, 63
      %v4022 = vpop.permute.xlu0 %4021
      %4023 = vrot.lane.b32.xlu0 %v278, 63
      %v4024 = vpop.permute.xlu0 %4023
      %vm4025 = vcmask 515072
      %v4026 = vsel %vm4025, %v4020, %v4022
      %v4027 = vsel %vm4025, %v4022, %v4024
      %v4030 = vsel %vm281, %v4026, 0.0
      %v4031 = vsel %vm282, %v4027, 0.0
      %s4032 = scalar_lea.vmem %s200, 1344
      %v4033 = vld [vmem:[%s4032] sm:$0xff]
      %v4034 = vld [vmem:[%s4032 + $0x8] sm:$0xff]
      %v4035 = vld [vmem:[%s4032 + $0x10] sm:$0xff]
      %v4036 = vld [vmem:[%s4032 + $0x18] sm:$0xff]
      %v4037 = vld [vmem:[%s4032 + $0x20] sm:$0xff]
      %v4038 = vld [vmem:[%s4032 + $0x28] sm:$0xff]
      %v4039 = vld [vmem:[%s4032 + $0x30] sm:$0xff]
      %v4040 = vld [vmem:[%s4032 + $0x38] sm:$0xff]
      %v4042 = vsel %vm308, %v4033, 0
      %v4045 = vsel %vm308, %v4034, 0
      %v4048 = vsel %vm308, %v4035, 0
      %v4051 = vsel %vm308, %v4036, 0
      %v4054 = vsel %vm308, %v4037, 0
      %v4057 = vsel %vm308, %v4038, 0
      %v4060 = vsel %vm308, %v4039, 0
      %v4063 = vsel %vm308, %v4040, 0
      %v4066 = vsel %vm333, %v4030, 0
      %v4069 = vsel %vm333, %v4031, 0
      %4071 = vmatprep.subr.mxu0 0.0
      %4072 = vmatpush1.msra.mxu0 0.0
      %4073 = vmatprep.subr.mxu0 0.0
      %4074 = vmatpush1.msra.mxu0 0.0
      %4075 = vmatprep.subr.mxu0 0.0
      %4076 = vmatpush1.msra.mxu0 0.0
      %4077 = vmatprep.subr.mxu0 0.0
      %4078 = vmatpush1.msra.mxu0 0.0
      %4079 = vmatprep.subr.mxu0 0.0
      %4080 = vmatpush1.msra.mxu0 0.0
      %4081 = vmatprep.subr.mxu0 0.0
      %4082 = vmatpush1.msra.mxu0 0.0
      %4083 = vmatprep.subr.mxu0 0.0
      %4084 = vmatpush1.msra.mxu0 0.0
      %4085 = vmatprep.subr.mxu0 0.0
      %4086 = vmatpush1.msra.mxu0 0.0
      %4087 = vmatprep.subr.mxu0 0.0
      %4088 = vmatpush1.msra.mxu0 0.0
      %4089 = vmatprep.subr.mxu0 0.0
      %4090 = vmatpush1.msra.mxu0 0.0
      %4091 = vmatprep.subr.mxu0 0.0
      %4092 = vmatpush1.msra.mxu0 0.0
      %4093 = vmatprep.subr.mxu0 0.0
      %4094 = vmatpush1.msra.mxu0 0.0
      %4095 = vmatprep.subr.mxu0 0.0
      %4096 = vmatpush1.msra.mxu0 0.0
      %4097 = vmatprep.subr.mxu0 0.0
      %4098 = vmatpush1.msra.mxu0 0.0
      %4099 = vmatprep.subr.mxu0 0.0
      %4100 = vmatpush1.msra.mxu0 0.0
      %4101 = vmatprep.subr.mxu0 %v4069
      %4102 = vmatpush1.msra.mxu0 %v4066
      %4103 = vmatprep.subr.mxu0 0.0
      %4104 = vmatpush2.msra.mxu0 0.0
      %4105 = vmatprep.subr.mxu0 0.0
      %4106 = vmatpush2.msra.mxu0 0.0
      %4107 = vmatprep.subr.mxu0 0.0
      %4108 = vmatpush2.msra.mxu0 0.0
      %4109 = vmatprep.subr.mxu0 0.0
      %4110 = vmatpush2.msra.mxu0 0.0
      %4111 = vmatprep.subr.mxu0 0.0
      %4112 = vmatpush2.msra.mxu0 0.0
      %4113 = vmatprep.subr.mxu0 0.0
      %4114 = vmatpush2.msra.mxu0 0.0
      %4115 = vmatprep.subr.mxu0 0.0
      %4116 = vmatpush2.msra.mxu0 0.0
      %4117 = vmatprep.subr.mxu0 0.0
      %4118 = vmatpush2.msra.mxu0 0.0
      %4119 = vmatprep.subr.mxu0 0.0
      %4120 = vmatpush2.msra.mxu0 0.0
      %4121 = vmatprep.subr.mxu0 0.0
      %4122 = vmatpush2.msra.mxu0 0.0
      %4123 = vmatprep.subr.mxu0 0.0
      %4124 = vmatpush2.msra.mxu0 0.0
      %4125 = vmatprep.subr.mxu0 0.0
      %4126 = vmatpush2.msra.mxu0 0.0
      %4127 = vmatprep.subr.mxu0 0.0
      %4128 = vmatpush2.msra.mxu0 0.0
      %4129 = vmatprep.subr.mxu0 0.0
      %4130 = vmatpush2.msra.mxu0 0.0
      %4131 = vmatprep.subr.mxu0 0.0
      %4132 = vmatpush2.msra.mxu0 0.0
      %4133 = vmatprep.subr.mxu0 0.0
      %4134 = vmatpush2.msra.mxu0 0.0
      %4135 = vmatprep.mubr.f32.mxu0 0.0
      %4136 = vmatmul.mubr.f32.gmra.mxu0 %v4042
      %v4137 = vpop.f32.mrf.mxu0
      %v4138 = vadd.f32 0.0, %v4137
      %v4139 = vpop.f32.mrf.mxu0
      %v4140 = vadd.f32 0.0, %v4139
      %4141 = vmatprep.mubr.f32.mxu0 0.0
      %4142 = vmatmul.mubr.f32.gmra.mxu0 %v4045
      %v4143 = vpop.f32.mrf.mxu0
      %v4144 = vadd.f32 0.0, %v4143
      %v4145 = vpop.f32.mrf.mxu0
      %v4146 = vadd.f32 0.0, %v4145
      %4147 = vmatprep.mubr.f32.mxu0 0.0
      %4148 = vmatmul.mubr.f32.gmra.mxu0 %v4048
      %v4149 = vpop.f32.mrf.mxu0
      %v4150 = vadd.f32 0.0, %v4149
      %v4151 = vpop.f32.mrf.mxu0
      %v4152 = vadd.f32 0.0, %v4151
      %4153 = vmatprep.mubr.f32.mxu0 0.0
      %4154 = vmatmul.mubr.f32.gmra.mxu0 %v4051
      %v4155 = vpop.f32.mrf.mxu0
      %v4156 = vadd.f32 0.0, %v4155
      %v4157 = vpop.f32.mrf.mxu0
      %v4158 = vadd.f32 0.0, %v4157
      %4159 = vmatprep.mubr.f32.mxu0 0.0
      %4160 = vmatmul.mubr.f32.gmra.mxu0 %v4054
      %v4161 = vpop.f32.mrf.mxu0
      %v4162 = vadd.f32 0.0, %v4161
      %v4163 = vpop.f32.mrf.mxu0
      %v4164 = vadd.f32 0.0, %v4163
      %4165 = vmatprep.mubr.f32.mxu0 0.0
      %4166 = vmatmul.mubr.f32.gmra.mxu0 %v4057
      %v4167 = vpop.f32.mrf.mxu0
      %v4168 = vadd.f32 0.0, %v4167
      %v4169 = vpop.f32.mrf.mxu0
      %v4170 = vadd.f32 0.0, %v4169
      %4171 = vmatprep.mubr.f32.mxu0 0.0
      %4172 = vmatmul.mubr.f32.gmra.mxu0 %v4060
      %v4173 = vpop.f32.mrf.mxu0
      %v4174 = vadd.f32 0.0, %v4173
      %v4175 = vpop.f32.mrf.mxu0
      %v4176 = vadd.f32 0.0, %v4175
      %4177 = vmatprep.mubr.f32.mxu0 0.0
      %4178 = vmatmul.mubr.f32.gmra.mxu0 %v4063
      %v4179 = vpop.f32.mrf.mxu0
      %v4180 = vadd.f32 0.0, %v4179
      %v4181 = vpop.f32.mrf.mxu0
      %v4182 = vadd.f32 0.0, %v4181
      %4183 = vdwg.mxu0
      %v4184 = vadd.f32 %v4003, %v4138
      %v4185 = vadd.f32 %v4004, %v4140
      %v4186 = vadd.f32 %v4005, %v4144
      %v4187 = vadd.f32 %v4006, %v4146
      %v4188 = vadd.f32 %v4007, %v4150
      %v4189 = vadd.f32 %v4008, %v4152
      %v4190 = vadd.f32 %v4009, %v4156
      %v4191 = vadd.f32 %v4010, %v4158
      %v4192 = vadd.f32 %v4011, %v4162
      %v4193 = vadd.f32 %v4012, %v4164
      %v4194 = vadd.f32 %v4013, %v4168
      %v4195 = vadd.f32 %v4014, %v4170
      %v4196 = vadd.f32 %v4015, %v4174
      %v4197 = vadd.f32 %v4016, %v4176
      %v4198 = vadd.f32 %v4017, %v4180
      %v4199 = vadd.f32 %v4018, %v4182
      %s4200 = scalar_lea.vmem %s200, 1408
      %v4201 = vld [vmem:[%s4200] sm:$0xff]
      %v4202 = vld [vmem:[%s4200 + $0x8] sm:$0xff]
      %v4203 = vld [vmem:[%s4200 + $0x10] sm:$0xff]
      %v4204 = vld [vmem:[%s4200 + $0x18] sm:$0xff]
      %v4205 = vld [vmem:[%s4200 + $0x20] sm:$0xff]
      %v4206 = vld [vmem:[%s4200 + $0x28] sm:$0xff]
      %v4207 = vld [vmem:[%s4200 + $0x30] sm:$0xff]
      %v4208 = vld [vmem:[%s4200 + $0x38] sm:$0xff]
      %4209 = vrot.lane.b32.xlu0 %v262, 62
      %v4210 = vpop.permute.xlu0 %4209
      %4211 = vrot.lane.b32.xlu0 %v263, 62
      %v4212 = vpop.permute.xlu0 %4211
      %4213 = vrot.lane.b32.xlu0 %v278, 62
      %v4214 = vpop.permute.xlu0 %4213
      %vm4215 = vcmask 506880
      %v4216 = vsel %vm4215, %v4210, %v4212
      %v4217 = vsel %vm4215, %v4212, %v4214
      %v4219 = vsel %vm308, %v4201, 0
      %v4222 = vsel %vm308, %v4202, 0
      %v4225 = vsel %vm308, %v4203, 0
      %v4228 = vsel %vm308, %v4204, 0
      %v4231 = vsel %vm308, %v4205, 0
      %v4234 = vsel %vm308, %v4206, 0
      %v4237 = vsel %vm308, %v4207, 0
      %v4240 = vsel %vm308, %v4208, 0
      %v4242 = vsel %vm333, %v4216, 0
      %v4244 = vsel %vm333, %v4217, 0
      %4246 = vmatprep.subr.mxu0 0.0
      %4247 = vmatpush1.msra.mxu0 0.0
      %4248 = vmatprep.subr.mxu0 0.0
      %4249 = vmatpush1.msra.mxu0 0.0
      %4250 = vmatprep.subr.mxu0 0.0
      %4251 = vmatpush1.msra.mxu0 0.0
      %4252 = vmatprep.subr.mxu0 0.0
      %4253 = vmatpush1.msra.mxu0 0.0
      %4254 = vmatprep.subr.mxu0 0.0
      %4255 = vmatpush1.msra.mxu0 0.0
      %4256 = vmatprep.subr.mxu0 0.0
      %4257 = vmatpush1.msra.mxu0 0.0
      %4258 = vmatprep.subr.mxu0 0.0
      %4259 = vmatpush1.msra.mxu0 0.0
      %4260 = vmatprep.subr.mxu0 0.0
      %4261 = vmatpush1.msra.mxu0 0.0
      %4262 = vmatprep.subr.mxu0 0.0
      %4263 = vmatpush1.msra.mxu0 0.0
      %4264 = vmatprep.subr.mxu0 0.0
      %4265 = vmatpush1.msra.mxu0 0.0
      %4266 = vmatprep.subr.mxu0 0.0
      %4267 = vmatpush1.msra.mxu0 0.0
      %4268 = vmatprep.subr.mxu0 0.0
      %4269 = vmatpush1.msra.mxu0 0.0
      %4270 = vmatprep.subr.mxu0 0.0
      %4271 = vmatpush1.msra.mxu0 0.0
      %4272 = vmatprep.subr.mxu0 0.0
      %4273 = vmatpush1.msra.mxu0 0.0
      %4274 = vmatprep.subr.mxu0 0.0
      %4275 = vmatpush1.msra.mxu0 0.0
      %4276 = vmatprep.subr.mxu0 %v4244
      %4277 = vmatpush1.msra.mxu0 %v4242
      %4278 = vmatprep.subr.mxu0 0.0
      %4279 = vmatpush2.msra.mxu0 0.0
      %4280 = vmatprep.subr.mxu0 0.0
      %4281 = vmatpush2.msra.mxu0 0.0
      %4282 = vmatprep.subr.mxu0 0.0
      %4283 = vmatpush2.msra.mxu0 0.0
      %4284 = vmatprep.subr.mxu0 0.0
      %4285 = vmatpush2.msra.mxu0 0.0
      %4286 = vmatprep.subr.mxu0 0.0
      %4287 = vmatpush2.msra.mxu0 0.0
      %4288 = vmatprep.subr.mxu0 0.0
      %4289 = vmatpush2.msra.mxu0 0.0
      %4290 = vmatprep.subr.mxu0 0.0
      %4291 = vmatpush2.msra.mxu0 0.0
      %4292 = vmatprep.subr.mxu0 0.0
      %4293 = vmatpush2.msra.mxu0 0.0
      %4294 = vmatprep.subr.mxu0 0.0
      %4295 = vmatpush2.msra.mxu0 0.0
      %4296 = vmatprep.subr.mxu0 0.0
      %4297 = vmatpush2.msra.mxu0 0.0
      %4298 = vmatprep.subr.mxu0 0.0
      %4299 = vmatpush2.msra.mxu0 0.0
      %4300 = vmatprep.subr.mxu0 0.0
      %4301 = vmatpush2.msra.mxu0 0.0
      %4302 = vmatprep.subr.mxu0 0.0
      %4303 = vmatpush2.msra.mxu0 0.0
      %4304 = vmatprep.subr.mxu0 0.0
      %4305 = vmatpush2.msra.mxu0 0.0
      %4306 = vmatprep.subr.mxu0 0.0
      %4307 = vmatpush2.msra.mxu0 0.0
      %4308 = vmatprep.subr.mxu0 0.0
      %4309 = vmatpush2.msra.mxu0 0.0
      %4310 = vmatprep.mubr.f32.mxu0 0.0
      %4311 = vmatmul.mubr.f32.gmra.mxu0 %v4219
      %v4312 = vpop.f32.mrf.mxu0
      %v4313 = vadd.f32 0.0, %v4312
      %v4314 = vpop.f32.mrf.mxu0
      %v4315 = vadd.f32 0.0, %v4314
      %4316 = vmatprep.mubr.f32.mxu0 0.0
      %4317 = vmatmul.mubr.f32.gmra.mxu0 %v4222
      %v4318 = vpop.f32.mrf.mxu0
      %v4319 = vadd.f32 0.0, %v4318
      %v4320 = vpop.f32.mrf.mxu0
      %v4321 = vadd.f32 0.0, %v4320
      %4322 = vmatprep.mubr.f32.mxu0 0.0
      %4323 = vmatmul.mubr.f32.gmra.mxu0 %v4225
      %v4324 = vpop.f32.mrf.mxu0
      %v4325 = vadd.f32 0.0, %v4324
      %v4326 = vpop.f32.mrf.mxu0
      %v4327 = vadd.f32 0.0, %v4326
      %4328 = vmatprep.mubr.f32.mxu0 0.0
      %4329 = vmatmul.mubr.f32.gmra.mxu0 %v4228
      %v4330 = vpop.f32.mrf.mxu0
      %v4331 = vadd.f32 0.0, %v4330
      %v4332 = vpop.f32.mrf.mxu0
      %v4333 = vadd.f32 0.0, %v4332
      %4334 = vmatprep.mubr.f32.mxu0 0.0
      %4335 = vmatmul.mubr.f32.gmra.mxu0 %v4231
      %v4336 = vpop.f32.mrf.mxu0
      %v4337 = vadd.f32 0.0, %v4336
      %v4338 = vpop.f32.mrf.mxu0
      %v4339 = vadd.f32 0.0, %v4338
      %4340 = vmatprep.mubr.f32.mxu0 0.0
      %4341 = vmatmul.mubr.f32.gmra.mxu0 %v4234
      %v4342 = vpop.f32.mrf.mxu0
      %v4343 = vadd.f32 0.0, %v4342
      %v4344 = vpop.f32.mrf.mxu0
      %v4345 = vadd.f32 0.0, %v4344
      %4346 = vmatprep.mubr.f32.mxu0 0.0
      %4347 = vmatmul.mubr.f32.gmra.mxu0 %v4237
      %v4348 = vpop.f32.mrf.mxu0
      %v4349 = vadd.f32 0.0, %v4348
      %v4350 = vpop.f32.mrf.mxu0
      %v4351 = vadd.f32 0.0, %v4350
      %4352 = vmatprep.mubr.f32.mxu0 0.0
      %4353 = vmatmul.mubr.f32.gmra.mxu0 %v4240
      %v4354 = vpop.f32.mrf.mxu0
      %v4355 = vadd.f32 0.0, %v4354
      %v4356 = vpop.f32.mrf.mxu0
      %v4357 = vadd.f32 0.0, %v4356
      %4358 = vdwg.mxu0
      %v4359 = vadd.f32 %v4184, %v4313
      %v4360 = vadd.f32 %v4185, %v4315
      %v4361 = vadd.f32 %v4186, %v4319
      %v4362 = vadd.f32 %v4187, %v4321
      %v4363 = vadd.f32 %v4188, %v4325
      %v4364 = vadd.f32 %v4189, %v4327
      %v4365 = vadd.f32 %v4190, %v4331
      %v4366 = vadd.f32 %v4191, %v4333
      %v4367 = vadd.f32 %v4192, %v4337
      %v4368 = vadd.f32 %v4193, %v4339
      %v4369 = vadd.f32 %v4194, %v4343
      %v4370 = vadd.f32 %v4195, %v4345
      %v4371 = vadd.f32 %v4196, %v4349
      %v4372 = vadd.f32 %v4197, %v4351
      %v4373 = vadd.f32 %v4198, %v4355
      %v4374 = vadd.f32 %v4199, %v4357
      %4375 = vrot.lane.b32.xlu0 %v262, 61
      %v4376 = vpop.permute.xlu0 %4375
      %4377 = vrot.lane.b32.xlu0 %v263, 61
      %v4378 = vpop.permute.xlu0 %4377
      %4379 = vrot.lane.b32.xlu0 %v278, 61
      %v4380 = vpop.permute.xlu0 %4379
      %vm4381 = vcmask 498688
      %v4382 = vsel %vm4381, %v4376, %v4378
      %v4383 = vsel %vm4381, %v4378, %v4380
      %v4386 = vsel %vm773, %v4382, 0.0
      %v4387 = vsel %vm774, %v4383, 0.0
      %s4388 = scalar_lea.vmem %s200, 1472
      %v4389 = vld [vmem:[%s4388] sm:$0xff]
      %v4390 = vld [vmem:[%s4388 + $0x8] sm:$0xff]
      %v4391 = vld [vmem:[%s4388 + $0x10] sm:$0xff]
      %v4392 = vld [vmem:[%s4388 + $0x18] sm:$0xff]
      %v4393 = vld [vmem:[%s4388 + $0x20] sm:$0xff]
      %v4394 = vld [vmem:[%s4388 + $0x28] sm:$0xff]
      %v4395 = vld [vmem:[%s4388 + $0x30] sm:$0xff]
      %v4396 = vld [vmem:[%s4388 + $0x38] sm:$0xff]
      %v4398 = vsel %vm308, %v4389, 0
      %v4401 = vsel %vm308, %v4390, 0
      %v4404 = vsel %vm308, %v4391, 0
      %v4407 = vsel %vm308, %v4392, 0
      %v4410 = vsel %vm308, %v4393, 0
      %v4413 = vsel %vm308, %v4394, 0
      %v4416 = vsel %vm308, %v4395, 0
      %v4419 = vsel %vm308, %v4396, 0
      %v4422 = vsel %vm333, %v4386, 0
      %v4425 = vsel %vm333, %v4387, 0
      %4427 = vmatprep.subr.mxu0 0.0
      %4428 = vmatpush1.msra.mxu0 0.0
      %4429 = vmatprep.subr.mxu0 0.0
      %4430 = vmatpush1.msra.mxu0 0.0
      %4431 = vmatprep.subr.mxu0 0.0
      %4432 = vmatpush1.msra.mxu0 0.0
      %4433 = vmatprep.subr.mxu0 0.0
      %4434 = vmatpush1.msra.mxu0 0.0
      %4435 = vmatprep.subr.mxu0 0.0
      %4436 = vmatpush1.msra.mxu0 0.0
      %4437 = vmatprep.subr.mxu0 0.0
      %4438 = vmatpush1.msra.mxu0 0.0
      %4439 = vmatprep.subr.mxu0 0.0
      %4440 = vmatpush1.msra.mxu0 0.0
      %4441 = vmatprep.subr.mxu0 0.0
      %4442 = vmatpush1.msra.mxu0 0.0
      %4443 = vmatprep.subr.mxu0 0.0
      %4444 = vmatpush1.msra.mxu0 0.0
      %4445 = vmatprep.subr.mxu0 0.0
      %4446 = vmatpush1.msra.mxu0 0.0
      %4447 = vmatprep.subr.mxu0 0.0
      %4448 = vmatpush1.msra.mxu0 0.0
      %4449 = vmatprep.subr.mxu0 0.0
      %4450 = vmatpush1.msra.mxu0 0.0
      %4451 = vmatprep.subr.mxu0 0.0
      %4452 = vmatpush1.msra.mxu0 0.0
      %4453 = vmatprep.subr.mxu0 0.0
      %4454 = vmatpush1.msra.mxu0 0.0
      %4455 = vmatprep.subr.mxu0 0.0
      %4456 = vmatpush1.msra.mxu0 0.0
      %4457 = vmatprep.subr.mxu0 %v4425
      %4458 = vmatpush1.msra.mxu0 %v4422
      %4459 = vmatprep.subr.mxu0 0.0
      %4460 = vmatpush2.msra.mxu0 0.0
      %4461 = vmatprep.subr.mxu0 0.0
      %4462 = vmatpush2.msra.mxu0 0.0
      %4463 = vmatprep.subr.mxu0 0.0
      %4464 = vmatpush2.msra.mxu0 0.0
      %4465 = vmatprep.subr.mxu0 0.0
      %4466 = vmatpush2.msra.mxu0 0.0
      %4467 = vmatprep.subr.mxu0 0.0
      %4468 = vmatpush2.msra.mxu0 0.0
      %4469 = vmatprep.subr.mxu0 0.0
      %4470 = vmatpush2.msra.mxu0 0.0
      %4471 = vmatprep.subr.mxu0 0.0
      %4472 = vmatpush2.msra.mxu0 0.0
      %4473 = vmatprep.subr.mxu0 0.0
      %4474 = vmatpush2.msra.mxu0 0.0
      %4475 = vmatprep.subr.mxu0 0.0
      %4476 = vmatpush2.msra.mxu0 0.0
      %4477 = vmatprep.subr.mxu0 0.0
      %4478 = vmatpush2.msra.mxu0 0.0
      %4479 = vmatprep.subr.mxu0 0.0
      %4480 = vmatpush2.msra.mxu0 0.0
      %4481 = vmatprep.subr.mxu0 0.0
      %4482 = vmatpush2.msra.mxu0 0.0
      %4483 = vmatprep.subr.mxu0 0.0
      %4484 = vmatpush2.msra.mxu0 0.0
      %4485 = vmatprep.subr.mxu0 0.0
      %4486 = vmatpush2.msra.mxu0 0.0
      %4487 = vmatprep.subr.mxu0 0.0
      %4488 = vmatpush2.msra.mxu0 0.0
      %4489 = vmatprep.subr.mxu0 0.0
      %4490 = vmatpush2.msra.mxu0 0.0
      %4491 = vmatprep.mubr.f32.mxu0 0.0
      %4492 = vmatmul.mubr.f32.gmra.mxu0 %v4398
      %v4493 = vpop.f32.mrf.mxu0
      %v4494 = vadd.f32 0.0, %v4493
      %v4495 = vpop.f32.mrf.mxu0
      %v4496 = vadd.f32 0.0, %v4495
      %4497 = vmatprep.mubr.f32.mxu0 0.0
      %4498 = vmatmul.mubr.f32.gmra.mxu0 %v4401
      %v4499 = vpop.f32.mrf.mxu0
      %v4500 = vadd.f32 0.0, %v4499
      %v4501 = vpop.f32.mrf.mxu0
      %v4502 = vadd.f32 0.0, %v4501
      %4503 = vmatprep.mubr.f32.mxu0 0.0
      %4504 = vmatmul.mubr.f32.gmra.mxu0 %v4404
      %v4505 = vpop.f32.mrf.mxu0
      %v4506 = vadd.f32 0.0, %v4505
      %v4507 = vpop.f32.mrf.mxu0
      %v4508 = vadd.f32 0.0, %v4507
      %4509 = vmatprep.mubr.f32.mxu0 0.0
      %4510 = vmatmul.mubr.f32.gmra.mxu0 %v4407
      %v4511 = vpop.f32.mrf.mxu0
      %v4512 = vadd.f32 0.0, %v4511
      %v4513 = vpop.f32.mrf.mxu0
      %v4514 = vadd.f32 0.0, %v4513
      %4515 = vmatprep.mubr.f32.mxu0 0.0
      %4516 = vmatmul.mubr.f32.gmra.mxu0 %v4410
      %v4517 = vpop.f32.mrf.mxu0
      %v4518 = vadd.f32 0.0, %v4517
      %v4519 = vpop.f32.mrf.mxu0
      %v4520 = vadd.f32 0.0, %v4519
      %4521 = vmatprep.mubr.f32.mxu0 0.0
      %4522 = vmatmul.mubr.f32.gmra.mxu0 %v4413
      %v4523 = vpop.f32.mrf.mxu0
      %v4524 = vadd.f32 0.0, %v4523
      %v4525 = vpop.f32.mrf.mxu0
      %v4526 = vadd.f32 0.0, %v4525
      %4527 = vmatprep.mubr.f32.mxu0 0.0
      %4528 = vmatmul.mubr.f32.gmra.mxu0 %v4416
      %v4529 = vpop.f32.mrf.mxu0
      %v4530 = vadd.f32 0.0, %v4529
      %v4531 = vpop.f32.mrf.mxu0
      %v4532 = vadd.f32 0.0, %v4531
      %4533 = vmatprep.mubr.f32.mxu0 0.0
      %4534 = vmatmul.mubr.f32.gmra.mxu0 %v4419
      %v4535 = vpop.f32.mrf.mxu0
      %v4536 = vadd.f32 0.0, %v4535
      %v4537 = vpop.f32.mrf.mxu0
      %v4538 = vadd.f32 0.0, %v4537
      %4539 = vdwg.mxu0
      %v4540 = vadd.f32 %v4359, %v4494
      %v4541 = vadd.f32 %v4360, %v4496
      %v4542 = vadd.f32 %v4361, %v4500
      %v4543 = vadd.f32 %v4362, %v4502
      %v4544 = vadd.f32 %v4363, %v4506
      %v4545 = vadd.f32 %v4364, %v4508
      %v4546 = vadd.f32 %v4365, %v4512
      %v4547 = vadd.f32 %v4366, %v4514
      %v4548 = vadd.f32 %v4367, %v4518
      %v4549 = vadd.f32 %v4368, %v4520
      %v4550 = vadd.f32 %v4369, %v4524
      %v4551 = vadd.f32 %v4370, %v4526
      %v4552 = vadd.f32 %v4371, %v4530
      %v4553 = vadd.f32 %v4372, %v4532
      %v4554 = vadd.f32 %v4373, %v4536
      %v4555 = vadd.f32 %v4374, %v4538
      %4556 = vrot.lane.b32.xlu0 %v262, 60
      %v4557 = vpop.permute.xlu0 %4556
      %4558 = vrot.lane.b32.xlu0 %v263, 60
      %v4559 = vpop.permute.xlu0 %4558
      %4560 = vrot.lane.b32.xlu0 %v278, 60
      %v4561 = vpop.permute.xlu0 %4560
      %vm4562 = vcmask 490496
      %v4563 = vsel %vm4562, %v4557, %v4559
      %v4564 = vsel %vm4562, %v4559, %v4561
      %v4567 = vsel %vm958, %v4563, 0.0
      %v4568 = vsel %vm959, %v4564, 0.0
      %s4569 = scalar_lea.vmem %s200, 1536
      %v4570 = vld [vmem:[%s4569] sm:$0xff]
      %v4571 = vld [vmem:[%s4569 + $0x8] sm:$0xff]
      %v4572 = vld [vmem:[%s4569 + $0x10] sm:$0xff]
      %v4573 = vld [vmem:[%s4569 + $0x18] sm:$0xff]
      %v4574 = vld [vmem:[%s4569 + $0x20] sm:$0xff]
      %v4575 = vld [vmem:[%s4569 + $0x28] sm:$0xff]
      %v4576 = vld [vmem:[%s4569 + $0x30] sm:$0xff]
      %v4577 = vld [vmem:[%s4569 + $0x38] sm:$0xff]
      %v4579 = vsel %vm308, %v4570, 0
      %v4582 = vsel %vm308, %v4571, 0
      %v4585 = vsel %vm308, %v4572, 0
      %v4588 = vsel %vm308, %v4573, 0
      %v4591 = vsel %vm308, %v4574, 0
      %v4594 = vsel %vm308, %v4575, 0
      %v4597 = vsel %vm308, %v4576, 0
      %v4600 = vsel %vm308, %v4577, 0
      %v4603 = vsel %vm333, %v4567, 0
      %v4606 = vsel %vm333, %v4568, 0
      %4608 = vmatprep.subr.mxu0 0.0
      %4609 = vmatpush1.msra.mxu0 0.0
      %4610 = vmatprep.subr.mxu0 0.0
      %4611 = vmatpush1.msra.mxu0 0.0
      %4612 = vmatprep.subr.mxu0 0.0
      %4613 = vmatpush1.msra.mxu0 0.0
      %4614 = vmatprep.subr.mxu0 0.0
      %4615 = vmatpush1.msra.mxu0 0.0
      %4616 = vmatprep.subr.mxu0 0.0
      %4617 = vmatpush1.msra.mxu0 0.0
      %4618 = vmatprep.subr.mxu0 0.0
      %4619 = vmatpush1.msra.mxu0 0.0
      %4620 = vmatprep.subr.mxu0 0.0
      %4621 = vmatpush1.msra.mxu0 0.0
      %4622 = vmatprep.subr.mxu0 0.0
      %4623 = vmatpush1.msra.mxu0 0.0
      %4624 = vmatprep.subr.mxu0 0.0
      %4625 = vmatpush1.msra.mxu0 0.0
      %4626 = vmatprep.subr.mxu0 0.0
      %4627 = vmatpush1.msra.mxu0 0.0
      %4628 = vmatprep.subr.mxu0 0.0
      %4629 = vmatpush1.msra.mxu0 0.0
      %4630 = vmatprep.subr.mxu0 0.0
      %4631 = vmatpush1.msra.mxu0 0.0
      %4632 = vmatprep.subr.mxu0 0.0
      %4633 = vmatpush1.msra.mxu0 0.0
      %4634 = vmatprep.subr.mxu0 0.0
      %4635 = vmatpush1.msra.mxu0 0.0
      %4636 = vmatprep.subr.mxu0 0.0
      %4637 = vmatpush1.msra.mxu0 0.0
      %4638 = vmatprep.subr.mxu0 %v4606
      %4639 = vmatpush1.msra.mxu0 %v4603
      %4640 = vmatprep.subr.mxu0 0.0
      %4641 = vmatpush2.msra.mxu0 0.0
      %4642 = vmatprep.subr.mxu0 0.0
      %4643 = vmatpush2.msra.mxu0 0.0
      %4644 = vmatprep.subr.mxu0 0.0
      %4645 = vmatpush2.msra.mxu0 0.0
      %4646 = vmatprep.subr.mxu0 0.0
      %4647 = vmatpush2.msra.mxu0 0.0
      %4648 = vmatprep.subr.mxu0 0.0
      %4649 = vmatpush2.msra.mxu0 0.0
      %4650 = vmatprep.subr.mxu0 0.0
      %4651 = vmatpush2.msra.mxu0 0.0
      %4652 = vmatprep.subr.mxu0 0.0
      %4653 = vmatpush2.msra.mxu0 0.0
      %4654 = vmatprep.subr.mxu0 0.0
      %4655 = vmatpush2.msra.mxu0 0.0
      %4656 = vmatprep.subr.mxu0 0.0
      %4657 = vmatpush2.msra.mxu0 0.0
      %4658 = vmatprep.subr.mxu0 0.0
      %4659 = vmatpush2.msra.mxu0 0.0
      %4660 = vmatprep.subr.mxu0 0.0
      %4661 = vmatpush2.msra.mxu0 0.0
      %4662 = vmatprep.subr.mxu0 0.0
      %4663 = vmatpush2.msra.mxu0 0.0
      %4664 = vmatprep.subr.mxu0 0.0
      %4665 = vmatpush2.msra.mxu0 0.0
      %4666 = vmatprep.subr.mxu0 0.0
      %4667 = vmatpush2.msra.mxu0 0.0
      %4668 = vmatprep.subr.mxu0 0.0
      %4669 = vmatpush2.msra.mxu0 0.0
      %4670 = vmatprep.subr.mxu0 0.0
      %4671 = vmatpush2.msra.mxu0 0.0
      %4672 = vmatprep.mubr.f32.mxu0 0.0
      %4673 = vmatmul.mubr.f32.gmra.mxu0 %v4579
      %v4674 = vpop.f32.mrf.mxu0
      %v4675 = vadd.f32 0.0, %v4674
      %v4676 = vpop.f32.mrf.mxu0
      %v4677 = vadd.f32 0.0, %v4676
      %4678 = vmatprep.mubr.f32.mxu0 0.0
      %4679 = vmatmul.mubr.f32.gmra.mxu0 %v4582
      %v4680 = vpop.f32.mrf.mxu0
      %v4681 = vadd.f32 0.0, %v4680
      %v4682 = vpop.f32.mrf.mxu0
      %v4683 = vadd.f32 0.0, %v4682
      %4684 = vmatprep.mubr.f32.mxu0 0.0
      %4685 = vmatmul.mubr.f32.gmra.mxu0 %v4585
      %v4686 = vpop.f32.mrf.mxu0
      %v4687 = vadd.f32 0.0, %v4686
      %v4688 = vpop.f32.mrf.mxu0
      %v4689 = vadd.f32 0.0, %v4688
      %4690 = vmatprep.mubr.f32.mxu0 0.0
      %4691 = vmatmul.mubr.f32.gmra.mxu0 %v4588
      %v4692 = vpop.f32.mrf.mxu0
      %v4693 = vadd.f32 0.0, %v4692
      %v4694 = vpop.f32.mrf.mxu0
      %v4695 = vadd.f32 0.0, %v4694
      %4696 = vmatprep.mubr.f32.mxu0 0.0
      %4697 = vmatmul.mubr.f32.gmra.mxu0 %v4591
      %v4698 = vpop.f32.mrf.mxu0
      %v4699 = vadd.f32 0.0, %v4698
      %v4700 = vpop.f32.mrf.mxu0
      %v4701 = vadd.f32 0.0, %v4700
      %4702 = vmatprep.mubr.f32.mxu0 0.0
      %4703 = vmatmul.mubr.f32.gmra.mxu0 %v4594
      %v4704 = vpop.f32.mrf.mxu0
      %v4705 = vadd.f32 0.0, %v4704
      %v4706 = vpop.f32.mrf.mxu0
      %v4707 = vadd.f32 0.0, %v4706
      %4708 = vmatprep.mubr.f32.mxu0 0.0
      %4709 = vmatmul.mubr.f32.gmra.mxu0 %v4597
      %v4710 = vpop.f32.mrf.mxu0
      %v4711 = vadd.f32 0.0, %v4710
      %v4712 = vpop.f32.mrf.mxu0
      %v4713 = vadd.f32 0.0, %v4712
      %4714 = vmatprep.mubr.f32.mxu0 0.0
      %4715 = vmatmul.mubr.f32.gmra.mxu0 %v4600
      %v4716 = vpop.f32.mrf.mxu0
      %v4717 = vadd.f32 0.0, %v4716
      %v4718 = vpop.f32.mrf.mxu0
      %v4719 = vadd.f32 0.0, %v4718
      %4720 = vdwg.mxu0
      %v4721 = vadd.f32 %v4540, %v4675
      %v4722 = vadd.f32 %v4541, %v4677
      %v4723 = vadd.f32 %v4542, %v4681
      %v4724 = vadd.f32 %v4543, %v4683
      %v4725 = vadd.f32 %v4544, %v4687
      %v4726 = vadd.f32 %v4545, %v4689
      %v4727 = vadd.f32 %v4546, %v4693
      %v4728 = vadd.f32 %v4547, %v4695
      %v4729 = vadd.f32 %v4548, %v4699
      %v4730 = vadd.f32 %v4549, %v4701
      %v4731 = vadd.f32 %v4550, %v4705
      %v4732 = vadd.f32 %v4551, %v4707
      %v4733 = vadd.f32 %v4552, %v4711
      %v4734 = vadd.f32 %v4553, %v4713
      %v4735 = vadd.f32 %v4554, %v4717
      %v4736 = vadd.f32 %v4555, %v4719
      %v4737 = vld [vmem:[%s205] sm:$0xff]
      %v4738 = vld [vmem:[%s205 + $0x8] sm:$0xff]
      %v4739 = vld [vmem:[%s205 + $0x10] sm:$0xff]
      %v4740 = vld [vmem:[%s205 + $0x18] sm:$0xff]
      %v4741 = vld [vmem:[%s205 + $0x20] sm:$0xff]
      %v4742 = vld [vmem:[%s205 + $0x28] sm:$0xff]
      %v4743 = vld [vmem:[%s205 + $0x30] sm:$0xff]
      %v4744 = vld [vmem:[%s205 + $0x38] sm:$0xff]
      %4746 = vset.pattern.permute.xlu0 0
      %4747 = vperm.xlu0 %4746, %v4737
      %v4748 = vpop.permute.xlu0 %4747
      %4751 = vset.pattern.permute.xlu0 0
      %4752 = vperm.xlu0 %4751, %v4738
      %v4753 = vpop.permute.xlu0 %4752
      %4756 = vset.pattern.permute.xlu0 0
      %4757 = vperm.xlu0 %4756, %v4739
      %v4758 = vpop.permute.xlu0 %4757
      %4761 = vset.pattern.permute.xlu0 0
      %4762 = vperm.xlu0 %4761, %v4740
      %v4763 = vpop.permute.xlu0 %4762
      %4766 = vset.pattern.permute.xlu0 0
      %4767 = vperm.xlu0 %4766, %v4741
      %v4768 = vpop.permute.xlu0 %4767
      %4771 = vset.pattern.permute.xlu0 0
      %4772 = vperm.xlu0 %4771, %v4742
      %v4773 = vpop.permute.xlu0 %4772
      %4776 = vset.pattern.permute.xlu0 0
      %4777 = vperm.xlu0 %4776, %v4743
      %v4778 = vpop.permute.xlu0 %4777
      %4781 = vset.pattern.permute.xlu0 0
      %4782 = vperm.xlu0 %4781, %v4744
      %v4783 = vpop.permute.xlu0 %4782
      %v4785 = vadd.f32 %v4721, %v4748
      %v4786 = vadd.f32 %v4722, %v4748
      %v4787 = vadd.f32 %v4723, %v4753
      %v4788 = vadd.f32 %v4724, %v4753
      %v4789 = vadd.f32 %v4725, %v4758
      %v4790 = vadd.f32 %v4726, %v4758
      %v4791 = vadd.f32 %v4727, %v4763
      %v4792 = vadd.f32 %v4728, %v4763
      %v4793 = vadd.f32 %v4729, %v4768
      %v4794 = vadd.f32 %v4730, %v4768
      %v4795 = vadd.f32 %v4731, %v4773
      %v4796 = vadd.f32 %v4732, %v4773
      %v4797 = vadd.f32 %v4733, %v4778
      %v4798 = vadd.f32 %v4734, %v4778
      %v4799 = vadd.f32 %v4735, %v4783
      %v4800 = vadd.f32 %v4736, %v4783
      %4801 = vst [vmem:[%s210] sm:$0xff] %v4785
      %4802 = vst [vmem:[%s210 + $0x8] sm:$0xff] %v4786
      %4803 = vst [vmem:[%s210 + $0x10] sm:$0xff] %v4787
      %4804 = vst [vmem:[%s210 + $0x18] sm:$0xff] %v4788
      %4805 = vst [vmem:[%s210 + $0x20] sm:$0xff] %v4789
      %4806 = vst [vmem:[%s210 + $0x28] sm:$0xff] %v4790
      %4807 = vst [vmem:[%s210 + $0x30] sm:$0xff] %v4791
      %4808 = vst [vmem:[%s210 + $0x38] sm:$0xff] %v4792
      %4809 = vst [vmem:[%s210 + $0x40] sm:$0xff] %v4793
      %4810 = vst [vmem:[%s210 + $0x48] sm:$0xff] %v4794
      %4811 = vst [vmem:[%s210 + $0x50] sm:$0xff] %v4795
      %4812 = vst [vmem:[%s210 + $0x58] sm:$0xff] %v4796
      %4813 = vst [vmem:[%s210 + $0x60] sm:$0xff] %v4797
      %4814 = vst [vmem:[%s210 + $0x68] sm:$0xff] %v4798
      %4815 = vst [vmem:[%s210 + $0x70] sm:$0xff] %v4799
      %4816 = vst [vmem:[%s210 + $0x78] sm:$0xff] %v4800
      %p4817 = scmp.lt.s32.totalorder %s14, 1
      %s4818 = scalar_select %p4817, %s14, 1
      %s4819 = smul.addr %s4818, 16
      %s4820 = smul.addr %s4819, 8
      %s4821 = scalar_lea.vmem %s3, %s4820
      // Predicated region
      $region33: #{vff_forward.1} parent=31 // pred_check
        %p4822 = pneg %p110
      $region34: #{vff_forward.1} parent=31 // pred_check_branch
        %4824 = sbr.rel (%p4822) target = $region36
      $region35: #{vff_forward.1} parent=31 // pred_region
        _
      $region36: #{vff_forward.1} parent=31 // pred_fallthru
        _
    $region32: #{vff_forward.1} parent=5 // pred_fallthru
      _
    %p4825 = scmp.le.s32.totalorder 2, %s9
    // Predicated region
    $region37: #{vff_forward.1} parent=5 // pred_check
      %p4826 = pneg %p4825
    $region38: #{vff_forward.1} parent=5 // pred_check_branch
      %4828 = sbr.rel (%p4826) target = $region40
    $region39: #{vff_forward.1} parent=5 // pred_region
      %s4829 = ssub.s32 %s9, 2
      // Predicated region
      $region41: #{vff_forward.1} parent=39 // pred_check
        %p4830 = pneg %p116
      $region42: #{vff_forward.1} parent=39 // pred_check_branch
        %4832 = sbr.rel (%p4830) target = $region44
      $region43: #{vff_forward.1} parent=39 // pred_region
        %p4833 = scmp.lt.s32.totalorder %s15, 1
        %s4834 = scalar_select %p4833, %s15, 1
        %s4835 = smul.addr %s4834, 16
        %s4836 = smul.addr %s4835, 8
        %s4837 = scalar_lea.vmem %s3, %s4836
      $region44: #{vff_forward.1} parent=39 // pred_fallthru
        _
    $region40: #{vff_forward.1} parent=5 // pred_fallthru
      _
  $region6: #{vff_forward.1} parent=0 // loop_footer
    %s13 = sadd.s32 1, %s9
  $region7: #{vff_forward.1} parent=0 // loop_footer_branch
    %8 = sbr.rel target = $region3
  $region8: #{vff_forward.1} parent=0 // loop_exit
    _

</llo_original>
